<compile_context>
chip_gen: v7x
topology: tpu7x:2x2x1
jax: 0.10.0
libtpu: 0.0.40
codegen_flags: <defaults>
</compile_context>

<pallas_src>
import functools

import jax
import jax.numpy as jnp
from jax.experimental import pallas as pl
from jax.experimental.pallas import tpu as pltpu


def _deconv_bn_silu_kernel(x_ref, w_ref, d_ref, b_ref, o_ref):
    """One (n, h-tile) step: x (1,C1,TH,W) -> y (1,C2,TH*KH,W*KW) in final NCHW layout."""
    KW, KH = w_ref.shape[0], w_ref.shape[1]
    TH = x_ref.shape[2]
    W2 = o_ref.shape[-1]

    d = d_ref[...]                                      # (W, W*KW) 0/1 dup matrix, bf16
    b = b_ref[...]                                      # (C2, 1) folded BN bias, f32
    lane = jax.lax.broadcasted_iota(jnp.int32, (1, W2), 1)
    masks = [(lane % KW == p).astype(jnp.float32) for p in range(KW)]  # parity masks

    for th in range(TH):                                # static unroll over input rows
        r = x_ref[0, :, th, :].astype(jnp.bfloat16)     # (C1, W) bf16 for the MXU
        # Width-upsample on the MXU (exact copies): r_dup[c1, w2] = r[c1, w2 // KW].
        r_dup = jnp.dot(r, d, preferred_element_type=jnp.float32).astype(jnp.bfloat16)
        for kh in range(KH):
            z = None
            for p in range(KW):
                zp = jnp.dot(w_ref[p, kh], r_dup,       # (C2, C1) @ (C1, W2), f32 acc
                             preferred_element_type=jnp.float32)
                zp = zp * masks[p]                      # keep lanes with w2 % KW == p
                z = zp if z is None else z + zp
            z = z + b                                   # folded BatchNorm bias
            y = z * pl.reciprocal(1.0 + jnp.exp(-z), approx=True)   # SiLU (EUP)
            o_ref[0, :, th * KH + kh, :] = y.astype(o_ref.dtype)    # final NCHW row


def _pick_tile_h(N, H, bytes_per_row, budget=4 * 1024 * 1024):
    """Input rows per grid step: divisor of H, multiple of 8 (<=32), VMEM-friendly,
    and small enough that the (N, H/TH) grid keeps the megacore busy."""
    cands = [t for t in range(8, min(H, 32) + 1, 8) if H % t == 0]
    if not cands:
        return H                                        # full-height fallback
    fitting = [t for t in cands if t * bytes_per_row <= budget]
    th = max(fitting) if fitting else min(cands)
    while N * (H // th) < 4:                            # keep >= 4 grid steps if possible
        smaller = [t for t in cands if t < th]
        if not smaller:
            break
        th = max(smaller)
    return th


@functools.partial(jax.jit, static_argnames=("stride", "padding", "eps"))
def conv_transpose_bn_silu(x, weight, gamma, beta, running_mean, running_var,
                           *, stride=2, padding=0, eps=1e-5):
    """Fused ConvTranspose2d(k=s, p=0, bias=False) + BatchNorm(eval) + SiLU."""
    N, C1, H, W = x.shape
    C1w, C2, KH, KW = weight.shape
    assert C1 == C1w, "weight in-channels must match input"
    if not (KH == KW == stride and padding == 0):
        # TODO(synk): general stride/padding (overlapping taps) not implemented; the
        # ultralytics default (k=2, s=2, p=0) is the non-overlapping case handled here.
        raise NotImplementedError("only kernel == stride and padding == 0 supported")

    W2 = W * KW
    H2 = H * KH

    # ---- fold eval-mode BatchNorm into the conv weight and a per-channel bias.
    scale = (gamma / jnp.sqrt(running_var + eps)).astype(jnp.float32)        # (C2,)
    bias = beta.astype(jnp.float32) - running_mean.astype(jnp.float32) * scale
    # Fused weight laid out (kw, kh, c2, c1) in bf16 for single-pass MXU matmuls.
    w_k = jnp.transpose(weight.astype(jnp.float32) * scale[None, :, None, None],
                        (3, 2, 1, 0)).astype(jnp.bfloat16)                   # (KW,KH,C2,C1)
    b_k = bias.reshape(C2, 1)                                                # (C2, 1) f32

    # 0/1 width-duplication matrix: dup[w, w2] = (w2 // KW == w).
    dup = (jnp.arange(W2)[None, :] // KW == jnp.arange(W)[:, None]).astype(jnp.bfloat16)

    # ---- tile height (lane/sublane padding included in the VMEM estimate).
    itemsize = jnp.dtype(x.dtype).itemsize
    bytes_per_row = 2 * (C1 * max(W, 128) * itemsize            # double-buffered x rows
                         + C2 * KH * max(W2, 128) * itemsize)   # double-buffered out rows
    TH = _pick_tile_h(N, H, bytes_per_row)
    grid = (N, H // TH)

    out_elems = N * C2 * H2 * W2
    cost = pl.CostEstimate(
        flops=2 * N * H * (C1 * W * W2 + KH * KW * C2 * C1 * W2) + 8 * out_elems,
        transcendentals=out_elems,
        bytes_accessed=(N * C1 * H * W * itemsize + w_k.size * 2 + out_elems * itemsize),
    )

    return pl.pallas_call(
        _deconv_bn_silu_kernel,
        out_shape=jax.ShapeDtypeStruct((N, C2, H2, W2), x.dtype),
        grid_spec=pltpu.PrefetchScalarGridSpec(
            num_scalar_prefetch=0,
            grid=grid,
            in_specs=[
                pl.BlockSpec((1, C1, TH, W), lambda n, hb: (n, 0, hb, 0)),   # x tile (NCHW)
                pl.BlockSpec((KW, KH, C2, C1), lambda n, hb: (0, 0, 0, 0)),  # fused weight
                pl.BlockSpec((W, W2), lambda n, hb: (0, 0)),                 # dup matrix
                pl.BlockSpec((C2, 1), lambda n, hb: (0, 0)),                 # fused BN bias
            ],
            out_specs=pl.BlockSpec((1, C2, TH * KH, W2), lambda n, hb: (n, 0, hb, 0)),
        ),
        compiler_params=pltpu.CompilerParams(
            dimension_semantics=("parallel", "parallel"),   # megacore sharding
            vmem_limit_bytes=48 * 1024 * 1024,              # headroom for bigger tiles
        ),
        cost_estimate=cost,
    )(x, w_k, dup, b_k)


if __name__ == "__main__":
    key = jax.random.PRNGKey(0)
    k_x, k_w, k_g, k_b, k_m, k_v = jax.random.split(key, 6)

    N, C1, H, W = 2, 4, 16, 16       # batch=2, channels=4, spatial=16 (NCHW)
    C2, K, S, P = 8, 2, 2, 0         # module defaults: k=2, s=2, p=0, bn=True

    x = jax.random.normal(k_x, (N, C1, H, W), dtype=jnp.float32)
    weight = jax.random.normal(k_w, (C1, C2, K, K), dtype=jnp.float32) * 0.5
    gamma = jax.random.uniform(k_g, (C2,), minval=0.5, maxval=1.5)
    beta = jax.random.normal(k_b, (C2,), dtype=jnp.float32) * 0.1
    running_mean = jax.random.normal(k_m, (C2,), dtype=jnp.float32) * 0.1
    running_var = jax.random.uniform(k_v, (C2,), minval=0.5, maxval=1.5)
    eps = 1e-5

    y = conv_transpose_bn_silu(x, weight, gamma, beta, running_mean, running_var,
                               stride=S, padding=P, eps=eps)
    y = jax.block_until_ready(y)
    assert y.shape == (N, C2, H * S, W * S), y.shape

    # Pure-JAX reference following the PyTorch definition (eval-mode BN).
    z = jnp.einsum("nchw,cokl->nohkwl", x, weight,
                   precision=jax.lax.Precision.HIGHEST)
    z = z.reshape(N, C2, H * K, W * K)
    z = (z - running_mean[None, :, None, None]) / jnp.sqrt(
        running_var[None, :, None, None] + eps)
    z = z * gamma[None, :, None, None] + beta[None, :, None, None]
    ref = z * jax.nn.sigmoid(z)

    # bf16 MXU operands + approx reciprocal -> modest tolerance (structural bugs are O(1)).
    err = jnp.max(jnp.abs(y - ref))
    assert jnp.allclose(y, ref, atol=5e-2, rtol=5e-2), f"max abs err {err}"
    print("KERNEL_OK")
</pallas_src>

<mosaic_0001>
module attributes {stable_mosaic.version = 11 : i64} {
  func.func @_deconv_bn_silu_kernel(%arg0: i32, %arg1: i32, %arg2: memref<1x4x8x16xf32, #tpu.memory_space<vmem>>, %arg3: memref<2x2x8x4xbf16, #tpu.memory_space<vmem>>, %arg4: memref<16x32xbf16, #tpu.memory_space<vmem>>, %arg5: memref<8x1xf32, #tpu.memory_space<vmem>>, %arg6: memref<1x8x16x32xf32, #tpu.memory_space<vmem>>) attributes {dimension_semantics = [#tpu.dimension_semantics<parallel>, #tpu.dimension_semantics<parallel>], iteration_bounds = array<i64: 2, 2>, scalar_prefetch = 0 : i64, scratch_operands = 0 : i64, tpu.core_type = #tpu.core_type<tc>, window_params = [{transform_indices = @transform_0, window_bounds = array<i64: 1, 4, 8, 16>}, {pipeline_mode = #tpu.pipeline_mode<synchronous>, transform_indices = @transform_1, window_bounds = array<i64: 2, 2, 8, 4>}, {pipeline_mode = #tpu.pipeline_mode<synchronous>, transform_indices = @transform_2, window_bounds = array<i64: 16, 32>}, {pipeline_mode = #tpu.pipeline_mode<synchronous>, transform_indices = @transform_3, window_bounds = array<i64: 8, 1>}, {transform_indices = @transform_4, window_bounds = array<i64: 1, 8, 16, 32>}]} {
    %c0 = arith.constant 0 : index
    %c0_0 = arith.constant 0 : index
    %0 = vector.load %arg4[%c0, %c0_0] : memref<16x32xbf16, #tpu.memory_space<vmem>>, vector<16x32xbf16>
    %c0_1 = arith.constant 0 : index
    %c0_2 = arith.constant 0 : index
    %1 = vector.load %arg5[%c0_1, %c0_2] : memref<8x1xf32, #tpu.memory_space<vmem>>, vector<8x1xf32>
    %2 = tpu.iota {dimensions = array<i32: 1>} : vector<1x32xi32>
    %c2_i32 = arith.constant 2 : i32
    %c0_i32 = arith.constant 0 : i32
    %3 = arith.cmpi eq, %c2_i32, %c0_i32 : i32
    %c1_i32 = arith.constant 1 : i32
    %4 = arith.select %3, %c1_i32, %c2_i32 : i32
    %5 = vector.broadcast %4 : i32 to vector<1x32xi32>
    %6 = arith.remsi %2, %5 : vector<1x32xi32>
    %c0_i32_3 = arith.constant 0 : i32
    %7 = vector.broadcast %c0_i32_3 : i32 to vector<1x32xi32>
    %8 = arith.cmpi ne, %6, %7 : vector<1x32xi32>
    %c0_i32_4 = arith.constant 0 : i32
    %9 = vector.broadcast %c0_i32_4 : i32 to vector<1x32xi32>
    %10 = arith.cmpi slt, %6, %9 : vector<1x32xi32>
    %c0_i32_5 = arith.constant 0 : i32
    %11 = arith.cmpi slt, %4, %c0_i32_5 : i32
    %12 = vector.broadcast %11 : i1 to vector<1x32xi1>
    %13 = vector.broadcast %12 : vector<1x32xi1> to vector<1x32xi1>
    %14 = arith.xori %10, %13 : vector<1x32xi1>
    %15 = arith.andi %14, %8 : vector<1x32xi1>
    %16 = vector.broadcast %4 : i32 to vector<1x32xi32>
    %17 = arith.addi %6, %16 : vector<1x32xi32>
    %18 = arith.select %15, %17, %6 : vector<1x32xi1>, vector<1x32xi32>
    %c0_i32_6 = arith.constant 0 : i32
    %19 = vector.broadcast %c0_i32_6 : i32 to vector<1x32xi32>
    %20 = arith.cmpi eq, %18, %19 : vector<1x32xi32>
    %21 = arith.extui %20 : vector<1x32xi1> to vector<1x32xi32>
    %22 = arith.sitofp %21 : vector<1x32xi32> to vector<1x32xf32>
    %c2_i32_7 = arith.constant 2 : i32
    %c0_i32_8 = arith.constant 0 : i32
    %23 = arith.cmpi eq, %c2_i32_7, %c0_i32_8 : i32
    %c1_i32_9 = arith.constant 1 : i32
    %24 = arith.select %23, %c1_i32_9, %c2_i32_7 : i32
    %25 = vector.broadcast %24 : i32 to vector<1x32xi32>
    %26 = arith.remsi %2, %25 : vector<1x32xi32>
    %c0_i32_10 = arith.constant 0 : i32
    %27 = vector.broadcast %c0_i32_10 : i32 to vector<1x32xi32>
    %28 = arith.cmpi ne, %26, %27 : vector<1x32xi32>
    %c0_i32_11 = arith.constant 0 : i32
    %29 = vector.broadcast %c0_i32_11 : i32 to vector<1x32xi32>
    %30 = arith.cmpi slt, %26, %29 : vector<1x32xi32>
    %c0_i32_12 = arith.constant 0 : i32
    %31 = arith.cmpi slt, %24, %c0_i32_12 : i32
    %32 = vector.broadcast %31 : i1 to vector<1x32xi1>
    %33 = vector.broadcast %32 : vector<1x32xi1> to vector<1x32xi1>
    %34 = arith.xori %30, %33 : vector<1x32xi1>
    %35 = arith.andi %34, %28 : vector<1x32xi1>
    %36 = vector.broadcast %24 : i32 to vector<1x32xi32>
    %37 = arith.addi %26, %36 : vector<1x32xi32>
    %38 = arith.select %35, %37, %26 : vector<1x32xi1>, vector<1x32xi32>
    %c1_i32_13 = arith.constant 1 : i32
    %39 = vector.broadcast %c1_i32_13 : i32 to vector<1x32xi32>
    %40 = arith.cmpi eq, %38, %39 : vector<1x32xi32>
    %41 = arith.extui %40 : vector<1x32xi1> to vector<1x32xi32>
    %42 = arith.sitofp %41 : vector<1x32xi32> to vector<1x32xf32>
    %c0_14 = arith.constant 0 : index
    %c0_15 = arith.constant 0 : index
    %c0_16 = arith.constant 0 : index
    %c0_17 = arith.constant 0 : index
    %43 = vector.load %arg2[%c0_14, %c0_15, %c0_16, %c0_17] : memref<1x4x8x16xf32, #tpu.memory_space<vmem>>, vector<1x4x1x16xf32>
    %44 = vector.shape_cast %43 : vector<1x4x1x16xf32> to vector<4x16xf32>
    %45 = arith.truncf %44 : vector<4x16xf32> to vector<4x16xbf16>
    %cst = arith.constant dense<0.000000e+00> : vector<4x32xf32>
    %46 = tpu.matmul %45, %0, %cst {dimension_numbers = #tpu.dot_dimension_numbers<[1], [0], [0], [1], [0, 0, 1, 1], [], []>} : vector<4x16xbf16>, vector<16x32xbf16>, vector<4x32xf32> -> vector<4x32xf32>
    %47 = arith.truncf %46 : vector<4x32xf32> to vector<4x32xbf16>
    %c0_18 = arith.constant 0 : index
    %c0_19 = arith.constant 0 : index
    %c0_20 = arith.constant 0 : index
    %c0_21 = arith.constant 0 : index
    %48 = vector.load %arg3[%c0_18, %c0_19, %c0_20, %c0_21] : memref<2x2x8x4xbf16, #tpu.memory_space<vmem>>, vector<1x1x8x4xbf16>
    %49 = vector.shape_cast %48 : vector<1x1x8x4xbf16> to vector<8x4xbf16>
    %cst_22 = arith.constant dense<0.000000e+00> : vector<8x32xf32>
    %50 = tpu.matmul %49, %47, %cst_22 {dimension_numbers = #tpu.dot_dimension_numbers<[1], [0], [0], [1], [0, 0, 1, 1], [], []>} : vector<8x4xbf16>, vector<4x32xbf16>, vector<8x32xf32> -> vector<8x32xf32>
    %51 = vector.broadcast %22 : vector<1x32xf32> to vector<8x32xf32>
    %52 = arith.mulf %50, %51 : vector<8x32xf32>
    %c1 = arith.constant 1 : index
    %c0_23 = arith.constant 0 : index
    %c0_24 = arith.constant 0 : index
    %c0_25 = arith.constant 0 : index
    %53 = vector.load %arg3[%c1, %c0_23, %c0_24, %c0_25] : memref<2x2x8x4xbf16, #tpu.memory_space<vmem>>, vector<1x1x8x4xbf16>
    %54 = vector.shape_cast %53 : vector<1x1x8x4xbf16> to vector<8x4xbf16>
    %cst_26 = arith.constant dense<0.000000e+00> : vector<8x32xf32>
    %55 = tpu.matmul %54, %47, %cst_26 {dimension_numbers = #tpu.dot_dimension_numbers<[1], [0], [0], [1], [0, 0, 1, 1], [], []>} : vector<8x4xbf16>, vector<4x32xbf16>, vector<8x32xf32> -> vector<8x32xf32>
    %56 = vector.broadcast %42 : vector<1x32xf32> to vector<8x32xf32>
    %57 = arith.mulf %55, %56 : vector<8x32xf32>
    %58 = arith.addf %52, %57 : vector<8x32xf32>
    %59 = vector.broadcast %1 : vector<8x1xf32> to vector<8x32xf32>
    %60 = arith.addf %58, %59 : vector<8x32xf32>
    %cst_27 = arith.constant 0.000000e+00 : f32
    %61 = vector.broadcast %cst_27 : f32 to vector<8x32xf32>
    %62 = arith.subf %61, %60 : vector<8x32xf32>
    %63 = math.exp %62 : vector<8x32xf32>
    %cst_28 = arith.constant 1.000000e+00 : f32
    %64 = vector.broadcast %cst_28 : f32 to vector<8x32xf32>
    %65 = arith.addf %64, %63 : vector<8x32xf32>
    %66 = tpu.reciprocal %65 {approx = true} : vector<8x32xf32> -> vector<8x32xf32>
    %67 = arith.mulf %60, %66 : vector<8x32xf32>
    %c0_29 = arith.constant 0 : index
    %c0_30 = arith.constant 0 : index
    %c0_31 = arith.constant 0 : index
    %c0_32 = arith.constant 0 : index
    %68 = vector.load %arg6[%c0_29, %c0_30, %c0_31, %c0_32] : memref<1x8x16x32xf32, #tpu.memory_space<vmem>>, vector<1x8x1x32xf32>
    %69 = vector.shape_cast %68 : vector<1x8x1x32xf32> to vector<8x32xf32>
    %70 = vector.shape_cast %67 : vector<8x32xf32> to vector<1x8x1x32xf32>
    tpu.vector_store %arg6[%c0_29, %c0_30, %c0_31, %c0_32], %70 {strides = array<i32>} : memref<1x8x16x32xf32, #tpu.memory_space<vmem>>, vector<1x8x1x32xf32>,
    %c0_33 = arith.constant 0 : index
    %c1_34 = arith.constant 1 : index
    %c0_35 = arith.constant 0 : index
    %c0_36 = arith.constant 0 : index
    %71 = vector.load %arg3[%c0_33, %c1_34, %c0_35, %c0_36] : memref<2x2x8x4xbf16, #tpu.memory_space<vmem>>, vector<1x1x8x4xbf16>
    %72 = vector.shape_cast %71 : vector<1x1x8x4xbf16> to vector<8x4xbf16>
    %cst_37 = arith.constant dense<0.000000e+00> : vector<8x32xf32>
    %73 = tpu.matmul %72, %47, %cst_37 {dimension_numbers = #tpu.dot_dimension_numbers<[1], [0], [0], [1], [0, 0, 1, 1], [], []>} : vector<8x4xbf16>, vector<4x32xbf16>, vector<8x32xf32> -> vector<8x32xf32>
    %74 = vector.broadcast %22 : vector<1x32xf32> to vector<8x32xf32>
    %75 = arith.mulf %73, %74 : vector<8x32xf32>
    %c1_38 = arith.constant 1 : index
    %c1_39 = arith.constant 1 : index
    %c0_40 = arith.constant 0 : index
    %c0_41 = arith.constant 0 : index
    %76 = vector.load %arg3[%c1_38, %c1_39, %c0_40, %c0_41] : memref<2x2x8x4xbf16, #tpu.memory_space<vmem>>, vector<1x1x8x4xbf16>
    %77 = vector.shape_cast %76 : vector<1x1x8x4xbf16> to vector<8x4xbf16>
    %cst_42 = arith.constant dense<0.000000e+00> : vector<8x32xf32>
    %78 = tpu.matmul %77, %47, %cst_42 {dimension_numbers = #tpu.dot_dimension_numbers<[1], [0], [0], [1], [0, 0, 1, 1], [], []>} : vector<8x4xbf16>, vector<4x32xbf16>, vector<8x32xf32> -> vector<8x32xf32>
    %79 = vector.broadcast %42 : vector<1x32xf32> to vector<8x32xf32>
    %80 = arith.mulf %78, %79 : vector<8x32xf32>
    %81 = arith.addf %75, %80 : vector<8x32xf32>
    %82 = vector.broadcast %1 : vector<8x1xf32> to vector<8x32xf32>
    %83 = arith.addf %81, %82 : vector<8x32xf32>
    %cst_43 = arith.constant 0.000000e+00 : f32
    %84 = vector.broadcast %cst_43 : f32 to vector<8x32xf32>
    %85 = arith.subf %84, %83 : vector<8x32xf32>
    %86 = math.exp %85 : vector<8x32xf32>
    %cst_44 = arith.constant 1.000000e+00 : f32
    %87 = vector.broadcast %cst_44 : f32 to vector<8x32xf32>
    %88 = arith.addf %87, %86 : vector<8x32xf32>
    %89 = tpu.reciprocal %88 {approx = true} : vector<8x32xf32> -> vector<8x32xf32>
    %90 = arith.mulf %83, %89 : vector<8x32xf32>
    %c0_45 = arith.constant 0 : index
    %c0_46 = arith.constant 0 : index
    %c1_47 = arith.constant 1 : index
    %c0_48 = arith.constant 0 : index
    %91 = vector.load %arg6[%c0_45, %c0_46, %c1_47, %c0_48] : memref<1x8x16x32xf32, #tpu.memory_space<vmem>>, vector<1x8x1x32xf32>
    %92 = vector.shape_cast %91 : vector<1x8x1x32xf32> to vector<8x32xf32>
    %93 = vector.shape_cast %90 : vector<8x32xf32> to vector<1x8x1x32xf32>
    tpu.vector_store %arg6[%c0_45, %c0_46, %c1_47, %c0_48], %93 {strides = array<i32>} : memref<1x8x16x32xf32, #tpu.memory_space<vmem>>, vector<1x8x1x32xf32>,
    %c0_49 = arith.constant 0 : index
    %c0_50 = arith.constant 0 : index
    %c1_51 = arith.constant 1 : index
    %c0_52 = arith.constant 0 : index
    %94 = vector.load %arg2[%c0_49, %c0_50, %c1_51, %c0_52] : memref<1x4x8x16xf32, #tpu.memory_space<vmem>>, vector<1x4x1x16xf32>
    %95 = vector.shape_cast %94 : vector<1x4x1x16xf32> to vector<4x16xf32>
    %96 = arith.truncf %95 : vector<4x16xf32> to vector<4x16xbf16>
    %cst_53 = arith.constant dense<0.000000e+00> : vector<4x32xf32>
    %97 = tpu.matmul %96, %0, %cst_53 {dimension_numbers = #tpu.dot_dimension_numbers<[1], [0], [0], [1], [0, 0, 1, 1], [], []>} : vector<4x16xbf16>, vector<16x32xbf16>, vector<4x32xf32> -> vector<4x32xf32>
    %98 = arith.truncf %97 : vector<4x32xf32> to vector<4x32xbf16>
    %c0_54 = arith.constant 0 : index
    %c0_55 = arith.constant 0 : index
    %c0_56 = arith.constant 0 : index
    %c0_57 = arith.constant 0 : index
    %99 = vector.load %arg3[%c0_54, %c0_55, %c0_56, %c0_57] : memref<2x2x8x4xbf16, #tpu.memory_space<vmem>>, vector<1x1x8x4xbf16>
    %100 = vector.shape_cast %99 : vector<1x1x8x4xbf16> to vector<8x4xbf16>
    %cst_58 = arith.constant dense<0.000000e+00> : vector<8x32xf32>
    %101 = tpu.matmul %100, %98, %cst_58 {dimension_numbers = #tpu.dot_dimension_numbers<[1], [0], [0], [1], [0, 0, 1, 1], [], []>} : vector<8x4xbf16>, vector<4x32xbf16>, vector<8x32xf32> -> vector<8x32xf32>
    %102 = vector.broadcast %22 : vector<1x32xf32> to vector<8x32xf32>
    %103 = arith.mulf %101, %102 : vector<8x32xf32>
    %c1_59 = arith.constant 1 : index
    %c0_60 = arith.constant 0 : index
    %c0_61 = arith.constant 0 : index
    %c0_62 = arith.constant 0 : index
    %104 = vector.load %arg3[%c1_59, %c0_60, %c0_61, %c0_62] : memref<2x2x8x4xbf16, #tpu.memory_space<vmem>>, vector<1x1x8x4xbf16>
    %105 = vector.shape_cast %104 : vector<1x1x8x4xbf16> to vector<8x4xbf16>
    %cst_63 = arith.constant dense<0.000000e+00> : vector<8x32xf32>
    %106 = tpu.matmul %105, %98, %cst_63 {dimension_numbers = #tpu.dot_dimension_numbers<[1], [0], [0], [1], [0, 0, 1, 1], [], []>} : vector<8x4xbf16>, vector<4x32xbf16>, vector<8x32xf32> -> vector<8x32xf32>
    %107 = vector.broadcast %42 : vector<1x32xf32> to vector<8x32xf32>
    %108 = arith.mulf %106, %107 : vector<8x32xf32>
    %109 = arith.addf %103, %108 : vector<8x32xf32>
    %110 = vector.broadcast %1 : vector<8x1xf32> to vector<8x32xf32>
    %111 = arith.addf %109, %110 : vector<8x32xf32>
    %cst_64 = arith.constant 0.000000e+00 : f32
    %112 = vector.broadcast %cst_64 : f32 to vector<8x32xf32>
    %113 = arith.subf %112, %111 : vector<8x32xf32>
    %114 = math.exp %113 : vector<8x32xf32>
    %cst_65 = arith.constant 1.000000e+00 : f32
    %115 = vector.broadcast %cst_65 : f32 to vector<8x32xf32>
    %116 = arith.addf %115, %114 : vector<8x32xf32>
    %117 = tpu.reciprocal %116 {approx = true} : vector<8x32xf32> -> vector<8x32xf32>
    %118 = arith.mulf %111, %117 : vector<8x32xf32>
    %c0_66 = arith.constant 0 : index
    %c0_67 = arith.constant 0 : index
    %c2 = arith.constant 2 : index
    %c0_68 = arith.constant 0 : index
    %119 = vector.load %arg6[%c0_66, %c0_67, %c2, %c0_68] : memref<1x8x16x32xf32, #tpu.memory_space<vmem>>, vector<1x8x1x32xf32>
    %120 = vector.shape_cast %119 : vector<1x8x1x32xf32> to vector<8x32xf32>
    %121 = vector.shape_cast %118 : vector<8x32xf32> to vector<1x8x1x32xf32>
    tpu.vector_store %arg6[%c0_66, %c0_67, %c2, %c0_68], %121 {strides = array<i32>} : memref<1x8x16x32xf32, #tpu.memory_space<vmem>>, vector<1x8x1x32xf32>,
    %c0_69 = arith.constant 0 : index
    %c1_70 = arith.constant 1 : index
    %c0_71 = arith.constant 0 : index
    %c0_72 = arith.constant 0 : index
    %122 = vector.load %arg3[%c0_69, %c1_70, %c0_71, %c0_72] : memref<2x2x8x4xbf16, #tpu.memory_space<vmem>>, vector<1x1x8x4xbf16>
    %123 = vector.shape_cast %122 : vector<1x1x8x4xbf16> to vector<8x4xbf16>
    %cst_73 = arith.constant dense<0.000000e+00> : vector<8x32xf32>
    %124 = tpu.matmul %123, %98, %cst_73 {dimension_numbers = #tpu.dot_dimension_numbers<[1], [0], [0], [1], [0, 0, 1, 1], [], []>} : vector<8x4xbf16>, vector<4x32xbf16>, vector<8x32xf32> -> vector<8x32xf32>
    %125 = vector.broadcast %22 : vector<1x32xf32> to vector<8x32xf32>
    %126 = arith.mulf %124, %125 : vector<8x32xf32>
    %c1_74 = arith.constant 1 : index
    %c1_75 = arith.constant 1 : index
    %c0_76 = arith.constant 0 : index
    %c0_77 = arith.constant 0 : index
    %127 = vector.load %arg3[%c1_74, %c1_75, %c0_76, %c0_77] : memref<2x2x8x4xbf16, #tpu.memory_space<vmem>>, vector<1x1x8x4xbf16>
    %128 = vector.shape_cast %127 : vector<1x1x8x4xbf16> to vector<8x4xbf16>
    %cst_78 = arith.constant dense<0.000000e+00> : vector<8x32xf32>
    %129 = tpu.matmul %128, %98, %cst_78 {dimension_numbers = #tpu.dot_dimension_numbers<[1], [0], [0], [1], [0, 0, 1, 1], [], []>} : vector<8x4xbf16>, vector<4x32xbf16>, vector<8x32xf32> -> vector<8x32xf32>
    %130 = vector.broadcast %42 : vector<1x32xf32> to vector<8x32xf32>
    %131 = arith.mulf %129, %130 : vector<8x32xf32>
    %132 = arith.addf %126, %131 : vector<8x32xf32>
    %133 = vector.broadcast %1 : vector<8x1xf32> to vector<8x32xf32>
    %134 = arith.addf %132, %133 : vector<8x32xf32>
    %cst_79 = arith.constant 0.000000e+00 : f32
    %135 = vector.broadcast %cst_79 : f32 to vector<8x32xf32>
    %136 = arith.subf %135, %134 : vector<8x32xf32>
    %137 = math.exp %136 : vector<8x32xf32>
    %cst_80 = arith.constant 1.000000e+00 : f32
    %138 = vector.broadcast %cst_80 : f32 to vector<8x32xf32>
    %139 = arith.addf %138, %137 : vector<8x32xf32>
    %140 = tpu.reciprocal %139 {approx = true} : vector<8x32xf32> -> vector<8x32xf32>
    %141 = arith.mulf %134, %140 : vector<8x32xf32>
    %c0_81 = arith.constant 0 : index
    %c0_82 = arith.constant 0 : index
    %c3 = arith.constant 3 : index
    %c0_83 = arith.constant 0 : index
    %142 = vector.load %arg6[%c0_81, %c0_82, %c3, %c0_83] : memref<1x8x16x32xf32, #tpu.memory_space<vmem>>, vector<1x8x1x32xf32>
    %143 = vector.shape_cast %142 : vector<1x8x1x32xf32> to vector<8x32xf32>
    %144 = vector.shape_cast %141 : vector<8x32xf32> to vector<1x8x1x32xf32>
    tpu.vector_store %arg6[%c0_81, %c0_82, %c3, %c0_83], %144 {strides = array<i32>} : memref<1x8x16x32xf32, #tpu.memory_space<vmem>>, vector<1x8x1x32xf32>,
    %c0_84 = arith.constant 0 : index
    %c0_85 = arith.constant 0 : index
    %c2_86 = arith.constant 2 : index
    %c0_87 = arith.constant 0 : index
    %145 = vector.load %arg2[%c0_84, %c0_85, %c2_86, %c0_87] : memref<1x4x8x16xf32, #tpu.memory_space<vmem>>, vector<1x4x1x16xf32>
    %146 = vector.shape_cast %145 : vector<1x4x1x16xf32> to vector<4x16xf32>
    %147 = arith.truncf %146 : vector<4x16xf32> to vector<4x16xbf16>
    %cst_88 = arith.constant dense<0.000000e+00> : vector<4x32xf32>
    %148 = tpu.matmul %147, %0, %cst_88 {dimension_numbers = #tpu.dot_dimension_numbers<[1], [0], [0], [1], [0, 0, 1, 1], [], []>} : vector<4x16xbf16>, vector<16x32xbf16>, vector<4x32xf32> -> vector<4x32xf32>
    %149 = arith.truncf %148 : vector<4x32xf32> to vector<4x32xbf16>
    %c0_89 = arith.constant 0 : index
    %c0_90 = arith.constant 0 : index
    %c0_91 = arith.constant 0 : index
    %c0_92 = arith.constant 0 : index
    %150 = vector.load %arg3[%c0_89, %c0_90, %c0_91, %c0_92] : memref<2x2x8x4xbf16, #tpu.memory_space<vmem>>, vector<1x1x8x4xbf16>
    %151 = vector.shape_cast %150 : vector<1x1x8x4xbf16> to vector<8x4xbf16>
    %cst_93 = arith.constant dense<0.000000e+00> : vector<8x32xf32>
    %152 = tpu.matmul %151, %149, %cst_93 {dimension_numbers = #tpu.dot_dimension_numbers<[1], [0], [0], [1], [0, 0, 1, 1], [], []>} : vector<8x4xbf16>, vector<4x32xbf16>, vector<8x32xf32> -> vector<8x32xf32>
    %153 = vector.broadcast %22 : vector<1x32xf32> to vector<8x32xf32>
    %154 = arith.mulf %152, %153 : vector<8x32xf32>
    %c1_94 = arith.constant 1 : index
    %c0_95 = arith.constant 0 : index
    %c0_96 = arith.constant 0 : index
    %c0_97 = arith.constant 0 : index
    %155 = vector.load %arg3[%c1_94, %c0_95, %c0_96, %c0_97] : memref<2x2x8x4xbf16, #tpu.memory_space<vmem>>, vector<1x1x8x4xbf16>
    %156 = vector.shape_cast %155 : vector<1x1x8x4xbf16> to vector<8x4xbf16>
    %cst_98 = arith.constant dense<0.000000e+00> : vector<8x32xf32>
    %157 = tpu.matmul %156, %149, %cst_98 {dimension_numbers = #tpu.dot_dimension_numbers<[1], [0], [0], [1], [0, 0, 1, 1], [], []>} : vector<8x4xbf16>, vector<4x32xbf16>, vector<8x32xf32> -> vector<8x32xf32>
    %158 = vector.broadcast %42 : vector<1x32xf32> to vector<8x32xf32>
    %159 = arith.mulf %157, %158 : vector<8x32xf32>
    %160 = arith.addf %154, %159 : vector<8x32xf32>
    %161 = vector.broadcast %1 : vector<8x1xf32> to vector<8x32xf32>
    %162 = arith.addf %160, %161 : vector<8x32xf32>
    %cst_99 = arith.constant 0.000000e+00 : f32
    %163 = vector.broadcast %cst_99 : f32 to vector<8x32xf32>
    %164 = arith.subf %163, %162 : vector<8x32xf32>
    %165 = math.exp %164 : vector<8x32xf32>
    %cst_100 = arith.constant 1.000000e+00 : f32
    %166 = vector.broadcast %cst_100 : f32 to vector<8x32xf32>
    %167 = arith.addf %166, %165 : vector<8x32xf32>
    %168 = tpu.reciprocal %167 {approx = true} : vector<8x32xf32> -> vector<8x32xf32>
    %169 = arith.mulf %162, %168 : vector<8x32xf32>
    %c0_101 = arith.constant 0 : index
    %c0_102 = arith.constant 0 : index
    %c4 = arith.constant 4 : index
    %c0_103 = arith.constant 0 : index
    %170 = vector.load %arg6[%c0_101, %c0_102, %c4, %c0_103] : memref<1x8x16x32xf32, #tpu.memory_space<vmem>>, vector<1x8x1x32xf32>
    %171 = vector.shape_cast %170 : vector<1x8x1x32xf32> to vector<8x32xf32>
    %172 = vector.shape_cast %169 : vector<8x32xf32> to vector<1x8x1x32xf32>
    tpu.vector_store %arg6[%c0_101, %c0_102, %c4, %c0_103], %172 {strides = array<i32>} : memref<1x8x16x32xf32, #tpu.memory_space<vmem>>, vector<1x8x1x32xf32>,
    %c0_104 = arith.constant 0 : index
    %c1_105 = arith.constant 1 : index
    %c0_106 = arith.constant 0 : index
    %c0_107 = arith.constant 0 : index
    %173 = vector.load %arg3[%c0_104, %c1_105, %c0_106, %c0_107] : memref<2x2x8x4xbf16, #tpu.memory_space<vmem>>, vector<1x1x8x4xbf16>
    %174 = vector.shape_cast %173 : vector<1x1x8x4xbf16> to vector<8x4xbf16>
    %cst_108 = arith.constant dense<0.000000e+00> : vector<8x32xf32>
    %175 = tpu.matmul %174, %149, %cst_108 {dimension_numbers = #tpu.dot_dimension_numbers<[1], [0], [0], [1], [0, 0, 1, 1], [], []>} : vector<8x4xbf16>, vector<4x32xbf16>, vector<8x32xf32> -> vector<8x32xf32>
    %176 = vector.broadcast %22 : vector<1x32xf32> to vector<8x32xf32>
    %177 = arith.mulf %175, %176 : vector<8x32xf32>
    %c1_109 = arith.constant 1 : index
    %c1_110 = arith.constant 1 : index
    %c0_111 = arith.constant 0 : index
    %c0_112 = arith.constant 0 : index
    %178 = vector.load %arg3[%c1_109, %c1_110, %c0_111, %c0_112] : memref<2x2x8x4xbf16, #tpu.memory_space<vmem>>, vector<1x1x8x4xbf16>
    %179 = vector.shape_cast %178 : vector<1x1x8x4xbf16> to vector<8x4xbf16>
    %cst_113 = arith.constant dense<0.000000e+00> : vector<8x32xf32>
    %180 = tpu.matmul %179, %149, %cst_113 {dimension_numbers = #tpu.dot_dimension_numbers<[1], [0], [0], [1], [0, 0, 1, 1], [], []>} : vector<8x4xbf16>, vector<4x32xbf16>, vector<8x32xf32> -> vector<8x32xf32>
    %181 = vector.broadcast %42 : vector<1x32xf32> to vector<8x32xf32>
    %182 = arith.mulf %180, %181 : vector<8x32xf32>
    %183 = arith.addf %177, %182 : vector<8x32xf32>
    %184 = vector.broadcast %1 : vector<8x1xf32> to vector<8x32xf32>
    %185 = arith.addf %183, %184 : vector<8x32xf32>
    %cst_114 = arith.constant 0.000000e+00 : f32
    %186 = vector.broadcast %cst_114 : f32 to vector<8x32xf32>
    %187 = arith.subf %186, %185 : vector<8x32xf32>
    %188 = math.exp %187 : vector<8x32xf32>
    %cst_115 = arith.constant 1.000000e+00 : f32
    %189 = vector.broadcast %cst_115 : f32 to vector<8x32xf32>
    %190 = arith.addf %189, %188 : vector<8x32xf32>
    %191 = tpu.reciprocal %190 {approx = true} : vector<8x32xf32> -> vector<8x32xf32>
    %192 = arith.mulf %185, %191 : vector<8x32xf32>
    %c0_116 = arith.constant 0 : index
    %c0_117 = arith.constant 0 : index
    %c5 = arith.constant 5 : index
    %c0_118 = arith.constant 0 : index
    %193 = vector.load %arg6[%c0_116, %c0_117, %c5, %c0_118] : memref<1x8x16x32xf32, #tpu.memory_space<vmem>>, vector<1x8x1x32xf32>
    %194 = vector.shape_cast %193 : vector<1x8x1x32xf32> to vector<8x32xf32>
    %195 = vector.shape_cast %192 : vector<8x32xf32> to vector<1x8x1x32xf32>
    tpu.vector_store %arg6[%c0_116, %c0_117, %c5, %c0_118], %195 {strides = array<i32>} : memref<1x8x16x32xf32, #tpu.memory_space<vmem>>, vector<1x8x1x32xf32>,
    %c0_119 = arith.constant 0 : index
    %c0_120 = arith.constant 0 : index
    %c3_121 = arith.constant 3 : index
    %c0_122 = arith.constant 0 : index
    %196 = vector.load %arg2[%c0_119, %c0_120, %c3_121, %c0_122] : memref<1x4x8x16xf32, #tpu.memory_space<vmem>>, vector<1x4x1x16xf32>
    %197 = vector.shape_cast %196 : vector<1x4x1x16xf32> to vector<4x16xf32>
    %198 = arith.truncf %197 : vector<4x16xf32> to vector<4x16xbf16>
    %cst_123 = arith.constant dense<0.000000e+00> : vector<4x32xf32>
    %199 = tpu.matmul %198, %0, %cst_123 {dimension_numbers = #tpu.dot_dimension_numbers<[1], [0], [0], [1], [0, 0, 1, 1], [], []>} : vector<4x16xbf16>, vector<16x32xbf16>, vector<4x32xf32> -> vector<4x32xf32>
    %200 = arith.truncf %199 : vector<4x32xf32> to vector<4x32xbf16>
    %c0_124 = arith.constant 0 : index
    %c0_125 = arith.constant 0 : index
    %c0_126 = arith.constant 0 : index
    %c0_127 = arith.constant 0 : index
    %201 = vector.load %arg3[%c0_124, %c0_125, %c0_126, %c0_127] : memref<2x2x8x4xbf16, #tpu.memory_space<vmem>>, vector<1x1x8x4xbf16>
    %202 = vector.shape_cast %201 : vector<1x1x8x4xbf16> to vector<8x4xbf16>
    %cst_128 = arith.constant dense<0.000000e+00> : vector<8x32xf32>
    %203 = tpu.matmul %202, %200, %cst_128 {dimension_numbers = #tpu.dot_dimension_numbers<[1], [0], [0], [1], [0, 0, 1, 1], [], []>} : vector<8x4xbf16>, vector<4x32xbf16>, vector<8x32xf32> -> vector<8x32xf32>
    %204 = vector.broadcast %22 : vector<1x32xf32> to vector<8x32xf32>
    %205 = arith.mulf %203, %204 : vector<8x32xf32>
    %c1_129 = arith.constant 1 : index
    %c0_130 = arith.constant 0 : index
    %c0_131 = arith.constant 0 : index
    %c0_132 = arith.constant 0 : index
    %206 = vector.load %arg3[%c1_129, %c0_130, %c0_131, %c0_132] : memref<2x2x8x4xbf16, #tpu.memory_space<vmem>>, vector<1x1x8x4xbf16>
    %207 = vector.shape_cast %206 : vector<1x1x8x4xbf16> to vector<8x4xbf16>
    %cst_133 = arith.constant dense<0.000000e+00> : vector<8x32xf32>
    %208 = tpu.matmul %207, %200, %cst_133 {dimension_numbers = #tpu.dot_dimension_numbers<[1], [0], [0], [1], [0, 0, 1, 1], [], []>} : vector<8x4xbf16>, vector<4x32xbf16>, vector<8x32xf32> -> vector<8x32xf32>
    %209 = vector.broadcast %42 : vector<1x32xf32> to vector<8x32xf32>
    %210 = arith.mulf %208, %209 : vector<8x32xf32>
    %211 = arith.addf %205, %210 : vector<8x32xf32>
    %212 = vector.broadcast %1 : vector<8x1xf32> to vector<8x32xf32>
    %213 = arith.addf %211, %212 : vector<8x32xf32>
    %cst_134 = arith.constant 0.000000e+00 : f32
    %214 = vector.broadcast %cst_134 : f32 to vector<8x32xf32>
    %215 = arith.subf %214, %213 : vector<8x32xf32>
    %216 = math.exp %215 : vector<8x32xf32>
    %cst_135 = arith.constant 1.000000e+00 : f32
    %217 = vector.broadcast %cst_135 : f32 to vector<8x32xf32>
    %218 = arith.addf %217, %216 : vector<8x32xf32>
    %219 = tpu.reciprocal %218 {approx = true} : vector<8x32xf32> -> vector<8x32xf32>
    %220 = arith.mulf %213, %219 : vector<8x32xf32>
    %c0_136 = arith.constant 0 : index
    %c0_137 = arith.constant 0 : index
    %c6 = arith.constant 6 : index
    %c0_138 = arith.constant 0 : index
    %221 = vector.load %arg6[%c0_136, %c0_137, %c6, %c0_138] : memref<1x8x16x32xf32, #tpu.memory_space<vmem>>, vector<1x8x1x32xf32>
    %222 = vector.shape_cast %221 : vector<1x8x1x32xf32> to vector<8x32xf32>
    %223 = vector.shape_cast %220 : vector<8x32xf32> to vector<1x8x1x32xf32>
    tpu.vector_store %arg6[%c0_136, %c0_137, %c6, %c0_138], %223 {strides = array<i32>} : memref<1x8x16x32xf32, #tpu.memory_space<vmem>>, vector<1x8x1x32xf32>,
    %c0_139 = arith.constant 0 : index
    %c1_140 = arith.constant 1 : index
    %c0_141 = arith.constant 0 : index
    %c0_142 = arith.constant 0 : index
    %224 = vector.load %arg3[%c0_139, %c1_140, %c0_141, %c0_142] : memref<2x2x8x4xbf16, #tpu.memory_space<vmem>>, vector<1x1x8x4xbf16>
    %225 = vector.shape_cast %224 : vector<1x1x8x4xbf16> to vector<8x4xbf16>
    %cst_143 = arith.constant dense<0.000000e+00> : vector<8x32xf32>
    %226 = tpu.matmul %225, %200, %cst_143 {dimension_numbers = #tpu.dot_dimension_numbers<[1], [0], [0], [1], [0, 0, 1, 1], [], []>} : vector<8x4xbf16>, vector<4x32xbf16>, vector<8x32xf32> -> vector<8x32xf32>
    %227 = vector.broadcast %22 : vector<1x32xf32> to vector<8x32xf32>
    %228 = arith.mulf %226, %227 : vector<8x32xf32>
    %c1_144 = arith.constant 1 : index
    %c1_145 = arith.constant 1 : index
    %c0_146 = arith.constant 0 : index
    %c0_147 = arith.constant 0 : index
    %229 = vector.load %arg3[%c1_144, %c1_145, %c0_146, %c0_147] : memref<2x2x8x4xbf16, #tpu.memory_space<vmem>>, vector<1x1x8x4xbf16>
    %230 = vector.shape_cast %229 : vector<1x1x8x4xbf16> to vector<8x4xbf16>
    %cst_148 = arith.constant dense<0.000000e+00> : vector<8x32xf32>
    %231 = tpu.matmul %230, %200, %cst_148 {dimension_numbers = #tpu.dot_dimension_numbers<[1], [0], [0], [1], [0, 0, 1, 1], [], []>} : vector<8x4xbf16>, vector<4x32xbf16>, vector<8x32xf32> -> vector<8x32xf32>
    %232 = vector.broadcast %42 : vector<1x32xf32> to vector<8x32xf32>
    %233 = arith.mulf %231, %232 : vector<8x32xf32>
    %234 = arith.addf %228, %233 : vector<8x32xf32>
    %235 = vector.broadcast %1 : vector<8x1xf32> to vector<8x32xf32>
    %236 = arith.addf %234, %235 : vector<8x32xf32>
    %cst_149 = arith.constant 0.000000e+00 : f32
    %237 = vector.broadcast %cst_149 : f32 to vector<8x32xf32>
    %238 = arith.subf %237, %236 : vector<8x32xf32>
    %239 = math.exp %238 : vector<8x32xf32>
    %cst_150 = arith.constant 1.000000e+00 : f32
    %240 = vector.broadcast %cst_150 : f32 to vector<8x32xf32>
    %241 = arith.addf %240, %239 : vector<8x32xf32>
    %242 = tpu.reciprocal %241 {approx = true} : vector<8x32xf32> -> vector<8x32xf32>
    %243 = arith.mulf %236, %242 : vector<8x32xf32>
    %c0_151 = arith.constant 0 : index
    %c0_152 = arith.constant 0 : index
    %c7 = arith.constant 7 : index
    %c0_153 = arith.constant 0 : index
    %244 = vector.load %arg6[%c0_151, %c0_152, %c7, %c0_153] : memref<1x8x16x32xf32, #tpu.memory_space<vmem>>, vector<1x8x1x32xf32>
    %245 = vector.shape_cast %244 : vector<1x8x1x32xf32> to vector<8x32xf32>
    %246 = vector.shape_cast %243 : vector<8x32xf32> to vector<1x8x1x32xf32>
    tpu.vector_store %arg6[%c0_151, %c0_152, %c7, %c0_153], %246 {strides = array<i32>} : memref<1x8x16x32xf32, #tpu.memory_space<vmem>>, vector<1x8x1x32xf32>,
    %c0_154 = arith.constant 0 : index
    %c0_155 = arith.constant 0 : index
    %c4_156 = arith.constant 4 : index
    %c0_157 = arith.constant 0 : index
    %247 = vector.load %arg2[%c0_154, %c0_155, %c4_156, %c0_157] : memref<1x4x8x16xf32, #tpu.memory_space<vmem>>, vector<1x4x1x16xf32>
    %248 = vector.shape_cast %247 : vector<1x4x1x16xf32> to vector<4x16xf32>
    %249 = arith.truncf %248 : vector<4x16xf32> to vector<4x16xbf16>
    %cst_158 = arith.constant dense<0.000000e+00> : vector<4x32xf32>
    %250 = tpu.matmul %249, %0, %cst_158 {dimension_numbers = #tpu.dot_dimension_numbers<[1], [0], [0], [1], [0, 0, 1, 1], [], []>} : vector<4x16xbf16>, vector<16x32xbf16>, vector<4x32xf32> -> vector<4x32xf32>
    %251 = arith.truncf %250 : vector<4x32xf32> to vector<4x32xbf16>
    %c0_159 = arith.constant 0 : index
    %c0_160 = arith.constant 0 : index
    %c0_161 = arith.constant 0 : index
    %c0_162 = arith.constant 0 : index
    %252 = vector.load %arg3[%c0_159, %c0_160, %c0_161, %c0_162] : memref<2x2x8x4xbf16, #tpu.memory_space<vmem>>, vector<1x1x8x4xbf16>
    %253 = vector.shape_cast %252 : vector<1x1x8x4xbf16> to vector<8x4xbf16>
    %cst_163 = arith.constant dense<0.000000e+00> : vector<8x32xf32>
    %254 = tpu.matmul %253, %251, %cst_163 {dimension_numbers = #tpu.dot_dimension_numbers<[1], [0], [0], [1], [0, 0, 1, 1], [], []>} : vector<8x4xbf16>, vector<4x32xbf16>, vector<8x32xf32> -> vector<8x32xf32>
    %255 = vector.broadcast %22 : vector<1x32xf32> to vector<8x32xf32>
    %256 = arith.mulf %254, %255 : vector<8x32xf32>
    %c1_164 = arith.constant 1 : index
    %c0_165 = arith.constant 0 : index
    %c0_166 = arith.constant 0 : index
    %c0_167 = arith.constant 0 : index
    %257 = vector.load %arg3[%c1_164, %c0_165, %c0_166, %c0_167] : memref<2x2x8x4xbf16, #tpu.memory_space<vmem>>, vector<1x1x8x4xbf16>
    %258 = vector.shape_cast %257 : vector<1x1x8x4xbf16> to vector<8x4xbf16>
    %cst_168 = arith.constant dense<0.000000e+00> : vector<8x32xf32>
    %259 = tpu.matmul %258, %251, %cst_168 {dimension_numbers = #tpu.dot_dimension_numbers<[1], [0], [0], [1], [0, 0, 1, 1], [], []>} : vector<8x4xbf16>, vector<4x32xbf16>, vector<8x32xf32> -> vector<8x32xf32>
    %260 = vector.broadcast %42 : vector<1x32xf32> to vector<8x32xf32>
    %261 = arith.mulf %259, %260 : vector<8x32xf32>
    %262 = arith.addf %256, %261 : vector<8x32xf32>
    %263 = vector.broadcast %1 : vector<8x1xf32> to vector<8x32xf32>
    %264 = arith.addf %262, %263 : vector<8x32xf32>
    %cst_169 = arith.constant 0.000000e+00 : f32
    %265 = vector.broadcast %cst_169 : f32 to vector<8x32xf32>
    %266 = arith.subf %265, %264 : vector<8x32xf32>
    %267 = math.exp %266 : vector<8x32xf32>
    %cst_170 = arith.constant 1.000000e+00 : f32
    %268 = vector.broadcast %cst_170 : f32 to vector<8x32xf32>
    %269 = arith.addf %268, %267 : vector<8x32xf32>
    %270 = tpu.reciprocal %269 {approx = true} : vector<8x32xf32> -> vector<8x32xf32>
    %271 = arith.mulf %264, %270 : vector<8x32xf32>
    %c0_171 = arith.constant 0 : index
    %c0_172 = arith.constant 0 : index
    %c8 = arith.constant 8 : index
    %c0_173 = arith.constant 0 : index
    %272 = vector.load %arg6[%c0_171, %c0_172, %c8, %c0_173] : memref<1x8x16x32xf32, #tpu.memory_space<vmem>>, vector<1x8x1x32xf32>
    %273 = vector.shape_cast %272 : vector<1x8x1x32xf32> to vector<8x32xf32>
    %274 = vector.shape_cast %271 : vector<8x32xf32> to vector<1x8x1x32xf32>
    tpu.vector_store %arg6[%c0_171, %c0_172, %c8, %c0_173], %274 {strides = array<i32>} : memref<1x8x16x32xf32, #tpu.memory_space<vmem>>, vector<1x8x1x32xf32>,
    %c0_174 = arith.constant 0 : index
    %c1_175 = arith.constant 1 : index
    %c0_176 = arith.constant 0 : index
    %c0_177 = arith.constant 0 : index
    %275 = vector.load %arg3[%c0_174, %c1_175, %c0_176, %c0_177] : memref<2x2x8x4xbf16, #tpu.memory_space<vmem>>, vector<1x1x8x4xbf16>
    %276 = vector.shape_cast %275 : vector<1x1x8x4xbf16> to vector<8x4xbf16>
    %cst_178 = arith.constant dense<0.000000e+00> : vector<8x32xf32>
    %277 = tpu.matmul %276, %251, %cst_178 {dimension_numbers = #tpu.dot_dimension_numbers<[1], [0], [0], [1], [0, 0, 1, 1], [], []>} : vector<8x4xbf16>, vector<4x32xbf16>, vector<8x32xf32> -> vector<8x32xf32>
    %278 = vector.broadcast %22 : vector<1x32xf32> to vector<8x32xf32>
    %279 = arith.mulf %277, %278 : vector<8x32xf32>
    %c1_179 = arith.constant 1 : index
    %c1_180 = arith.constant 1 : index
    %c0_181 = arith.constant 0 : index
    %c0_182 = arith.constant 0 : index
    %280 = vector.load %arg3[%c1_179, %c1_180, %c0_181, %c0_182] : memref<2x2x8x4xbf16, #tpu.memory_space<vmem>>, vector<1x1x8x4xbf16>
    %281 = vector.shape_cast %280 : vector<1x1x8x4xbf16> to vector<8x4xbf16>
    %cst_183 = arith.constant dense<0.000000e+00> : vector<8x32xf32>
    %282 = tpu.matmul %281, %251, %cst_183 {dimension_numbers = #tpu.dot_dimension_numbers<[1], [0], [0], [1], [0, 0, 1, 1], [], []>} : vector<8x4xbf16>, vector<4x32xbf16>, vector<8x32xf32> -> vector<8x32xf32>
    %283 = vector.broadcast %42 : vector<1x32xf32> to vector<8x32xf32>
    %284 = arith.mulf %282, %283 : vector<8x32xf32>
    %285 = arith.addf %279, %284 : vector<8x32xf32>
    %286 = vector.broadcast %1 : vector<8x1xf32> to vector<8x32xf32>
    %287 = arith.addf %285, %286 : vector<8x32xf32>
    %cst_184 = arith.constant 0.000000e+00 : f32
    %288 = vector.broadcast %cst_184 : f32 to vector<8x32xf32>
    %289 = arith.subf %288, %287 : vector<8x32xf32>
    %290 = math.exp %289 : vector<8x32xf32>
    %cst_185 = arith.constant 1.000000e+00 : f32
    %291 = vector.broadcast %cst_185 : f32 to vector<8x32xf32>
    %292 = arith.addf %291, %290 : vector<8x32xf32>
    %293 = tpu.reciprocal %292 {approx = true} : vector<8x32xf32> -> vector<8x32xf32>
    %294 = arith.mulf %287, %293 : vector<8x32xf32>
    %c0_186 = arith.constant 0 : index
    %c0_187 = arith.constant 0 : index
    %c9 = arith.constant 9 : index
    %c0_188 = arith.constant 0 : index
    %295 = vector.load %arg6[%c0_186, %c0_187, %c9, %c0_188] : memref<1x8x16x32xf32, #tpu.memory_space<vmem>>, vector<1x8x1x32xf32>
    %296 = vector.shape_cast %295 : vector<1x8x1x32xf32> to vector<8x32xf32>
    %297 = vector.shape_cast %294 : vector<8x32xf32> to vector<1x8x1x32xf32>
    tpu.vector_store %arg6[%c0_186, %c0_187, %c9, %c0_188], %297 {strides = array<i32>} : memref<1x8x16x32xf32, #tpu.memory_space<vmem>>, vector<1x8x1x32xf32>,
    %c0_189 = arith.constant 0 : index
    %c0_190 = arith.constant 0 : index
    %c5_191 = arith.constant 5 : index
    %c0_192 = arith.constant 0 : index
    %298 = vector.load %arg2[%c0_189, %c0_190, %c5_191, %c0_192] : memref<1x4x8x16xf32, #tpu.memory_space<vmem>>, vector<1x4x1x16xf32>
    %299 = vector.shape_cast %298 : vector<1x4x1x16xf32> to vector<4x16xf32>
    %300 = arith.truncf %299 : vector<4x16xf32> to vector<4x16xbf16>
    %cst_193 = arith.constant dense<0.000000e+00> : vector<4x32xf32>
    %301 = tpu.matmul %300, %0, %cst_193 {dimension_numbers = #tpu.dot_dimension_numbers<[1], [0], [0], [1], [0, 0, 1, 1], [], []>} : vector<4x16xbf16>, vector<16x32xbf16>, vector<4x32xf32> -> vector<4x32xf32>
    %302 = arith.truncf %301 : vector<4x32xf32> to vector<4x32xbf16>
    %c0_194 = arith.constant 0 : index
    %c0_195 = arith.constant 0 : index
    %c0_196 = arith.constant 0 : index
    %c0_197 = arith.constant 0 : index
    %303 = vector.load %arg3[%c0_194, %c0_195, %c0_196, %c0_197] : memref<2x2x8x4xbf16, #tpu.memory_space<vmem>>, vector<1x1x8x4xbf16>
    %304 = vector.shape_cast %303 : vector<1x1x8x4xbf16> to vector<8x4xbf16>
    %cst_198 = arith.constant dense<0.000000e+00> : vector<8x32xf32>
    %305 = tpu.matmul %304, %302, %cst_198 {dimension_numbers = #tpu.dot_dimension_numbers<[1], [0], [0], [1], [0, 0, 1, 1], [], []>} : vector<8x4xbf16>, vector<4x32xbf16>, vector<8x32xf32> -> vector<8x32xf32>
    %306 = vector.broadcast %22 : vector<1x32xf32> to vector<8x32xf32>
    %307 = arith.mulf %305, %306 : vector<8x32xf32>
    %c1_199 = arith.constant 1 : index
    %c0_200 = arith.constant 0 : index
    %c0_201 = arith.constant 0 : index
    %c0_202 = arith.constant 0 : index
    %308 = vector.load %arg3[%c1_199, %c0_200, %c0_201, %c0_202] : memref<2x2x8x4xbf16, #tpu.memory_space<vmem>>, vector<1x1x8x4xbf16>
    %309 = vector.shape_cast %308 : vector<1x1x8x4xbf16> to vector<8x4xbf16>
    %cst_203 = arith.constant dense<0.000000e+00> : vector<8x32xf32>
    %310 = tpu.matmul %309, %302, %cst_203 {dimension_numbers = #tpu.dot_dimension_numbers<[1], [0], [0], [1], [0, 0, 1, 1], [], []>} : vector<8x4xbf16>, vector<4x32xbf16>, vector<8x32xf32> -> vector<8x32xf32>
    %311 = vector.broadcast %42 : vector<1x32xf32> to vector<8x32xf32>
    %312 = arith.mulf %310, %311 : vector<8x32xf32>
    %313 = arith.addf %307, %312 : vector<8x32xf32>
    %314 = vector.broadcast %1 : vector<8x1xf32> to vector<8x32xf32>
    %315 = arith.addf %313, %314 : vector<8x32xf32>
    %cst_204 = arith.constant 0.000000e+00 : f32
    %316 = vector.broadcast %cst_204 : f32 to vector<8x32xf32>
    %317 = arith.subf %316, %315 : vector<8x32xf32>
    %318 = math.exp %317 : vector<8x32xf32>
    %cst_205 = arith.constant 1.000000e+00 : f32
    %319 = vector.broadcast %cst_205 : f32 to vector<8x32xf32>
    %320 = arith.addf %319, %318 : vector<8x32xf32>
    %321 = tpu.reciprocal %320 {approx = true} : vector<8x32xf32> -> vector<8x32xf32>
    %322 = arith.mulf %315, %321 : vector<8x32xf32>
    %c0_206 = arith.constant 0 : index
    %c0_207 = arith.constant 0 : index
    %c10 = arith.constant 10 : index
    %c0_208 = arith.constant 0 : index
    %323 = vector.load %arg6[%c0_206, %c0_207, %c10, %c0_208] : memref<1x8x16x32xf32, #tpu.memory_space<vmem>>, vector<1x8x1x32xf32>
    %324 = vector.shape_cast %323 : vector<1x8x1x32xf32> to vector<8x32xf32>
    %325 = vector.shape_cast %322 : vector<8x32xf32> to vector<1x8x1x32xf32>
    tpu.vector_store %arg6[%c0_206, %c0_207, %c10, %c0_208], %325 {strides = array<i32>} : memref<1x8x16x32xf32, #tpu.memory_space<vmem>>, vector<1x8x1x32xf32>,
    %c0_209 = arith.constant 0 : index
    %c1_210 = arith.constant 1 : index
    %c0_211 = arith.constant 0 : index
    %c0_212 = arith.constant 0 : index
    %326 = vector.load %arg3[%c0_209, %c1_210, %c0_211, %c0_212] : memref<2x2x8x4xbf16, #tpu.memory_space<vmem>>, vector<1x1x8x4xbf16>
    %327 = vector.shape_cast %326 : vector<1x1x8x4xbf16> to vector<8x4xbf16>
    %cst_213 = arith.constant dense<0.000000e+00> : vector<8x32xf32>
    %328 = tpu.matmul %327, %302, %cst_213 {dimension_numbers = #tpu.dot_dimension_numbers<[1], [0], [0], [1], [0, 0, 1, 1], [], []>} : vector<8x4xbf16>, vector<4x32xbf16>, vector<8x32xf32> -> vector<8x32xf32>
    %329 = vector.broadcast %22 : vector<1x32xf32> to vector<8x32xf32>
    %330 = arith.mulf %328, %329 : vector<8x32xf32>
    %c1_214 = arith.constant 1 : index
    %c1_215 = arith.constant 1 : index
    %c0_216 = arith.constant 0 : index
    %c0_217 = arith.constant 0 : index
    %331 = vector.load %arg3[%c1_214, %c1_215, %c0_216, %c0_217] : memref<2x2x8x4xbf16, #tpu.memory_space<vmem>>, vector<1x1x8x4xbf16>
    %332 = vector.shape_cast %331 : vector<1x1x8x4xbf16> to vector<8x4xbf16>
    %cst_218 = arith.constant dense<0.000000e+00> : vector<8x32xf32>
    %333 = tpu.matmul %332, %302, %cst_218 {dimension_numbers = #tpu.dot_dimension_numbers<[1], [0], [0], [1], [0, 0, 1, 1], [], []>} : vector<8x4xbf16>, vector<4x32xbf16>, vector<8x32xf32> -> vector<8x32xf32>
    %334 = vector.broadcast %42 : vector<1x32xf32> to vector<8x32xf32>
    %335 = arith.mulf %333, %334 : vector<8x32xf32>
    %336 = arith.addf %330, %335 : vector<8x32xf32>
    %337 = vector.broadcast %1 : vector<8x1xf32> to vector<8x32xf32>
    %338 = arith.addf %336, %337 : vector<8x32xf32>
    %cst_219 = arith.constant 0.000000e+00 : f32
    %339 = vector.broadcast %cst_219 : f32 to vector<8x32xf32>
    %340 = arith.subf %339, %338 : vector<8x32xf32>
    %341 = math.exp %340 : vector<8x32xf32>
    %cst_220 = arith.constant 1.000000e+00 : f32
    %342 = vector.broadcast %cst_220 : f32 to vector<8x32xf32>
    %343 = arith.addf %342, %341 : vector<8x32xf32>
    %344 = tpu.reciprocal %343 {approx = true} : vector<8x32xf32> -> vector<8x32xf32>
    %345 = arith.mulf %338, %344 : vector<8x32xf32>
    %c0_221 = arith.constant 0 : index
    %c0_222 = arith.constant 0 : index
    %c11 = arith.constant 11 : index
    %c0_223 = arith.constant 0 : index
    %346 = vector.load %arg6[%c0_221, %c0_222, %c11, %c0_223] : memref<1x8x16x32xf32, #tpu.memory_space<vmem>>, vector<1x8x1x32xf32>
    %347 = vector.shape_cast %346 : vector<1x8x1x32xf32> to vector<8x32xf32>
    %348 = vector.shape_cast %345 : vector<8x32xf32> to vector<1x8x1x32xf32>
    tpu.vector_store %arg6[%c0_221, %c0_222, %c11, %c0_223], %348 {strides = array<i32>} : memref<1x8x16x32xf32, #tpu.memory_space<vmem>>, vector<1x8x1x32xf32>,
    %c0_224 = arith.constant 0 : index
    %c0_225 = arith.constant 0 : index
    %c6_226 = arith.constant 6 : index
    %c0_227 = arith.constant 0 : index
    %349 = vector.load %arg2[%c0_224, %c0_225, %c6_226, %c0_227] : memref<1x4x8x16xf32, #tpu.memory_space<vmem>>, vector<1x4x1x16xf32>
    %350 = vector.shape_cast %349 : vector<1x4x1x16xf32> to vector<4x16xf32>
    %351 = arith.truncf %350 : vector<4x16xf32> to vector<4x16xbf16>
    %cst_228 = arith.constant dense<0.000000e+00> : vector<4x32xf32>
    %352 = tpu.matmul %351, %0, %cst_228 {dimension_numbers = #tpu.dot_dimension_numbers<[1], [0], [0], [1], [0, 0, 1, 1], [], []>} : vector<4x16xbf16>, vector<16x32xbf16>, vector<4x32xf32> -> vector<4x32xf32>
    %353 = arith.truncf %352 : vector<4x32xf32> to vector<4x32xbf16>
    %c0_229 = arith.constant 0 : index
    %c0_230 = arith.constant 0 : index
    %c0_231 = arith.constant 0 : index
    %c0_232 = arith.constant 0 : index
    %354 = vector.load %arg3[%c0_229, %c0_230, %c0_231, %c0_232] : memref<2x2x8x4xbf16, #tpu.memory_space<vmem>>, vector<1x1x8x4xbf16>
    %355 = vector.shape_cast %354 : vector<1x1x8x4xbf16> to vector<8x4xbf16>
    %cst_233 = arith.constant dense<0.000000e+00> : vector<8x32xf32>
    %356 = tpu.matmul %355, %353, %cst_233 {dimension_numbers = #tpu.dot_dimension_numbers<[1], [0], [0], [1], [0, 0, 1, 1], [], []>} : vector<8x4xbf16>, vector<4x32xbf16>, vector<8x32xf32> -> vector<8x32xf32>
    %357 = vector.broadcast %22 : vector<1x32xf32> to vector<8x32xf32>
    %358 = arith.mulf %356, %357 : vector<8x32xf32>
    %c1_234 = arith.constant 1 : index
    %c0_235 = arith.constant 0 : index
    %c0_236 = arith.constant 0 : index
    %c0_237 = arith.constant 0 : index
    %359 = vector.load %arg3[%c1_234, %c0_235, %c0_236, %c0_237] : memref<2x2x8x4xbf16, #tpu.memory_space<vmem>>, vector<1x1x8x4xbf16>
    %360 = vector.shape_cast %359 : vector<1x1x8x4xbf16> to vector<8x4xbf16>
    %cst_238 = arith.constant dense<0.000000e+00> : vector<8x32xf32>
    %361 = tpu.matmul %360, %353, %cst_238 {dimension_numbers = #tpu.dot_dimension_numbers<[1], [0], [0], [1], [0, 0, 1, 1], [], []>} : vector<8x4xbf16>, vector<4x32xbf16>, vector<8x32xf32> -> vector<8x32xf32>
    %362 = vector.broadcast %42 : vector<1x32xf32> to vector<8x32xf32>
    %363 = arith.mulf %361, %362 : vector<8x32xf32>
    %364 = arith.addf %358, %363 : vector<8x32xf32>
    %365 = vector.broadcast %1 : vector<8x1xf32> to vector<8x32xf32>
    %366 = arith.addf %364, %365 : vector<8x32xf32>
    %cst_239 = arith.constant 0.000000e+00 : f32
    %367 = vector.broadcast %cst_239 : f32 to vector<8x32xf32>
    %368 = arith.subf %367, %366 : vector<8x32xf32>
    %369 = math.exp %368 : vector<8x32xf32>
    %cst_240 = arith.constant 1.000000e+00 : f32
    %370 = vector.broadcast %cst_240 : f32 to vector<8x32xf32>
    %371 = arith.addf %370, %369 : vector<8x32xf32>
    %372 = tpu.reciprocal %371 {approx = true} : vector<8x32xf32> -> vector<8x32xf32>
    %373 = arith.mulf %366, %372 : vector<8x32xf32>
    %c0_241 = arith.constant 0 : index
    %c0_242 = arith.constant 0 : index
    %c12 = arith.constant 12 : index
    %c0_243 = arith.constant 0 : index
    %374 = vector.load %arg6[%c0_241, %c0_242, %c12, %c0_243] : memref<1x8x16x32xf32, #tpu.memory_space<vmem>>, vector<1x8x1x32xf32>
    %375 = vector.shape_cast %374 : vector<1x8x1x32xf32> to vector<8x32xf32>
    %376 = vector.shape_cast %373 : vector<8x32xf32> to vector<1x8x1x32xf32>
    tpu.vector_store %arg6[%c0_241, %c0_242, %c12, %c0_243], %376 {strides = array<i32>} : memref<1x8x16x32xf32, #tpu.memory_space<vmem>>, vector<1x8x1x32xf32>,
    %c0_244 = arith.constant 0 : index
    %c1_245 = arith.constant 1 : index
    %c0_246 = arith.constant 0 : index
    %c0_247 = arith.constant 0 : index
    %377 = vector.load %arg3[%c0_244, %c1_245, %c0_246, %c0_247] : memref<2x2x8x4xbf16, #tpu.memory_space<vmem>>, vector<1x1x8x4xbf16>
    %378 = vector.shape_cast %377 : vector<1x1x8x4xbf16> to vector<8x4xbf16>
    %cst_248 = arith.constant dense<0.000000e+00> : vector<8x32xf32>
    %379 = tpu.matmul %378, %353, %cst_248 {dimension_numbers = #tpu.dot_dimension_numbers<[1], [0], [0], [1], [0, 0, 1, 1], [], []>} : vector<8x4xbf16>, vector<4x32xbf16>, vector<8x32xf32> -> vector<8x32xf32>
    %380 = vector.broadcast %22 : vector<1x32xf32> to vector<8x32xf32>
    %381 = arith.mulf %379, %380 : vector<8x32xf32>
    %c1_249 = arith.constant 1 : index
    %c1_250 = arith.constant 1 : index
    %c0_251 = arith.constant 0 : index
    %c0_252 = arith.constant 0 : index
    %382 = vector.load %arg3[%c1_249, %c1_250, %c0_251, %c0_252] : memref<2x2x8x4xbf16, #tpu.memory_space<vmem>>, vector<1x1x8x4xbf16>
    %383 = vector.shape_cast %382 : vector<1x1x8x4xbf16> to vector<8x4xbf16>
    %cst_253 = arith.constant dense<0.000000e+00> : vector<8x32xf32>
    %384 = tpu.matmul %383, %353, %cst_253 {dimension_numbers = #tpu.dot_dimension_numbers<[1], [0], [0], [1], [0, 0, 1, 1], [], []>} : vector<8x4xbf16>, vector<4x32xbf16>, vector<8x32xf32> -> vector<8x32xf32>
    %385 = vector.broadcast %42 : vector<1x32xf32> to vector<8x32xf32>
    %386 = arith.mulf %384, %385 : vector<8x32xf32>
    %387 = arith.addf %381, %386 : vector<8x32xf32>
    %388 = vector.broadcast %1 : vector<8x1xf32> to vector<8x32xf32>
    %389 = arith.addf %387, %388 : vector<8x32xf32>
    %cst_254 = arith.constant 0.000000e+00 : f32
    %390 = vector.broadcast %cst_254 : f32 to vector<8x32xf32>
    %391 = arith.subf %390, %389 : vector<8x32xf32>
    %392 = math.exp %391 : vector<8x32xf32>
    %cst_255 = arith.constant 1.000000e+00 : f32
    %393 = vector.broadcast %cst_255 : f32 to vector<8x32xf32>
    %394 = arith.addf %393, %392 : vector<8x32xf32>
    %395 = tpu.reciprocal %394 {approx = true} : vector<8x32xf32> -> vector<8x32xf32>
    %396 = arith.mulf %389, %395 : vector<8x32xf32>
    %c0_256 = arith.constant 0 : index
    %c0_257 = arith.constant 0 : index
    %c13 = arith.constant 13 : index
    %c0_258 = arith.constant 0 : index
    %397 = vector.load %arg6[%c0_256, %c0_257, %c13, %c0_258] : memref<1x8x16x32xf32, #tpu.memory_space<vmem>>, vector<1x8x1x32xf32>
    %398 = vector.shape_cast %397 : vector<1x8x1x32xf32> to vector<8x32xf32>
    %399 = vector.shape_cast %396 : vector<8x32xf32> to vector<1x8x1x32xf32>
    tpu.vector_store %arg6[%c0_256, %c0_257, %c13, %c0_258], %399 {strides = array<i32>} : memref<1x8x16x32xf32, #tpu.memory_space<vmem>>, vector<1x8x1x32xf32>,
    %c0_259 = arith.constant 0 : index
    %c0_260 = arith.constant 0 : index
    %c7_261 = arith.constant 7 : index
    %c0_262 = arith.constant 0 : index
    %400 = vector.load %arg2[%c0_259, %c0_260, %c7_261, %c0_262] : memref<1x4x8x16xf32, #tpu.memory_space<vmem>>, vector<1x4x1x16xf32>
    %401 = vector.shape_cast %400 : vector<1x4x1x16xf32> to vector<4x16xf32>
    %402 = arith.truncf %401 : vector<4x16xf32> to vector<4x16xbf16>
    %cst_263 = arith.constant dense<0.000000e+00> : vector<4x32xf32>
    %403 = tpu.matmul %402, %0, %cst_263 {dimension_numbers = #tpu.dot_dimension_numbers<[1], [0], [0], [1], [0, 0, 1, 1], [], []>} : vector<4x16xbf16>, vector<16x32xbf16>, vector<4x32xf32> -> vector<4x32xf32>
    %404 = arith.truncf %403 : vector<4x32xf32> to vector<4x32xbf16>
    %c0_264 = arith.constant 0 : index
    %c0_265 = arith.constant 0 : index
    %c0_266 = arith.constant 0 : index
    %c0_267 = arith.constant 0 : index
    %405 = vector.load %arg3[%c0_264, %c0_265, %c0_266, %c0_267] : memref<2x2x8x4xbf16, #tpu.memory_space<vmem>>, vector<1x1x8x4xbf16>
    %406 = vector.shape_cast %405 : vector<1x1x8x4xbf16> to vector<8x4xbf16>
    %cst_268 = arith.constant dense<0.000000e+00> : vector<8x32xf32>
    %407 = tpu.matmul %406, %404, %cst_268 {dimension_numbers = #tpu.dot_dimension_numbers<[1], [0], [0], [1], [0, 0, 1, 1], [], []>} : vector<8x4xbf16>, vector<4x32xbf16>, vector<8x32xf32> -> vector<8x32xf32>
    %408 = vector.broadcast %22 : vector<1x32xf32> to vector<8x32xf32>
    %409 = arith.mulf %407, %408 : vector<8x32xf32>
    %c1_269 = arith.constant 1 : index
    %c0_270 = arith.constant 0 : index
    %c0_271 = arith.constant 0 : index
    %c0_272 = arith.constant 0 : index
    %410 = vector.load %arg3[%c1_269, %c0_270, %c0_271, %c0_272] : memref<2x2x8x4xbf16, #tpu.memory_space<vmem>>, vector<1x1x8x4xbf16>
    %411 = vector.shape_cast %410 : vector<1x1x8x4xbf16> to vector<8x4xbf16>
    %cst_273 = arith.constant dense<0.000000e+00> : vector<8x32xf32>
    %412 = tpu.matmul %411, %404, %cst_273 {dimension_numbers = #tpu.dot_dimension_numbers<[1], [0], [0], [1], [0, 0, 1, 1], [], []>} : vector<8x4xbf16>, vector<4x32xbf16>, vector<8x32xf32> -> vector<8x32xf32>
    %413 = vector.broadcast %42 : vector<1x32xf32> to vector<8x32xf32>
    %414 = arith.mulf %412, %413 : vector<8x32xf32>
    %415 = arith.addf %409, %414 : vector<8x32xf32>
    %416 = vector.broadcast %1 : vector<8x1xf32> to vector<8x32xf32>
    %417 = arith.addf %415, %416 : vector<8x32xf32>
    %cst_274 = arith.constant 0.000000e+00 : f32
    %418 = vector.broadcast %cst_274 : f32 to vector<8x32xf32>
    %419 = arith.subf %418, %417 : vector<8x32xf32>
    %420 = math.exp %419 : vector<8x32xf32>
    %cst_275 = arith.constant 1.000000e+00 : f32
    %421 = vector.broadcast %cst_275 : f32 to vector<8x32xf32>
    %422 = arith.addf %421, %420 : vector<8x32xf32>
    %423 = tpu.reciprocal %422 {approx = true} : vector<8x32xf32> -> vector<8x32xf32>
    %424 = arith.mulf %417, %423 : vector<8x32xf32>
    %c0_276 = arith.constant 0 : index
    %c0_277 = arith.constant 0 : index
    %c14 = arith.constant 14 : index
    %c0_278 = arith.constant 0 : index
    %425 = vector.load %arg6[%c0_276, %c0_277, %c14, %c0_278] : memref<1x8x16x32xf32, #tpu.memory_space<vmem>>, vector<1x8x1x32xf32>
    %426 = vector.shape_cast %425 : vector<1x8x1x32xf32> to vector<8x32xf32>
    %427 = vector.shape_cast %424 : vector<8x32xf32> to vector<1x8x1x32xf32>
    tpu.vector_store %arg6[%c0_276, %c0_277, %c14, %c0_278], %427 {strides = array<i32>} : memref<1x8x16x32xf32, #tpu.memory_space<vmem>>, vector<1x8x1x32xf32>,
    %c0_279 = arith.constant 0 : index
    %c1_280 = arith.constant 1 : index
    %c0_281 = arith.constant 0 : index
    %c0_282 = arith.constant 0 : index
    %428 = vector.load %arg3[%c0_279, %c1_280, %c0_281, %c0_282] : memref<2x2x8x4xbf16, #tpu.memory_space<vmem>>, vector<1x1x8x4xbf16>
    %429 = vector.shape_cast %428 : vector<1x1x8x4xbf16> to vector<8x4xbf16>
    %cst_283 = arith.constant dense<0.000000e+00> : vector<8x32xf32>
    %430 = tpu.matmul %429, %404, %cst_283 {dimension_numbers = #tpu.dot_dimension_numbers<[1], [0], [0], [1], [0, 0, 1, 1], [], []>} : vector<8x4xbf16>, vector<4x32xbf16>, vector<8x32xf32> -> vector<8x32xf32>
    %431 = vector.broadcast %22 : vector<1x32xf32> to vector<8x32xf32>
    %432 = arith.mulf %430, %431 : vector<8x32xf32>
    %c1_284 = arith.constant 1 : index
    %c1_285 = arith.constant 1 : index
    %c0_286 = arith.constant 0 : index
    %c0_287 = arith.constant 0 : index
    %433 = vector.load %arg3[%c1_284, %c1_285, %c0_286, %c0_287] : memref<2x2x8x4xbf16, #tpu.memory_space<vmem>>, vector<1x1x8x4xbf16>
    %434 = vector.shape_cast %433 : vector<1x1x8x4xbf16> to vector<8x4xbf16>
    %cst_288 = arith.constant dense<0.000000e+00> : vector<8x32xf32>
    %435 = tpu.matmul %434, %404, %cst_288 {dimension_numbers = #tpu.dot_dimension_numbers<[1], [0], [0], [1], [0, 0, 1, 1], [], []>} : vector<8x4xbf16>, vector<4x32xbf16>, vector<8x32xf32> -> vector<8x32xf32>
    %436 = vector.broadcast %42 : vector<1x32xf32> to vector<8x32xf32>
    %437 = arith.mulf %435, %436 : vector<8x32xf32>
    %438 = arith.addf %432, %437 : vector<8x32xf32>
    %439 = vector.broadcast %1 : vector<8x1xf32> to vector<8x32xf32>
    %440 = arith.addf %438, %439 : vector<8x32xf32>
    %cst_289 = arith.constant 0.000000e+00 : f32
    %441 = vector.broadcast %cst_289 : f32 to vector<8x32xf32>
    %442 = arith.subf %441, %440 : vector<8x32xf32>
    %443 = math.exp %442 : vector<8x32xf32>
    %cst_290 = arith.constant 1.000000e+00 : f32
    %444 = vector.broadcast %cst_290 : f32 to vector<8x32xf32>
    %445 = arith.addf %444, %443 : vector<8x32xf32>
    %446 = tpu.reciprocal %445 {approx = true} : vector<8x32xf32> -> vector<8x32xf32>
    %447 = arith.mulf %440, %446 : vector<8x32xf32>
    %c0_291 = arith.constant 0 : index
    %c0_292 = arith.constant 0 : index
    %c15 = arith.constant 15 : index
    %c0_293 = arith.constant 0 : index
    %448 = vector.load %arg6[%c0_291, %c0_292, %c15, %c0_293] : memref<1x8x16x32xf32, #tpu.memory_space<vmem>>, vector<1x8x1x32xf32>
    %449 = vector.shape_cast %448 : vector<1x8x1x32xf32> to vector<8x32xf32>
    %450 = vector.shape_cast %447 : vector<8x32xf32> to vector<1x8x1x32xf32>
    tpu.vector_store %arg6[%c0_291, %c0_292, %c15, %c0_293], %450 {strides = array<i32>} : memref<1x8x16x32xf32, #tpu.memory_space<vmem>>, vector<1x8x1x32xf32>,
    return
  }
  func.func @transform_0(%arg0: i32, %arg1: i32) -> (i32, i32, i32, i32) {
    %c0_i32 = arith.constant 0 : i32
    %c0_i32_0 = arith.constant 0 : i32
    %c0_i32_1 = arith.constant 0 : i32
    return %arg0, %c0_i32, %arg1, %c0_i32_0 : i32, i32, i32, i32
  }
  func.func @transform_1(%arg0: i32, %arg1: i32) -> (i32, i32, i32, i32) {
    %c0_i32 = arith.constant 0 : i32
    %c0_i32_0 = arith.constant 0 : i32
    %c0_i32_1 = arith.constant 0 : i32
    %c0_i32_2 = arith.constant 0 : i32
    %c0_i32_3 = arith.constant 0 : i32
    return %c0_i32, %c0_i32_0, %c0_i32_1, %c0_i32_2 : i32, i32, i32, i32
  }
  func.func @transform_2(%arg0: i32, %arg1: i32) -> (i32, i32) {
    %c0_i32 = arith.constant 0 : i32
    %c0_i32_0 = arith.constant 0 : i32
    %c0_i32_1 = arith.constant 0 : i32
    return %c0_i32, %c0_i32_0 : i32, i32
  }
  func.func @transform_3(%arg0: i32, %arg1: i32) -> (i32, i32) {
    %c0_i32 = arith.constant 0 : i32
    %c0_i32_0 = arith.constant 0 : i32
    %c0_i32_1 = arith.constant 0 : i32
    return %c0_i32, %c0_i32_0 : i32, i32
  }
  func.func @transform_4(%arg0: i32, %arg1: i32) -> (i32, i32, i32, i32) {
    %c0_i32 = arith.constant 0 : i32
    %c0_i32_0 = arith.constant 0 : i32
    %c0_i32_1 = arith.constant 0 : i32
    return %arg0, %c0_i32, %arg1, %c0_i32_0 : i32, i32, i32, i32
  }
}

</mosaic_0001>

<llo_original>
// kernel: conv_transpose_bn_silu.1
$region0: #{conv_transpose_bn_silu.1}
  #allocation0 [shape = 'u32[]', space=smem, size = 0x4, offset = 0x4, fixed_abs, tag = 'smem constant byte address 0x4 - core index']
  #allocation1 [shape = 'u32[144,128]{1,0:T(1,128)}', space=vmem, size = 0x12000, scoped, tag = 'internal scratch']
  #allocation5 [shape = 's32[]', space=sflag, size = 0x4, offset = 0, fixed_abs, tag = 'sflag constant byte address 0x0 - dummy sync flag']
  %s0 = inlined_call_operand.vmem [shape: f32[2,4,16,16], index: 0, kind: input, shape index: {}]
  %s1 = inlined_call_operand.vmem [shape: bf16[2,2,8,4], index: 1, kind: input, shape index: {}]
  %s2 = inlined_call_operand.vmem [shape: bf16[16,32], index: 2, kind: input, shape index: {}]
  %s3 = inlined_call_operand.vmem [shape: f32[8,1], index: 3, kind: input, shape index: {}]
  %s4 = inlined_call_operand.hbm [shape: f32[2,8,32,32], index: 4, kind: output, shape index: {}]
  %s5 = sld [smem:[#allocation0]]
  $region87: #{conv_transpose_bn_silu.1} parent=0
    _
  %s7 = ssub.s32 1, %s5
  %s8 = scalar_select 0, %s7, %s5
  $region1: #{conv_transpose_bn_silu.1} parent=0
    #allocation2 [shape = 'u8[32768]{0}', space=vmem, size = 0x8000, scoped, tag = 'input window, operand 0']
    #allocation3 [shape = 'u8[131072]{0}', space=vmem, size = 0x20000, scoped, tag = 'output window, operand 0']
    #allocation4 [shape = 's32[2]{0}', space=sflag, size = 0x8, scoped, tag = 'scoped memory for conv_transpose_bn_silu.1']
    %9 = vsyncpa [#allocation4], 0
    %s10 = scalar_lea.sflag [#allocation4], 1
    %11 = vsyncpa %s10, 0
    loop: start=0, step=1, limit=6
    $region2: #{conv_transpose_bn_silu.1} parent=1 // loop_pre_header
      _
    $region3: #{conv_transpose_bn_silu.1} parent=1 // loop_header
      %s13 = sphi 0, %s17
      %p14 = scmp.ge.s32.totalorder %s13, 6
      %s20 = sphi 0, %s32
      %s21 = sphi 0, %s28
      %s22 = sphi 0, %s20
      %s23 = sphi 0, %s21
      %s24 = sphi 0, %s22
      %s25 = sphi 0, %s23
      %s37 = sphi 0, %s39
      %s40 = sphi 0, %s37
      %s41 = sphi 0, %s40
      %s57 = sphi 0, %s41
      %s61 = sphi 0, %s61
      %s63 = sphi 0, %s61
      %s64 = sphi 0, %s63
      %s78 = sphi 0, %s64
      %s82 = sphi 0, %s82
      %s84 = sphi 0, %s82
      %s85 = sphi 0, %s84
      %s99 = sphi 0, %s85
      %s103 = sphi 0, %s103
      %s105 = sphi 0, %s103
      %s106 = sphi 0, %s105
      %s120 = sphi 0, %s106
      %s128 = sphi 0, %s130
      %s131 = sphi 0, %s128
      %s132 = sphi 0, %s131
      %s148 = sphi 0, %s132
    $region4: #{conv_transpose_bn_silu.1} parent=1 // loop_header_branch
      %16 = sbr.rel (%p14) target = $region8
    $region5: #{conv_transpose_bn_silu.1} parent=1 // loop_body
      %s18 = ssub.s32 %s13, 1
      %s19 = ssub.s32 %s13, 2
      %s26 = sadd.s32 1, %s21
      %p27 = scmp.ge.s32.totalorder %s26, 2
      %s28 = scalar_select %p27, 0, %s26
      %s29 = sadd.s32 1, %s20
      %s30 = scalar_select %p27, %s29, %s20
      %p31 = scmp.ge.s32.totalorder %s30, 2
      %s32 = scalar_select %p31, 0, %s30
      %s33 = ssub.s32 %s20, %s32
      %s34 = ssub.s32 %s21, %s28
      %s35 = sor.u32 %s33, %s34
      %p36 = scmp.eq.s32.totalorder %s35, 0
      %s38 = sadd.s32 %s37, 1
      %s39 = scalar_select %p36, %s37, %s38
      %p42 = pneg %p36
      %p43 = scmp.eq.s32.totalorder %s13, 3
      %p44 = por %p42, %p43
      %p45 = scmp.ne.s32.totalorder %s37, %s40
      %p46 = scmp.eq.s32.totalorder %s13, 0
      %p47 = por %p45, %p46
      %p48 = scmp.ne.s32.totalorder %s37, %s40
      %p49 = scmp.eq.s32.totalorder %s18, 3
      %p50 = por %p48, %p49
      %p51 = scmp.ne.s32.totalorder %s40, %s41
      %p52 = scmp.eq.s32.totalorder %s18, 0
      %p53 = por %p51, %p52
      %p54 = scmp.ne.s32.totalorder %s40, %s41
      %p55 = scmp.eq.s32.totalorder %s19, 3
      %p56 = por %p54, %p55
      %p58 = scmp.ne.s32.totalorder %s41, %s57
      %p59 = scmp.eq.s32.totalorder %s19, 0
      %p60 = por %p58, %p59
      %s62 = sadd.s32 %s61, 1
      %p65 = scmp.eq.s32.totalorder %s13, 3
      %p66 = scmp.ne.s32.totalorder %s61, %s63
      %p67 = scmp.eq.s32.totalorder %s13, 0
      %p68 = por %p66, %p67
      %p69 = scmp.ne.s32.totalorder %s61, %s63
      %p70 = scmp.eq.s32.totalorder %s18, 3
      %p71 = por %p69, %p70
      %p72 = scmp.ne.s32.totalorder %s63, %s64
      %p73 = scmp.eq.s32.totalorder %s18, 0
      %p74 = por %p72, %p73
      %p75 = scmp.ne.s32.totalorder %s63, %s64
      %p76 = scmp.eq.s32.totalorder %s19, 3
      %p77 = por %p75, %p76
      %p79 = scmp.ne.s32.totalorder %s64, %s78
      %p80 = scmp.eq.s32.totalorder %s19, 0
      %p81 = por %p79, %p80
      %s83 = sadd.s32 %s82, 1
      %p86 = scmp.eq.s32.totalorder %s13, 3
      %p87 = scmp.ne.s32.totalorder %s82, %s84
      %p88 = scmp.eq.s32.totalorder %s13, 0
      %p89 = por %p87, %p88
      %p90 = scmp.ne.s32.totalorder %s82, %s84
      %p91 = scmp.eq.s32.totalorder %s18, 3
      %p92 = por %p90, %p91
      %p93 = scmp.ne.s32.totalorder %s84, %s85
      %p94 = scmp.eq.s32.totalorder %s18, 0
      %p95 = por %p93, %p94
      %p96 = scmp.ne.s32.totalorder %s84, %s85
      %p97 = scmp.eq.s32.totalorder %s19, 3
      %p98 = por %p96, %p97
      %p100 = scmp.ne.s32.totalorder %s85, %s99
      %p101 = scmp.eq.s32.totalorder %s19, 0
      %p102 = por %p100, %p101
      %s104 = sadd.s32 %s103, 1
      %p107 = scmp.eq.s32.totalorder %s13, 3
      %p108 = scmp.ne.s32.totalorder %s103, %s105
      %p109 = scmp.eq.s32.totalorder %s13, 0
      %p110 = por %p108, %p109
      %p111 = scmp.ne.s32.totalorder %s103, %s105
      %p112 = scmp.eq.s32.totalorder %s18, 3
      %p113 = por %p111, %p112
      %p114 = scmp.ne.s32.totalorder %s105, %s106
      %p115 = scmp.eq.s32.totalorder %s18, 0
      %p116 = por %p114, %p115
      %p117 = scmp.ne.s32.totalorder %s105, %s106
      %p118 = scmp.eq.s32.totalorder %s19, 3
      %p119 = por %p117, %p118
      %p121 = scmp.ne.s32.totalorder %s106, %s120
      %p122 = scmp.eq.s32.totalorder %s19, 0
      %p123 = por %p121, %p122
      %s124 = ssub.s32 %s20, %s32
      %s125 = ssub.s32 %s21, %s28
      %s126 = sor.u32 %s124, %s125
      %p127 = scmp.eq.s32.totalorder %s126, 0
      %s129 = sadd.s32 %s128, 1
      %s130 = scalar_select %p127, %s128, %s129
      %p133 = pneg %p127
      %p134 = scmp.eq.s32.totalorder %s13, 3
      %p135 = por %p133, %p134
      %p136 = scmp.ne.s32.totalorder %s128, %s131
      %p137 = scmp.eq.s32.totalorder %s13, 0
      %p138 = por %p136, %p137
      %p139 = scmp.ne.s32.totalorder %s128, %s131
      %p140 = scmp.eq.s32.totalorder %s18, 3
      %p141 = por %p139, %p140
      %p142 = scmp.ne.s32.totalorder %s131, %s132
      %p143 = scmp.eq.s32.totalorder %s18, 0
      %p144 = por %p142, %p143
      %p145 = scmp.ne.s32.totalorder %s131, %s132
      %p146 = scmp.eq.s32.totalorder %s19, 3
      %p147 = por %p145, %p146
      %p149 = scmp.ne.s32.totalorder %s132, %s148
      %p150 = scmp.eq.s32.totalorder %s19, 0
      %p151 = por %p149, %p150
      %p152 = scmp.le.s32.totalorder 1, %s13
      %p153 = scmp.lt.s32.totalorder %s13, 5
      %p154 = pnand %p152, %p153
      %p155 = pneg %p154
      // Predicated region
      $region9: #{conv_transpose_bn_silu.1} parent=5 // pred_check
        _
      $region10: #{conv_transpose_bn_silu.1} parent=5 // pred_check_branch
        %157 = sbr.rel (%p154) target = $region12
      $region11: #{conv_transpose_bn_silu.1} parent=5 // pred_region
        %s158 = ssub.s32 %s13, 1
        // Predicated region
        $region13: #{conv_transpose_bn_silu.1} parent=11 // pred_check
          %p159 = pneg %p74
        $region14: #{conv_transpose_bn_silu.1} parent=11 // pred_check_branch
          %161 = sbr.rel (%p159) target = $region16
        $region15: #{conv_transpose_bn_silu.1} parent=11 // pred_region
          _
        $region16: #{conv_transpose_bn_silu.1} parent=11 // pred_fallthru
          _
        // Predicated region
        $region17: #{conv_transpose_bn_silu.1} parent=11 // pred_check
          %p162 = pneg %p95
        $region18: #{conv_transpose_bn_silu.1} parent=11 // pred_check_branch
          %164 = sbr.rel (%p162) target = $region20
        $region19: #{conv_transpose_bn_silu.1} parent=11 // pred_region
          _
        $region20: #{conv_transpose_bn_silu.1} parent=11 // pred_fallthru
          _
        // Predicated region
        $region21: #{conv_transpose_bn_silu.1} parent=11 // pred_check
          %p165 = pneg %p116
        $region22: #{conv_transpose_bn_silu.1} parent=11 // pred_check_branch
          %167 = sbr.rel (%p165) target = $region24
        $region23: #{conv_transpose_bn_silu.1} parent=11 // pred_region
          _
        $region24: #{conv_transpose_bn_silu.1} parent=11 // pred_fallthru
          _
      $region12: #{conv_transpose_bn_silu.1} parent=5 // pred_fallthru
        _
      %p168 = scmp.lt.s32.totalorder %s13, 4
      // Predicated region
      $region25: #{conv_transpose_bn_silu.1} parent=5 // pred_check
        %p169 = pneg %p168
      $region26: #{conv_transpose_bn_silu.1} parent=5 // pred_check_branch
        %171 = sbr.rel (%p169) target = $region28
      $region27: #{conv_transpose_bn_silu.1} parent=5 // pred_region
        // Predicated region
        $region29: #{conv_transpose_bn_silu.1} parent=27 // pred_check
          %p172 = pneg %p47
        $region30: #{conv_transpose_bn_silu.1} parent=27 // pred_check_branch
          %174 = sbr.rel (%p172) target = $region32
        $region31: #{conv_transpose_bn_silu.1} parent=27 // pred_region
          %s175 = sand.u32 %s37, 1
          %s176 = sand.u32 %s37, 1
          %s177 = smul.addr %s176, 32
          %s178 = scalar_lea.vmem [#allocation2], %s177
          %s179 = smul.addr %s20, 8
          %s180 = sadd.s32 %s21, %s179
          %s181 = smul.addr %s180, 8
          %s182 = scalar_lea.vmem %s0, %s181
          // Predicated region
          $region33: #{conv_transpose_bn_silu.1} parent=31 // pred_check
            _
          $region34: #{conv_transpose_bn_silu.1} parent=31 // pred_check_branch
            %184 = sbr.rel (0) target = $region36
          $region35: #{conv_transpose_bn_silu.1} parent=31 // pred_region
            // Predicated region
            $region37: #{conv_transpose_bn_silu.1} parent=35 // pred_check
              _
            $region38: #{conv_transpose_bn_silu.1} parent=35 // pred_check_branch
              %186 = sbr.rel (0) target = $region40
            $region39: #{conv_transpose_bn_silu.1} parent=35 // pred_region
              // Predicated region
              $region52: #{conv_transpose_bn_silu.1} parent=39 // pred_check
                _
              $region53: #{conv_transpose_bn_silu.1} parent=39 // pred_check_branch
                %207 = sbr.rel (0) target = $region55
              $region54: #{conv_transpose_bn_silu.1} parent=39 // pred_region
                loop: start=0, step=1, limit=1
                $region56: #{conv_transpose_bn_silu.1} parent=54 // loop_pre_header
                  _
                $region57: #{conv_transpose_bn_silu.1} parent=54 // loop_header
                  %s209 = sphi 0, %s213
                  %p210 = scmp.ge.s32.totalorder %s209, 1
                  %s214 = sphi %s182, %s182
                  %s215 = sphi %s178, %s178
                $region58: #{conv_transpose_bn_silu.1} parent=54 // loop_header_branch
                  %212 = sbr.rel (%p210) target = $region62
                $region59: #{conv_transpose_bn_silu.1} parent=54 // loop_body
                  %v216 = vld [vmem:[%s214] sm:$0xff]
                  %217 = vst [vmem:[%s215] sm:$0xff] %v216
                  %v218 = vld [vmem:[%s214 + $0x10] sm:$0xff]
                  %219 = vst [vmem:[%s215 + $0x8] sm:$0xff] %v218
                  %v220 = vld [vmem:[%s214 + $0x20] sm:$0xff]
                  %221 = vst [vmem:[%s215 + $0x10] sm:$0xff] %v220
                  %v222 = vld [vmem:[%s214 + $0x30] sm:$0xff]
                  %223 = vst [vmem:[%s215 + $0x18] sm:$0xff] %v222
                $region60: #{conv_transpose_bn_silu.1} parent=54 // loop_footer
                  %s213 = sadd.s32 1, %s209
                $region61: #{conv_transpose_bn_silu.1} parent=54 // loop_footer_branch
                  %208 = sbr.rel target = $region57
                $region62: #{conv_transpose_bn_silu.1} parent=54 // loop_exit
                  _
              $region55: #{conv_transpose_bn_silu.1} parent=39 // pred_fallthru
                _
              // Predicated region
              $region63: #{conv_transpose_bn_silu.1} parent=39 // pred_check
                _
              $region64: #{conv_transpose_bn_silu.1} parent=39 // pred_check_branch
                %225 = sbr.rel target = $region66
              $region65: #{conv_transpose_bn_silu.1} parent=39 // pred_region
                _
              $region66: #{conv_transpose_bn_silu.1} parent=39 // pred_fallthru
                _
            $region40: #{conv_transpose_bn_silu.1} parent=35 // pred_fallthru
              _
            // Predicated region
            $region41: #{conv_transpose_bn_silu.1} parent=35 // pred_check
              _
            $region42: #{conv_transpose_bn_silu.1} parent=35 // pred_check_branch
              %188 = sbr.rel target = $region44
            $region43: #{conv_transpose_bn_silu.1} parent=35 // pred_region
              loop: start=0, step=1, limit=1
              $region45: #{conv_transpose_bn_silu.1} parent=43 // loop_pre_header
                _
              $region46: #{conv_transpose_bn_silu.1} parent=43 // loop_header
                %s191 = sphi 0, %s195
                %p192 = scmp.ge.s32.totalorder %s191, 1
                %s196 = sphi %s182, %s182
                %s197 = sphi %s178, %s178
              $region47: #{conv_transpose_bn_silu.1} parent=43 // loop_header_branch
                %194 = sbr.rel (%p192) target = $region51
              $region48: #{conv_transpose_bn_silu.1} parent=43 // loop_body
                %v198 = vld [vmem:[%s196] sm:$0xff]
                %199 = vst [vmem:[%s197] sm:$0xff] %v198
                %v200 = vld [vmem:[%s196 + $0x10] sm:$0xff]
                %201 = vst [vmem:[%s197 + $0x8] sm:$0xff] %v200
                %v202 = vld [vmem:[%s196 + $0x20] sm:$0xff]
                %203 = vst [vmem:[%s197 + $0x10] sm:$0xff] %v202
                %v204 = vld [vmem:[%s196 + $0x30] sm:$0xff]
                %205 = vst [vmem:[%s197 + $0x18] sm:$0xff] %v204
              $region49: #{conv_transpose_bn_silu.1} parent=43 // loop_footer
                %s195 = sadd.s32 1, %s191
              $region50: #{conv_transpose_bn_silu.1} parent=43 // loop_footer_branch
                %190 = sbr.rel target = $region46
              $region51: #{conv_transpose_bn_silu.1} parent=43 // loop_exit
                _
            $region44: #{conv_transpose_bn_silu.1} parent=35 // pred_fallthru
              _
          $region36: #{conv_transpose_bn_silu.1} parent=31 // pred_fallthru
            _
          %226 = vnop
        $region32: #{conv_transpose_bn_silu.1} parent=27 // pred_fallthru
          _
      $region28: #{conv_transpose_bn_silu.1} parent=5 // pred_fallthru
        _
      %p227 = scmp.le.s32.totalorder 1, %s13
      %p228 = scmp.lt.s32.totalorder %s13, 5
      %p229 = pnand %p227, %p228
      %p230 = pneg %p229
      // Predicated region
      $region67: #{conv_transpose_bn_silu.1} parent=5 // pred_check
        _
      $region68: #{conv_transpose_bn_silu.1} parent=5 // pred_check_branch
        %232 = sbr.rel (%p229) target = $region70
      $region69: #{conv_transpose_bn_silu.1} parent=5 // pred_region
        %s233 = ssub.s32 %s13, 1
        %s234 = sand.u32 %s40, 1
        %s235 = sand.u32 %s40, 1
        %s236 = smul.addr %s235, 32
        %s237 = scalar_lea.vmem [#allocation2], %s236
        // Predicated region
        $region71: #{conv_transpose_bn_silu.1} parent=69 // pred_check
          %p238 = pneg %p53
        $region72: #{conv_transpose_bn_silu.1} parent=69 // pred_check_branch
          %240 = sbr.rel (%p238) target = $region74
        $region73: #{conv_transpose_bn_silu.1} parent=69 // pred_region
          _
        $region74: #{conv_transpose_bn_silu.1} parent=69 // pred_fallthru
          _
        %s241 = sand.u32 %s40, 1
        %s242 = sand.u32 %s40, 1
        %s243 = smul.addr %s242, 32
        %s244 = scalar_lea.vmem [#allocation2], %s243
        %p245 = pneg %p53
        %p246 = pneg %p50
        %p247 = pneg %p74
        %p248 = pneg %p71
        %p249 = pneg %p95
        %p250 = pneg %p92
        %p251 = pneg %p116
        %p252 = pneg %p113
        %p253 = pneg %p144
        %p254 = pneg %p141
        %s255 = sand.u32 %s131, 1
        %s256 = scalar_lea.sflag [#allocation4], %s255
        %s257 = sand.u32 %s131, 1
        %s258 = smul.addr %s257, 128
        %s259 = scalar_lea.vmem [#allocation3], %s258
        %s260 = smul.u32 2, %s23
        %v262 = vld [vmem:[%s2] sm:$0xf]
        %v263 = vld [vmem:[%s2 + $0x4] sm:$0xf]
        %v264 = vld [vmem:[%s3] sm:$0xff]
        %v265 = vlaneseq
        %v266 = vand.u32 %v265, 127
        %vm267 = vcmp.lt.s32.totalorder %v266, 0
        %v268 = vsub.s32 0, %v266
        %v269 = vsel %vm267, %v268, %v266
        %v270 = vshrl.u32 %v269, 1
        %v271 = vand.u32 %v269, 1
        %v272 = vsub.s32 0, %v271
        %v273 = vsel %vm267, %v272, %v271
        %vm274 = vcmp.ne.s32.totalorder %v273, 0
        %vm275 = vcmp.lt.s32.totalorder %v273, 0
        %vm276 = vmand %vm275, %vm274
        %v277 = vadd.s32 %v273, 2
        %v278 = vsel %vm276, %v277, %v273
        %vm279 = vcmp.eq.s32.totalorder %v278, 0
        %v280 = vsel %vm279, 1, 0
        %v281 = vcvt.s32.f32 %v280
        %vm282 = vcmp.eq.s32.totalorder %v278, 1
        %v283 = vsel %vm282, 1, 0
        %v284 = vcvt.s32.f32 %v283
        %v285 = vld [vmem:[%s237] sm:$0x1]
        %v286 = vld [vmem:[%s237 + $0x8] sm:$0x1]
        %v287 = vld [vmem:[%s237 + $0x10] sm:$0x1]
        %v288 = vld [vmem:[%s237 + $0x18] sm:$0x1]
        %v289 = vpack.c.bf16 %v285, %v285
        %v290 = vpack.c.bf16 %v286, %v286
        %v291 = vpack.c.bf16 %v287, %v287
        %v292 = vpack.c.bf16 %v288, %v288
        %v297 = vunpack.c.l.b16 %v289
        %v298 = vunpack.c.l.b16 %v290
        %v299 = vunpack.c.l.b16 %v291
        %v300 = vunpack.c.l.b16 %v292
        %v301 = vrot.slane %v298, 7
        %vm302 = vcmask 1041409
        %v303 = vsel %vm302, %v301, %v297
        %v304 = vrot.slane %v299, 6
        %vm305 = vcmask 1042434
        %v306 = vsel %vm305, %v304, %v303
        %v307 = vrot.slane %v300, 5
        %vm308 = vcmask 1043459
        %v309 = vsel %vm308, %v307, %v306
        %v310 = vpack.c.b16 %v309, %v309
        %v313 = vunpack.c.l.b16 %v262
        %v314 = vunpack.c.l.b16 %v263
        %v315 = vpack.c.b16 %v314, %v313
        %vm317 = vcmask 130048
        %v319 = vsel %vm317, %v310, 0
        %321 = vmatprep.subr.bf16.mxu0 0
        %322 = vmatpush1.bf16.msra.mxu0 %v315
        %323 = vmatprep.subr.bf16.mxu0 0
        %324 = vmatpush1.bf16.msra.mxu0 0
        %325 = vmatprep.subr.bf16.mxu0 0
        %326 = vmatpush1.bf16.msra.mxu0 0
        %327 = vmatprep.subr.bf16.mxu0 0
        %328 = vmatpush1.bf16.msra.mxu0 0
        %329 = vmatprep.subr.bf16.mxu0 0
        %330 = vmatpush1.bf16.msra.mxu0 0
        %331 = vmatprep.subr.bf16.mxu0 0
        %332 = vmatpush1.bf16.msra.mxu0 0
        %333 = vmatprep.subr.bf16.mxu0 0
        %334 = vmatpush1.bf16.msra.mxu0 0
        %335 = vmatprep.subr.bf16.mxu0 0
        %336 = vmatpush1.bf16.msra.mxu0 0
        %337 = vmatprep.subr.bf16.mxu0 0
        %338 = vmatpush1.bf16.msra.mxu0 0
        %339 = vmatprep.subr.bf16.mxu0 0
        %340 = vmatpush1.bf16.msra.mxu0 0
        %341 = vmatprep.subr.bf16.mxu0 0
        %342 = vmatpush1.bf16.msra.mxu0 0
        %343 = vmatprep.subr.bf16.mxu0 0
        %344 = vmatpush1.bf16.msra.mxu0 0
        %345 = vmatprep.subr.bf16.mxu0 0
        %346 = vmatpush1.bf16.msra.mxu0 0
        %347 = vmatprep.subr.bf16.mxu0 0
        %348 = vmatpush1.bf16.msra.mxu0 0
        %349 = vmatprep.subr.bf16.mxu0 0
        %350 = vmatpush1.bf16.msra.mxu0 0
        %351 = vmatprep.subr.bf16.mxu0 0
        %352 = vmatpush1.bf16.msra.mxu0 0
        %353 = vmatprep.mubr.bf16.mxu0 0
        %354 = vmatmul.mubr.bf16.gmra.mrb[0].mxu0 %v319
        %v355 = vpop.f32.mrb[0].mxu0
        %v356 = vadd.f32 0.0, %v355
        %v357 = vpop.f32.mrb[0].mxu0
        %v358 = vpop.f32.mrb[0].mxu0
        %v359 = vpop.f32.mrb[0].mxu0
        %360 = vdwg.mxu0
        %v361 = vpack.c.bf16 %v356, %v356
        %v362 = vld [vmem:[%s1] sm:$0xf]
        %vm363 = vcmask 31744
        %v365 = vsel %vm363, %v362, 0
        %vm367 = vcmask 1041408
        %v369 = vsel %vm367, %v361, 0
        %371 = vmatprep.subr.bf16.mxu0 0
        %372 = vmatpush1.bf16.msra.mxu0 %v369
        %373 = vmatprep.subr.bf16.mxu0 0
        %374 = vmatpush1.bf16.msra.mxu0 0
        %375 = vmatprep.subr.bf16.mxu0 0
        %376 = vmatpush1.bf16.msra.mxu0 0
        %377 = vmatprep.subr.bf16.mxu0 0
        %378 = vmatpush1.bf16.msra.mxu0 0
        %379 = vmatprep.subr.bf16.mxu0 0
        %380 = vmatpush1.bf16.msra.mxu0 0
        %381 = vmatprep.subr.bf16.mxu0 0
        %382 = vmatpush1.bf16.msra.mxu0 0
        %383 = vmatprep.subr.bf16.mxu0 0
        %384 = vmatpush1.bf16.msra.mxu0 0
        %385 = vmatprep.subr.bf16.mxu0 0
        %386 = vmatpush1.bf16.msra.mxu0 0
        %387 = vmatprep.subr.bf16.mxu0 0
        %388 = vmatpush1.bf16.msra.mxu0 0
        %389 = vmatprep.subr.bf16.mxu0 0
        %390 = vmatpush1.bf16.msra.mxu0 0
        %391 = vmatprep.subr.bf16.mxu0 0
        %392 = vmatpush1.bf16.msra.mxu0 0
        %393 = vmatprep.subr.bf16.mxu0 0
        %394 = vmatpush1.bf16.msra.mxu0 0
        %395 = vmatprep.subr.bf16.mxu0 0
        %396 = vmatpush1.bf16.msra.mxu0 0
        %397 = vmatprep.subr.bf16.mxu0 0
        %398 = vmatpush1.bf16.msra.mxu0 0
        %399 = vmatprep.subr.bf16.mxu0 0
        %400 = vmatpush1.bf16.msra.mxu0 0
        %401 = vmatprep.subr.bf16.mxu0 0
        %402 = vmatpush1.bf16.msra.mxu0 0
        %403 = vmatprep.mubr.bf16.mxu0 0
        %404 = vmatmul.mubr.bf16.gmra.mrb[0].mxu0 %v365
        %v405 = vpop.f32.mrb[0].mxu0
        %v406 = vadd.f32 0.0, %v405
        %v407 = vpop.f32.mrb[0].mxu0
        %v408 = vpop.f32.mrb[0].mxu0
        %v409 = vpop.f32.mrb[0].mxu0
        %410 = vdwg.mxu0
        %v411 = vmul.f32 %v406, %v281
        %s412 = scalar_lea.vmem %s1, 8
        %v413 = vld [vmem:[%s412] sm:$0xf]
        %v415 = vsel %vm363, %v413, 0
        %417 = vmatprep.subr.bf16.mxu0 0
        %418 = vmatpush1.bf16.msra.mxu0 %v369
        %419 = vmatprep.subr.bf16.mxu0 0
        %420 = vmatpush1.bf16.msra.mxu0 0
        %421 = vmatprep.subr.bf16.mxu0 0
        %422 = vmatpush1.bf16.msra.mxu0 0
        %423 = vmatprep.subr.bf16.mxu0 0
        %424 = vmatpush1.bf16.msra.mxu0 0
        %425 = vmatprep.subr.bf16.mxu0 0
        %426 = vmatpush1.bf16.msra.mxu0 0
        %427 = vmatprep.subr.bf16.mxu0 0
        %428 = vmatpush1.bf16.msra.mxu0 0
        %429 = vmatprep.subr.bf16.mxu0 0
        %430 = vmatpush1.bf16.msra.mxu0 0
        %431 = vmatprep.subr.bf16.mxu0 0
        %432 = vmatpush1.bf16.msra.mxu0 0
        %433 = vmatprep.subr.bf16.mxu0 0
        %434 = vmatpush1.bf16.msra.mxu0 0
        %435 = vmatprep.subr.bf16.mxu0 0
        %436 = vmatpush1.bf16.msra.mxu0 0
        %437 = vmatprep.subr.bf16.mxu0 0
        %438 = vmatpush1.bf16.msra.mxu0 0
        %439 = vmatprep.subr.bf16.mxu0 0
        %440 = vmatpush1.bf16.msra.mxu0 0
        %441 = vmatprep.subr.bf16.mxu0 0
        %442 = vmatpush1.bf16.msra.mxu0 0
        %443 = vmatprep.subr.bf16.mxu0 0
        %444 = vmatpush1.bf16.msra.mxu0 0
        %445 = vmatprep.subr.bf16.mxu0 0
        %446 = vmatpush1.bf16.msra.mxu0 0
        %447 = vmatprep.subr.bf16.mxu0 0
        %448 = vmatpush1.bf16.msra.mxu0 0
        %449 = vmatprep.mubr.bf16.mxu0 0
        %450 = vmatmul.mubr.bf16.gmra.mrb[0].mxu0 %v415
        %v451 = vpop.f32.mrb[0].mxu0
        %v452 = vadd.f32 0.0, %v451
        %v453 = vpop.f32.mrb[0].mxu0
        %v454 = vpop.f32.mrb[0].mxu0
        %v455 = vpop.f32.mrb[0].mxu0
        %456 = vdwg.mxu0
        %v457 = vmul.f32 %v452, %v284
        %v458 = vadd.f32 %v411, %v457
        %460 = vset.pattern.permute.xlu0 0
        %461 = vperm.xlu0 %460, %v264
        %v462 = vpop.permute.xlu0 %461
        %v464 = vadd.f32 %v458, %v462
        %v465 = vsub.f32 0.0, %v464
        %v466 = vmul.f32 %v465, 1.442695
        %v467 = vpow.pop %v466
        %v468 = vadd.f32 %v467, 1.0
        %v469 = vrcp.pop %v468
        %v470 = vmul.f32 %v464, %v469
        %v472 = vcombine.high %v470, %v470
        %v474 = vunpack.c.l.s4 1966171168
        %v475 = vunpack.c.0.s8 %v474
        %v476 = vlaneseq
        %v477 = vshrl.u32 %v476, 7
        %v478 = vsub.s32 %v475, %v477
        %v479 = vrot.slane %v470, %v478
        %v481 = vunpack.c.l.s4 1966171168
        %v482 = vunpack.c.0.s8 %v481
        %v483 = vlaneseq
        %v484 = vshrl.u32 %v483, 7
        %v485 = vsub.s32 %v482, %v484
        %v486 = vrot.slane %v472, %v485
        %v487 = vcombine.high %v479, %v479
        %v488 = vcombine.high %v486, %v486
        %v490 = vunpack.c.l.s4 1966171168
        %v491 = vunpack.c.0.s8 %v490
        %v492 = vlaneseq
        %v493 = vshrl.u32 %v492, 7
        %v494 = vsub.s32 %v491, %v493
        %v495 = vrot.slane %v479, %v494
        %v497 = vunpack.c.l.s4 1966171168
        %v498 = vunpack.c.0.s8 %v497
        %v499 = vlaneseq
        %v500 = vshrl.u32 %v499, 7
        %v501 = vsub.s32 %v498, %v500
        %v502 = vrot.slane %v486, %v501
        %v504 = vunpack.c.l.s4 1966171168
        %v505 = vunpack.c.0.s8 %v504
        %v506 = vlaneseq
        %v507 = vshrl.u32 %v506, 7
        %v508 = vsub.s32 %v505, %v507
        %v509 = vrot.slane %v487, %v508
        %v511 = vunpack.c.l.s4 1966171168
        %v512 = vunpack.c.0.s8 %v511
        %v513 = vlaneseq
        %v514 = vshrl.u32 %v513, 7
        %v515 = vsub.s32 %v512, %v514
        %v516 = vrot.slane %v488, %v515
        %v517 = vcombine.high %v495, %v495
        %v518 = vcombine.high %v502, %v502
        %v519 = vcombine.high %v509, %v509
        %v520 = vcombine.high %v516, %v516
        %vm529 = vcmask 253952
        %530 = vst.msk [vmem:[%s259] sm:$0x1] %vm529, %v495
        %531 = vst.msk [vmem:[%s259 + $0x10] sm:$0x1] %vm529, %v509
        %532 = vst.msk [vmem:[%s259 + $0x20] sm:$0x1] %vm529, %v517
        %533 = vst.msk [vmem:[%s259 + $0x30] sm:$0x1] %vm529, %v519
        %534 = vst.msk [vmem:[%s259 + $0x40] sm:$0x1] %vm529, %v502
        %535 = vst.msk [vmem:[%s259 + $0x50] sm:$0x1] %vm529, %v516
        %536 = vst.msk [vmem:[%s259 + $0x60] sm:$0x1] %vm529, %v518
        %537 = vst.msk [vmem:[%s259 + $0x70] sm:$0x1] %vm529, %v520
        %s538 = scalar_lea.vmem %s1, 4
        %v539 = vld [vmem:[%s538] sm:$0xf]
        %v541 = vsel %vm363, %v539, 0
        %543 = vmatprep.subr.bf16.mxu0 0
        %544 = vmatpush1.bf16.msra.mxu0 %v369
        %545 = vmatprep.subr.bf16.mxu0 0
        %546 = vmatpush1.bf16.msra.mxu0 0
        %547 = vmatprep.subr.bf16.mxu0 0
        %548 = vmatpush1.bf16.msra.mxu0 0
        %549 = vmatprep.subr.bf16.mxu0 0
        %550 = vmatpush1.bf16.msra.mxu0 0
        %551 = vmatprep.subr.bf16.mxu0 0
        %552 = vmatpush1.bf16.msra.mxu0 0
        %553 = vmatprep.subr.bf16.mxu0 0
        %554 = vmatpush1.bf16.msra.mxu0 0
        %555 = vmatprep.subr.bf16.mxu0 0
        %556 = vmatpush1.bf16.msra.mxu0 0
        %557 = vmatprep.subr.bf16.mxu0 0
        %558 = vmatpush1.bf16.msra.mxu0 0
        %559 = vmatprep.subr.bf16.mxu0 0
        %560 = vmatpush1.bf16.msra.mxu0 0
        %561 = vmatprep.subr.bf16.mxu0 0
        %562 = vmatpush1.bf16.msra.mxu0 0
        %563 = vmatprep.subr.bf16.mxu0 0
        %564 = vmatpush1.bf16.msra.mxu0 0
        %565 = vmatprep.subr.bf16.mxu0 0
        %566 = vmatpush1.bf16.msra.mxu0 0
        %567 = vmatprep.subr.bf16.mxu0 0
        %568 = vmatpush1.bf16.msra.mxu0 0
        %569 = vmatprep.subr.bf16.mxu0 0
        %570 = vmatpush1.bf16.msra.mxu0 0
        %571 = vmatprep.subr.bf16.mxu0 0
        %572 = vmatpush1.bf16.msra.mxu0 0
        %573 = vmatprep.subr.bf16.mxu0 0
        %574 = vmatpush1.bf16.msra.mxu0 0
        %575 = vmatprep.mubr.bf16.mxu0 0
        %576 = vmatmul.mubr.bf16.gmra.mrb[0].mxu0 %v541
        %v577 = vpop.f32.mrb[0].mxu0
        %v578 = vadd.f32 0.0, %v577
        %v579 = vpop.f32.mrb[0].mxu0
        %v580 = vpop.f32.mrb[0].mxu0
        %v581 = vpop.f32.mrb[0].mxu0
        %582 = vdwg.mxu0
        %v583 = vmul.f32 %v578, %v281
        %s584 = scalar_lea.vmem %s1, 12
        %v585 = vld [vmem:[%s584] sm:$0xf]
        %v587 = vsel %vm363, %v585, 0
        %589 = vmatprep.subr.bf16.mxu0 0
        %590 = vmatpush1.bf16.msra.mxu0 %v369
        %591 = vmatprep.subr.bf16.mxu0 0
        %592 = vmatpush1.bf16.msra.mxu0 0
        %593 = vmatprep.subr.bf16.mxu0 0
        %594 = vmatpush1.bf16.msra.mxu0 0
        %595 = vmatprep.subr.bf16.mxu0 0
        %596 = vmatpush1.bf16.msra.mxu0 0
        %597 = vmatprep.subr.bf16.mxu0 0
        %598 = vmatpush1.bf16.msra.mxu0 0
        %599 = vmatprep.subr.bf16.mxu0 0
        %600 = vmatpush1.bf16.msra.mxu0 0
        %601 = vmatprep.subr.bf16.mxu0 0
        %602 = vmatpush1.bf16.msra.mxu0 0
        %603 = vmatprep.subr.bf16.mxu0 0
        %604 = vmatpush1.bf16.msra.mxu0 0
        %605 = vmatprep.subr.bf16.mxu0 0
        %606 = vmatpush1.bf16.msra.mxu0 0
        %607 = vmatprep.subr.bf16.mxu0 0
        %608 = vmatpush1.bf16.msra.mxu0 0
        %609 = vmatprep.subr.bf16.mxu0 0
        %610 = vmatpush1.bf16.msra.mxu0 0
        %611 = vmatprep.subr.bf16.mxu0 0
        %612 = vmatpush1.bf16.msra.mxu0 0
        %613 = vmatprep.subr.bf16.mxu0 0
        %614 = vmatpush1.bf16.msra.mxu0 0
        %615 = vmatprep.subr.bf16.mxu0 0
        %616 = vmatpush1.bf16.msra.mxu0 0
        %617 = vmatprep.subr.bf16.mxu0 0
        %618 = vmatpush1.bf16.msra.mxu0 0
        %619 = vmatprep.subr.bf16.mxu0 0
        %620 = vmatpush1.bf16.msra.mxu0 0
        %621 = vmatprep.mubr.bf16.mxu0 0
        %622 = vmatmul.mubr.bf16.gmra.mrb[0].mxu0 %v587
        %v623 = vpop.f32.mrb[0].mxu0
        %v624 = vadd.f32 0.0, %v623
        %v625 = vpop.f32.mrb[0].mxu0
        %v626 = vpop.f32.mrb[0].mxu0
        %v627 = vpop.f32.mrb[0].mxu0
        %628 = vdwg.mxu0
        %v629 = vmul.f32 %v624, %v284
        %v630 = vadd.f32 %v583, %v629
        %v631 = vadd.f32 %v630, %v462
        %v632 = vsub.f32 0.0, %v631
        %v633 = vmul.f32 %v632, 1.442695
        %v634 = vpow.pop %v633
        %v635 = vadd.f32 %v634, 1.0
        %v636 = vrcp.pop %v635
        %v637 = vmul.f32 %v631, %v636
        %v639 = vcombine.high %v637, %v637
        %v641 = vunpack.c.l.s4 1966171168
        %v642 = vunpack.c.0.s8 %v641
        %v643 = vlaneseq
        %v644 = vshrl.u32 %v643, 7
        %v645 = vsub.s32 %v642, %v644
        %v646 = vrot.slane %v637, %v645
        %v648 = vunpack.c.l.s4 1966171168
        %v649 = vunpack.c.0.s8 %v648
        %v650 = vlaneseq
        %v651 = vshrl.u32 %v650, 7
        %v652 = vsub.s32 %v649, %v651
        %v653 = vrot.slane %v639, %v652
        %v654 = vcombine.high %v646, %v646
        %v655 = vcombine.high %v653, %v653
        %v657 = vunpack.c.l.s4 1966171168
        %v658 = vunpack.c.0.s8 %v657
        %v659 = vlaneseq
        %v660 = vshrl.u32 %v659, 7
        %v661 = vsub.s32 %v658, %v660
        %v662 = vrot.slane %v646, %v661
        %v664 = vunpack.c.l.s4 1966171168
        %v665 = vunpack.c.0.s8 %v664
        %v666 = vlaneseq
        %v667 = vshrl.u32 %v666, 7
        %v668 = vsub.s32 %v665, %v667
        %v669 = vrot.slane %v653, %v668
        %v671 = vunpack.c.l.s4 1966171168
        %v672 = vunpack.c.0.s8 %v671
        %v673 = vlaneseq
        %v674 = vshrl.u32 %v673, 7
        %v675 = vsub.s32 %v672, %v674
        %v676 = vrot.slane %v654, %v675
        %v678 = vunpack.c.l.s4 1966171168
        %v679 = vunpack.c.0.s8 %v678
        %v680 = vlaneseq
        %v681 = vshrl.u32 %v680, 7
        %v682 = vsub.s32 %v679, %v681
        %v683 = vrot.slane %v655, %v682
        %v684 = vcombine.high %v662, %v662
        %v685 = vcombine.high %v669, %v669
        %v686 = vcombine.high %v676, %v676
        %v687 = vcombine.high %v683, %v683
        %696 = vst.msk [vmem:[%s259 + $0x1] sm:$0x1] %vm529, %v662
        %697 = vst.msk [vmem:[%s259 + $0x11] sm:$0x1] %vm529, %v676
        %698 = vst.msk [vmem:[%s259 + $0x21] sm:$0x1] %vm529, %v684
        %699 = vst.msk [vmem:[%s259 + $0x31] sm:$0x1] %vm529, %v686
        %700 = vst.msk [vmem:[%s259 + $0x41] sm:$0x1] %vm529, %v669
        %701 = vst.msk [vmem:[%s259 + $0x51] sm:$0x1] %vm529, %v683
        %702 = vst.msk [vmem:[%s259 + $0x61] sm:$0x1] %vm529, %v685
        %703 = vst.msk [vmem:[%s259 + $0x71] sm:$0x1] %vm529, %v687
        %v704 = vld [vmem:[%s237 + $0x1] sm:$0x1]
        %v705 = vld [vmem:[%s237 + $0x9] sm:$0x1]
        %v706 = vld [vmem:[%s237 + $0x11] sm:$0x1]
        %v707 = vld [vmem:[%s237 + $0x19] sm:$0x1]
        %v708 = vpack.c.bf16 %v704, %v704
        %v709 = vpack.c.bf16 %v705, %v705
        %v710 = vpack.c.bf16 %v706, %v706
        %v711 = vpack.c.bf16 %v707, %v707
        %v716 = vunpack.c.l.b16 %v708
        %v717 = vunpack.c.l.b16 %v709
        %v718 = vunpack.c.l.b16 %v710
        %v719 = vunpack.c.l.b16 %v711
        %v720 = vrot.slane %v717, 7
        %v721 = vsel %vm302, %v720, %v716
        %v722 = vrot.slane %v718, 6
        %v723 = vsel %vm305, %v722, %v721
        %v724 = vrot.slane %v719, 5
        %v725 = vsel %vm308, %v724, %v723
        %v726 = vpack.c.b16 %v725, %v725
        %v728 = vsel %vm317, %v726, 0
        %730 = vmatprep.subr.bf16.mxu0 0
        %731 = vmatpush1.bf16.msra.mxu0 %v315
        %732 = vmatprep.subr.bf16.mxu0 0
        %733 = vmatpush1.bf16.msra.mxu0 0
        %734 = vmatprep.subr.bf16.mxu0 0
        %735 = vmatpush1.bf16.msra.mxu0 0
        %736 = vmatprep.subr.bf16.mxu0 0
        %737 = vmatpush1.bf16.msra.mxu0 0
        %738 = vmatprep.subr.bf16.mxu0 0
        %739 = vmatpush1.bf16.msra.mxu0 0
        %740 = vmatprep.subr.bf16.mxu0 0
        %741 = vmatpush1.bf16.msra.mxu0 0
        %742 = vmatprep.subr.bf16.mxu0 0
        %743 = vmatpush1.bf16.msra.mxu0 0
        %744 = vmatprep.subr.bf16.mxu0 0
        %745 = vmatpush1.bf16.msra.mxu0 0
        %746 = vmatprep.subr.bf16.mxu0 0
        %747 = vmatpush1.bf16.msra.mxu0 0
        %748 = vmatprep.subr.bf16.mxu0 0
        %749 = vmatpush1.bf16.msra.mxu0 0
        %750 = vmatprep.subr.bf16.mxu0 0
        %751 = vmatpush1.bf16.msra.mxu0 0
        %752 = vmatprep.subr.bf16.mxu0 0
        %753 = vmatpush1.bf16.msra.mxu0 0
        %754 = vmatprep.subr.bf16.mxu0 0
        %755 = vmatpush1.bf16.msra.mxu0 0
        %756 = vmatprep.subr.bf16.mxu0 0
        %757 = vmatpush1.bf16.msra.mxu0 0
        %758 = vmatprep.subr.bf16.mxu0 0
        %759 = vmatpush1.bf16.msra.mxu0 0
        %760 = vmatprep.subr.bf16.mxu0 0
        %761 = vmatpush1.bf16.msra.mxu0 0
        %762 = vmatprep.mubr.bf16.mxu0 0
        %763 = vmatmul.mubr.bf16.gmra.mrb[0].mxu0 %v728
        %v764 = vpop.f32.mrb[0].mxu0
        %v765 = vadd.f32 0.0, %v764
        %v766 = vpop.f32.mrb[0].mxu0
        %v767 = vpop.f32.mrb[0].mxu0
        %v768 = vpop.f32.mrb[0].mxu0
        %769 = vdwg.mxu0
        %v770 = vpack.c.bf16 %v765, %v765
        %v771 = vld [vmem:[%s1] sm:$0xf]
        %v773 = vsel %vm363, %v771, 0
        %v776 = vsel %vm367, %v770, 0
        %778 = vmatprep.subr.bf16.mxu0 0
        %779 = vmatpush1.bf16.msra.mxu0 %v776
        %780 = vmatprep.subr.bf16.mxu0 0
        %781 = vmatpush1.bf16.msra.mxu0 0
        %782 = vmatprep.subr.bf16.mxu0 0
        %783 = vmatpush1.bf16.msra.mxu0 0
        %784 = vmatprep.subr.bf16.mxu0 0
        %785 = vmatpush1.bf16.msra.mxu0 0
        %786 = vmatprep.subr.bf16.mxu0 0
        %787 = vmatpush1.bf16.msra.mxu0 0
        %788 = vmatprep.subr.bf16.mxu0 0
        %789 = vmatpush1.bf16.msra.mxu0 0
        %790 = vmatprep.subr.bf16.mxu0 0
        %791 = vmatpush1.bf16.msra.mxu0 0
        %792 = vmatprep.subr.bf16.mxu0 0
        %793 = vmatpush1.bf16.msra.mxu0 0
        %794 = vmatprep.subr.bf16.mxu0 0
        %795 = vmatpush1.bf16.msra.mxu0 0
        %796 = vmatprep.subr.bf16.mxu0 0
        %797 = vmatpush1.bf16.msra.mxu0 0
        %798 = vmatprep.subr.bf16.mxu0 0
        %799 = vmatpush1.bf16.msra.mxu0 0
        %800 = vmatprep.subr.bf16.mxu0 0
        %801 = vmatpush1.bf16.msra.mxu0 0
        %802 = vmatprep.subr.bf16.mxu0 0
        %803 = vmatpush1.bf16.msra.mxu0 0
        %804 = vmatprep.subr.bf16.mxu0 0
        %805 = vmatpush1.bf16.msra.mxu0 0
        %806 = vmatprep.subr.bf16.mxu0 0
        %807 = vmatpush1.bf16.msra.mxu0 0
        %808 = vmatprep.subr.bf16.mxu0 0
        %809 = vmatpush1.bf16.msra.mxu0 0
        %810 = vmatprep.mubr.bf16.mxu0 0
        %811 = vmatmul.mubr.bf16.gmra.mrb[0].mxu0 %v773
        %v812 = vpop.f32.mrb[0].mxu0
        %v813 = vadd.f32 0.0, %v812
        %v814 = vpop.f32.mrb[0].mxu0
        %v815 = vpop.f32.mrb[0].mxu0
        %v816 = vpop.f32.mrb[0].mxu0
        %817 = vdwg.mxu0
        %v818 = vmul.f32 %v813, %v281
        %v819 = vld [vmem:[%s412] sm:$0xf]
        %v821 = vsel %vm363, %v819, 0
        %823 = vmatprep.subr.bf16.mxu0 0
        %824 = vmatpush1.bf16.msra.mxu0 %v776
        %825 = vmatprep.subr.bf16.mxu0 0
        %826 = vmatpush1.bf16.msra.mxu0 0
        %827 = vmatprep.subr.bf16.mxu0 0
        %828 = vmatpush1.bf16.msra.mxu0 0
        %829 = vmatprep.subr.bf16.mxu0 0
        %830 = vmatpush1.bf16.msra.mxu0 0
        %831 = vmatprep.subr.bf16.mxu0 0
        %832 = vmatpush1.bf16.msra.mxu0 0
        %833 = vmatprep.subr.bf16.mxu0 0
        %834 = vmatpush1.bf16.msra.mxu0 0
        %835 = vmatprep.subr.bf16.mxu0 0
        %836 = vmatpush1.bf16.msra.mxu0 0
        %837 = vmatprep.subr.bf16.mxu0 0
        %838 = vmatpush1.bf16.msra.mxu0 0
        %839 = vmatprep.subr.bf16.mxu0 0
        %840 = vmatpush1.bf16.msra.mxu0 0
        %841 = vmatprep.subr.bf16.mxu0 0
        %842 = vmatpush1.bf16.msra.mxu0 0
        %843 = vmatprep.subr.bf16.mxu0 0
        %844 = vmatpush1.bf16.msra.mxu0 0
        %845 = vmatprep.subr.bf16.mxu0 0
        %846 = vmatpush1.bf16.msra.mxu0 0
        %847 = vmatprep.subr.bf16.mxu0 0
        %848 = vmatpush1.bf16.msra.mxu0 0
        %849 = vmatprep.subr.bf16.mxu0 0
        %850 = vmatpush1.bf16.msra.mxu0 0
        %851 = vmatprep.subr.bf16.mxu0 0
        %852 = vmatpush1.bf16.msra.mxu0 0
        %853 = vmatprep.subr.bf16.mxu0 0
        %854 = vmatpush1.bf16.msra.mxu0 0
        %855 = vmatprep.mubr.bf16.mxu0 0
        %856 = vmatmul.mubr.bf16.gmra.mrb[0].mxu0 %v821
        %v857 = vpop.f32.mrb[0].mxu0
        %v858 = vadd.f32 0.0, %v857
        %v859 = vpop.f32.mrb[0].mxu0
        %v860 = vpop.f32.mrb[0].mxu0
        %v861 = vpop.f32.mrb[0].mxu0
        %862 = vdwg.mxu0
        %v863 = vmul.f32 %v858, %v284
        %v864 = vadd.f32 %v818, %v863
        %v865 = vadd.f32 %v864, %v462
        %v866 = vsub.f32 0.0, %v865
        %v867 = vmul.f32 %v866, 1.442695
        %v868 = vpow.pop %v867
        %v869 = vadd.f32 %v868, 1.0
        %v870 = vrcp.pop %v869
        %v871 = vmul.f32 %v865, %v870
        %v873 = vcombine.high %v871, %v871
        %v875 = vunpack.c.l.s4 1966171168
        %v876 = vunpack.c.0.s8 %v875
        %v877 = vlaneseq
        %v878 = vshrl.u32 %v877, 7
        %v879 = vsub.s32 %v876, %v878
        %v880 = vrot.slane %v871, %v879
        %v882 = vunpack.c.l.s4 1966171168
        %v883 = vunpack.c.0.s8 %v882
        %v884 = vlaneseq
        %v885 = vshrl.u32 %v884, 7
        %v886 = vsub.s32 %v883, %v885
        %v887 = vrot.slane %v873, %v886
        %v888 = vcombine.high %v880, %v880
        %v889 = vcombine.high %v887, %v887
        %v891 = vunpack.c.l.s4 1966171168
        %v892 = vunpack.c.0.s8 %v891
        %v893 = vlaneseq
        %v894 = vshrl.u32 %v893, 7
        %v895 = vsub.s32 %v892, %v894
        %v896 = vrot.slane %v880, %v895
        %v898 = vunpack.c.l.s4 1966171168
        %v899 = vunpack.c.0.s8 %v898
        %v900 = vlaneseq
        %v901 = vshrl.u32 %v900, 7
        %v902 = vsub.s32 %v899, %v901
        %v903 = vrot.slane %v887, %v902
        %v905 = vunpack.c.l.s4 1966171168
        %v906 = vunpack.c.0.s8 %v905
        %v907 = vlaneseq
        %v908 = vshrl.u32 %v907, 7
        %v909 = vsub.s32 %v906, %v908
        %v910 = vrot.slane %v888, %v909
        %v912 = vunpack.c.l.s4 1966171168
        %v913 = vunpack.c.0.s8 %v912
        %v914 = vlaneseq
        %v915 = vshrl.u32 %v914, 7
        %v916 = vsub.s32 %v913, %v915
        %v917 = vrot.slane %v889, %v916
        %v918 = vcombine.high %v896, %v896
        %v919 = vcombine.high %v903, %v903
        %v920 = vcombine.high %v910, %v910
        %v921 = vcombine.high %v917, %v917
        %930 = vst.msk [vmem:[%s259 + $0x2] sm:$0x1] %vm529, %v896
        %931 = vst.msk [vmem:[%s259 + $0x12] sm:$0x1] %vm529, %v910
        %932 = vst.msk [vmem:[%s259 + $0x22] sm:$0x1] %vm529, %v918
        %933 = vst.msk [vmem:[%s259 + $0x32] sm:$0x1] %vm529, %v920
        %934 = vst.msk [vmem:[%s259 + $0x42] sm:$0x1] %vm529, %v903
        %935 = vst.msk [vmem:[%s259 + $0x52] sm:$0x1] %vm529, %v917
        %936 = vst.msk [vmem:[%s259 + $0x62] sm:$0x1] %vm529, %v919
        %937 = vst.msk [vmem:[%s259 + $0x72] sm:$0x1] %vm529, %v921
        %v938 = vld [vmem:[%s538] sm:$0xf]
        %v940 = vsel %vm363, %v938, 0
        %942 = vmatprep.subr.bf16.mxu0 0
        %943 = vmatpush1.bf16.msra.mxu0 %v776
        %944 = vmatprep.subr.bf16.mxu0 0
        %945 = vmatpush1.bf16.msra.mxu0 0
        %946 = vmatprep.subr.bf16.mxu0 0
        %947 = vmatpush1.bf16.msra.mxu0 0
        %948 = vmatprep.subr.bf16.mxu0 0
        %949 = vmatpush1.bf16.msra.mxu0 0
        %950 = vmatprep.subr.bf16.mxu0 0
        %951 = vmatpush1.bf16.msra.mxu0 0
        %952 = vmatprep.subr.bf16.mxu0 0
        %953 = vmatpush1.bf16.msra.mxu0 0
        %954 = vmatprep.subr.bf16.mxu0 0
        %955 = vmatpush1.bf16.msra.mxu0 0
        %956 = vmatprep.subr.bf16.mxu0 0
        %957 = vmatpush1.bf16.msra.mxu0 0
        %958 = vmatprep.subr.bf16.mxu0 0
        %959 = vmatpush1.bf16.msra.mxu0 0
        %960 = vmatprep.subr.bf16.mxu0 0
        %961 = vmatpush1.bf16.msra.mxu0 0
        %962 = vmatprep.subr.bf16.mxu0 0
        %963 = vmatpush1.bf16.msra.mxu0 0
        %964 = vmatprep.subr.bf16.mxu0 0
        %965 = vmatpush1.bf16.msra.mxu0 0
        %966 = vmatprep.subr.bf16.mxu0 0
        %967 = vmatpush1.bf16.msra.mxu0 0
        %968 = vmatprep.subr.bf16.mxu0 0
        %969 = vmatpush1.bf16.msra.mxu0 0
        %970 = vmatprep.subr.bf16.mxu0 0
        %971 = vmatpush1.bf16.msra.mxu0 0
        %972 = vmatprep.subr.bf16.mxu0 0
        %973 = vmatpush1.bf16.msra.mxu0 0
        %974 = vmatprep.mubr.bf16.mxu0 0
        %975 = vmatmul.mubr.bf16.gmra.mrb[0].mxu0 %v940
        %v976 = vpop.f32.mrb[0].mxu0
        %v977 = vadd.f32 0.0, %v976
        %v978 = vpop.f32.mrb[0].mxu0
        %v979 = vpop.f32.mrb[0].mxu0
        %v980 = vpop.f32.mrb[0].mxu0
        %981 = vdwg.mxu0
        %v982 = vmul.f32 %v977, %v281
        %v983 = vld [vmem:[%s584] sm:$0xf]
        %v985 = vsel %vm363, %v983, 0
        %987 = vmatprep.subr.bf16.mxu0 0
        %988 = vmatpush1.bf16.msra.mxu0 %v776
        %989 = vmatprep.subr.bf16.mxu0 0
        %990 = vmatpush1.bf16.msra.mxu0 0
        %991 = vmatprep.subr.bf16.mxu0 0
        %992 = vmatpush1.bf16.msra.mxu0 0
        %993 = vmatprep.subr.bf16.mxu0 0
        %994 = vmatpush1.bf16.msra.mxu0 0
        %995 = vmatprep.subr.bf16.mxu0 0
        %996 = vmatpush1.bf16.msra.mxu0 0
        %997 = vmatprep.subr.bf16.mxu0 0
        %998 = vmatpush1.bf16.msra.mxu0 0
        %999 = vmatprep.subr.bf16.mxu0 0
        %1000 = vmatpush1.bf16.msra.mxu0 0
        %1001 = vmatprep.subr.bf16.mxu0 0
        %1002 = vmatpush1.bf16.msra.mxu0 0
        %1003 = vmatprep.subr.bf16.mxu0 0
        %1004 = vmatpush1.bf16.msra.mxu0 0
        %1005 = vmatprep.subr.bf16.mxu0 0
        %1006 = vmatpush1.bf16.msra.mxu0 0
        %1007 = vmatprep.subr.bf16.mxu0 0
        %1008 = vmatpush1.bf16.msra.mxu0 0
        %1009 = vmatprep.subr.bf16.mxu0 0
        %1010 = vmatpush1.bf16.msra.mxu0 0
        %1011 = vmatprep.subr.bf16.mxu0 0
        %1012 = vmatpush1.bf16.msra.mxu0 0
        %1013 = vmatprep.subr.bf16.mxu0 0
        %1014 = vmatpush1.bf16.msra.mxu0 0
        %1015 = vmatprep.subr.bf16.mxu0 0
        %1016 = vmatpush1.bf16.msra.mxu0 0
        %1017 = vmatprep.subr.bf16.mxu0 0
        %1018 = vmatpush1.bf16.msra.mxu0 0
        %1019 = vmatprep.mubr.bf16.mxu0 0
        %1020 = vmatmul.mubr.bf16.gmra.mrb[0].mxu0 %v985
        %v1021 = vpop.f32.mrb[0].mxu0
        %v1022 = vadd.f32 0.0, %v1021
        %v1023 = vpop.f32.mrb[0].mxu0
        %v1024 = vpop.f32.mrb[0].mxu0
        %v1025 = vpop.f32.mrb[0].mxu0
        %1026 = vdwg.mxu0
        %v1027 = vmul.f32 %v1022, %v284
        %v1028 = vadd.f32 %v982, %v1027
        %v1029 = vadd.f32 %v1028, %v462
        %v1030 = vsub.f32 0.0, %v1029
        %v1031 = vmul.f32 %v1030, 1.442695
        %v1032 = vpow.pop %v1031
        %v1033 = vadd.f32 %v1032, 1.0
        %v1034 = vrcp.pop %v1033
        %v1035 = vmul.f32 %v1029, %v1034
        %v1037 = vcombine.high %v1035, %v1035
        %v1039 = vunpack.c.l.s4 1966171168
        %v1040 = vunpack.c.0.s8 %v1039
        %v1041 = vlaneseq
        %v1042 = vshrl.u32 %v1041, 7
        %v1043 = vsub.s32 %v1040, %v1042
        %v1044 = vrot.slane %v1035, %v1043
        %v1046 = vunpack.c.l.s4 1966171168
        %v1047 = vunpack.c.0.s8 %v1046
        %v1048 = vlaneseq
        %v1049 = vshrl.u32 %v1048, 7
        %v1050 = vsub.s32 %v1047, %v1049
        %v1051 = vrot.slane %v1037, %v1050
        %v1052 = vcombine.high %v1044, %v1044
        %v1053 = vcombine.high %v1051, %v1051
        %v1055 = vunpack.c.l.s4 1966171168
        %v1056 = vunpack.c.0.s8 %v1055
        %v1057 = vlaneseq
        %v1058 = vshrl.u32 %v1057, 7
        %v1059 = vsub.s32 %v1056, %v1058
        %v1060 = vrot.slane %v1044, %v1059
        %v1062 = vunpack.c.l.s4 1966171168
        %v1063 = vunpack.c.0.s8 %v1062
        %v1064 = vlaneseq
        %v1065 = vshrl.u32 %v1064, 7
        %v1066 = vsub.s32 %v1063, %v1065
        %v1067 = vrot.slane %v1051, %v1066
        %v1069 = vunpack.c.l.s4 1966171168
        %v1070 = vunpack.c.0.s8 %v1069
        %v1071 = vlaneseq
        %v1072 = vshrl.u32 %v1071, 7
        %v1073 = vsub.s32 %v1070, %v1072
        %v1074 = vrot.slane %v1052, %v1073
        %v1076 = vunpack.c.l.s4 1966171168
        %v1077 = vunpack.c.0.s8 %v1076
        %v1078 = vlaneseq
        %v1079 = vshrl.u32 %v1078, 7
        %v1080 = vsub.s32 %v1077, %v1079
        %v1081 = vrot.slane %v1053, %v1080
        %v1082 = vcombine.high %v1060, %v1060
        %v1083 = vcombine.high %v1067, %v1067
        %v1084 = vcombine.high %v1074, %v1074
        %v1085 = vcombine.high %v1081, %v1081
        %1094 = vst.msk [vmem:[%s259 + $0x3] sm:$0x1] %vm529, %v1060
        %1095 = vst.msk [vmem:[%s259 + $0x13] sm:$0x1] %vm529, %v1074
        %1096 = vst.msk [vmem:[%s259 + $0x23] sm:$0x1] %vm529, %v1082
        %1097 = vst.msk [vmem:[%s259 + $0x33] sm:$0x1] %vm529, %v1084
        %1098 = vst.msk [vmem:[%s259 + $0x43] sm:$0x1] %vm529, %v1067
        %1099 = vst.msk [vmem:[%s259 + $0x53] sm:$0x1] %vm529, %v1081
        %1100 = vst.msk [vmem:[%s259 + $0x63] sm:$0x1] %vm529, %v1083
        %1101 = vst.msk [vmem:[%s259 + $0x73] sm:$0x1] %vm529, %v1085
        %v1102 = vld [vmem:[%s237 + $0x2] sm:$0x1]
        %v1103 = vld [vmem:[%s237 + $0xa] sm:$0x1]
        %v1104 = vld [vmem:[%s237 + $0x12] sm:$0x1]
        %v1105 = vld [vmem:[%s237 + $0x1a] sm:$0x1]
        %v1106 = vpack.c.bf16 %v1102, %v1102
        %v1107 = vpack.c.bf16 %v1103, %v1103
        %v1108 = vpack.c.bf16 %v1104, %v1104
        %v1109 = vpack.c.bf16 %v1105, %v1105
        %v1114 = vunpack.c.l.b16 %v1106
        %v1115 = vunpack.c.l.b16 %v1107
        %v1116 = vunpack.c.l.b16 %v1108
        %v1117 = vunpack.c.l.b16 %v1109
        %v1118 = vrot.slane %v1115, 7
        %v1119 = vsel %vm302, %v1118, %v1114
        %v1120 = vrot.slane %v1116, 6
        %v1121 = vsel %vm305, %v1120, %v1119
        %v1122 = vrot.slane %v1117, 5
        %v1123 = vsel %vm308, %v1122, %v1121
        %v1124 = vpack.c.b16 %v1123, %v1123
        %v1126 = vsel %vm317, %v1124, 0
        %1128 = vmatprep.subr.bf16.mxu0 0
        %1129 = vmatpush1.bf16.msra.mxu0 %v315
        %1130 = vmatprep.subr.bf16.mxu0 0
        %1131 = vmatpush1.bf16.msra.mxu0 0
        %1132 = vmatprep.subr.bf16.mxu0 0
        %1133 = vmatpush1.bf16.msra.mxu0 0
        %1134 = vmatprep.subr.bf16.mxu0 0
        %1135 = vmatpush1.bf16.msra.mxu0 0
        %1136 = vmatprep.subr.bf16.mxu0 0
        %1137 = vmatpush1.bf16.msra.mxu0 0
        %1138 = vmatprep.subr.bf16.mxu0 0
        %1139 = vmatpush1.bf16.msra.mxu0 0
        %1140 = vmatprep.subr.bf16.mxu0 0
        %1141 = vmatpush1.bf16.msra.mxu0 0
        %1142 = vmatprep.subr.bf16.mxu0 0
        %1143 = vmatpush1.bf16.msra.mxu0 0
        %1144 = vmatprep.subr.bf16.mxu0 0
        %1145 = vmatpush1.bf16.msra.mxu0 0
        %1146 = vmatprep.subr.bf16.mxu0 0
        %1147 = vmatpush1.bf16.msra.mxu0 0
        %1148 = vmatprep.subr.bf16.mxu0 0
        %1149 = vmatpush1.bf16.msra.mxu0 0
        %1150 = vmatprep.subr.bf16.mxu0 0
        %1151 = vmatpush1.bf16.msra.mxu0 0
        %1152 = vmatprep.subr.bf16.mxu0 0
        %1153 = vmatpush1.bf16.msra.mxu0 0
        %1154 = vmatprep.subr.bf16.mxu0 0
        %1155 = vmatpush1.bf16.msra.mxu0 0
        %1156 = vmatprep.subr.bf16.mxu0 0
        %1157 = vmatpush1.bf16.msra.mxu0 0
        %1158 = vmatprep.subr.bf16.mxu0 0
        %1159 = vmatpush1.bf16.msra.mxu0 0
        %1160 = vmatprep.mubr.bf16.mxu0 0
        %1161 = vmatmul.mubr.bf16.gmra.mrb[0].mxu0 %v1126
        %v1162 = vpop.f32.mrb[0].mxu0
        %v1163 = vadd.f32 0.0, %v1162
        %v1164 = vpop.f32.mrb[0].mxu0
        %v1165 = vpop.f32.mrb[0].mxu0
        %v1166 = vpop.f32.mrb[0].mxu0
        %1167 = vdwg.mxu0
        %v1168 = vpack.c.bf16 %v1163, %v1163
        %v1169 = vld [vmem:[%s1] sm:$0xf]
        %v1171 = vsel %vm363, %v1169, 0
        %v1174 = vsel %vm367, %v1168, 0
        %1176 = vmatprep.subr.bf16.mxu0 0
        %1177 = vmatpush1.bf16.msra.mxu0 %v1174
        %1178 = vmatprep.subr.bf16.mxu0 0
        %1179 = vmatpush1.bf16.msra.mxu0 0
        %1180 = vmatprep.subr.bf16.mxu0 0
        %1181 = vmatpush1.bf16.msra.mxu0 0
        %1182 = vmatprep.subr.bf16.mxu0 0
        %1183 = vmatpush1.bf16.msra.mxu0 0
        %1184 = vmatprep.subr.bf16.mxu0 0
        %1185 = vmatpush1.bf16.msra.mxu0 0
        %1186 = vmatprep.subr.bf16.mxu0 0
        %1187 = vmatpush1.bf16.msra.mxu0 0
        %1188 = vmatprep.subr.bf16.mxu0 0
        %1189 = vmatpush1.bf16.msra.mxu0 0
        %1190 = vmatprep.subr.bf16.mxu0 0
        %1191 = vmatpush1.bf16.msra.mxu0 0
        %1192 = vmatprep.subr.bf16.mxu0 0
        %1193 = vmatpush1.bf16.msra.mxu0 0
        %1194 = vmatprep.subr.bf16.mxu0 0
        %1195 = vmatpush1.bf16.msra.mxu0 0
        %1196 = vmatprep.subr.bf16.mxu0 0
        %1197 = vmatpush1.bf16.msra.mxu0 0
        %1198 = vmatprep.subr.bf16.mxu0 0
        %1199 = vmatpush1.bf16.msra.mxu0 0
        %1200 = vmatprep.subr.bf16.mxu0 0
        %1201 = vmatpush1.bf16.msra.mxu0 0
        %1202 = vmatprep.subr.bf16.mxu0 0
        %1203 = vmatpush1.bf16.msra.mxu0 0
        %1204 = vmatprep.subr.bf16.mxu0 0
        %1205 = vmatpush1.bf16.msra.mxu0 0
        %1206 = vmatprep.subr.bf16.mxu0 0
        %1207 = vmatpush1.bf16.msra.mxu0 0
        %1208 = vmatprep.mubr.bf16.mxu0 0
        %1209 = vmatmul.mubr.bf16.gmra.mrb[0].mxu0 %v1171
        %v1210 = vpop.f32.mrb[0].mxu0
        %v1211 = vadd.f32 0.0, %v1210
        %v1212 = vpop.f32.mrb[0].mxu0
        %v1213 = vpop.f32.mrb[0].mxu0
        %v1214 = vpop.f32.mrb[0].mxu0
        %1215 = vdwg.mxu0
        %v1216 = vmul.f32 %v1211, %v281
        %v1217 = vld [vmem:[%s412] sm:$0xf]
        %v1219 = vsel %vm363, %v1217, 0
        %1221 = vmatprep.subr.bf16.mxu0 0
        %1222 = vmatpush1.bf16.msra.mxu0 %v1174
        %1223 = vmatprep.subr.bf16.mxu0 0
        %1224 = vmatpush1.bf16.msra.mxu0 0
        %1225 = vmatprep.subr.bf16.mxu0 0
        %1226 = vmatpush1.bf16.msra.mxu0 0
        %1227 = vmatprep.subr.bf16.mxu0 0
        %1228 = vmatpush1.bf16.msra.mxu0 0
        %1229 = vmatprep.subr.bf16.mxu0 0
        %1230 = vmatpush1.bf16.msra.mxu0 0
        %1231 = vmatprep.subr.bf16.mxu0 0
        %1232 = vmatpush1.bf16.msra.mxu0 0
        %1233 = vmatprep.subr.bf16.mxu0 0
        %1234 = vmatpush1.bf16.msra.mxu0 0
        %1235 = vmatprep.subr.bf16.mxu0 0
        %1236 = vmatpush1.bf16.msra.mxu0 0
        %1237 = vmatprep.subr.bf16.mxu0 0
        %1238 = vmatpush1.bf16.msra.mxu0 0
        %1239 = vmatprep.subr.bf16.mxu0 0
        %1240 = vmatpush1.bf16.msra.mxu0 0
        %1241 = vmatprep.subr.bf16.mxu0 0
        %1242 = vmatpush1.bf16.msra.mxu0 0
        %1243 = vmatprep.subr.bf16.mxu0 0
        %1244 = vmatpush1.bf16.msra.mxu0 0
        %1245 = vmatprep.subr.bf16.mxu0 0
        %1246 = vmatpush1.bf16.msra.mxu0 0
        %1247 = vmatprep.subr.bf16.mxu0 0
        %1248 = vmatpush1.bf16.msra.mxu0 0
        %1249 = vmatprep.subr.bf16.mxu0 0
        %1250 = vmatpush1.bf16.msra.mxu0 0
        %1251 = vmatprep.subr.bf16.mxu0 0
        %1252 = vmatpush1.bf16.msra.mxu0 0
        %1253 = vmatprep.mubr.bf16.mxu0 0
        %1254 = vmatmul.mubr.bf16.gmra.mrb[0].mxu0 %v1219
        %v1255 = vpop.f32.mrb[0].mxu0
        %v1256 = vadd.f32 0.0, %v1255
        %v1257 = vpop.f32.mrb[0].mxu0
        %v1258 = vpop.f32.mrb[0].mxu0
        %v1259 = vpop.f32.mrb[0].mxu0
        %1260 = vdwg.mxu0
        %v1261 = vmul.f32 %v1256, %v284
        %v1262 = vadd.f32 %v1216, %v1261
        %v1263 = vadd.f32 %v1262, %v462
        %v1264 = vsub.f32 0.0, %v1263
        %v1265 = vmul.f32 %v1264, 1.442695
        %v1266 = vpow.pop %v1265
        %v1267 = vadd.f32 %v1266, 1.0
        %v1268 = vrcp.pop %v1267
        %v1269 = vmul.f32 %v1263, %v1268
        %v1271 = vcombine.high %v1269, %v1269
        %v1273 = vunpack.c.l.s4 1966171168
        %v1274 = vunpack.c.0.s8 %v1273
        %v1275 = vlaneseq
        %v1276 = vshrl.u32 %v1275, 7
        %v1277 = vsub.s32 %v1274, %v1276
        %v1278 = vrot.slane %v1269, %v1277
        %v1280 = vunpack.c.l.s4 1966171168
        %v1281 = vunpack.c.0.s8 %v1280
        %v1282 = vlaneseq
        %v1283 = vshrl.u32 %v1282, 7
        %v1284 = vsub.s32 %v1281, %v1283
        %v1285 = vrot.slane %v1271, %v1284
        %v1286 = vcombine.high %v1278, %v1278
        %v1287 = vcombine.high %v1285, %v1285
        %v1289 = vunpack.c.l.s4 1966171168
        %v1290 = vunpack.c.0.s8 %v1289
        %v1291 = vlaneseq
        %v1292 = vshrl.u32 %v1291, 7
        %v1293 = vsub.s32 %v1290, %v1292
        %v1294 = vrot.slane %v1278, %v1293
        %v1296 = vunpack.c.l.s4 1966171168
        %v1297 = vunpack.c.0.s8 %v1296
        %v1298 = vlaneseq
        %v1299 = vshrl.u32 %v1298, 7
        %v1300 = vsub.s32 %v1297, %v1299
        %v1301 = vrot.slane %v1285, %v1300
        %v1303 = vunpack.c.l.s4 1966171168
        %v1304 = vunpack.c.0.s8 %v1303
        %v1305 = vlaneseq
        %v1306 = vshrl.u32 %v1305, 7
        %v1307 = vsub.s32 %v1304, %v1306
        %v1308 = vrot.slane %v1286, %v1307
        %v1310 = vunpack.c.l.s4 1966171168
        %v1311 = vunpack.c.0.s8 %v1310
        %v1312 = vlaneseq
        %v1313 = vshrl.u32 %v1312, 7
        %v1314 = vsub.s32 %v1311, %v1313
        %v1315 = vrot.slane %v1287, %v1314
        %v1316 = vcombine.high %v1294, %v1294
        %v1317 = vcombine.high %v1301, %v1301
        %v1318 = vcombine.high %v1308, %v1308
        %v1319 = vcombine.high %v1315, %v1315
        %1328 = vst.msk [vmem:[%s259 + $0x4] sm:$0x1] %vm529, %v1294
        %1329 = vst.msk [vmem:[%s259 + $0x14] sm:$0x1] %vm529, %v1308
        %1330 = vst.msk [vmem:[%s259 + $0x24] sm:$0x1] %vm529, %v1316
        %1331 = vst.msk [vmem:[%s259 + $0x34] sm:$0x1] %vm529, %v1318
        %1332 = vst.msk [vmem:[%s259 + $0x44] sm:$0x1] %vm529, %v1301
        %1333 = vst.msk [vmem:[%s259 + $0x54] sm:$0x1] %vm529, %v1315
        %1334 = vst.msk [vmem:[%s259 + $0x64] sm:$0x1] %vm529, %v1317
        %1335 = vst.msk [vmem:[%s259 + $0x74] sm:$0x1] %vm529, %v1319
        %v1336 = vld [vmem:[%s538] sm:$0xf]
        %v1338 = vsel %vm363, %v1336, 0
        %1340 = vmatprep.subr.bf16.mxu0 0
        %1341 = vmatpush1.bf16.msra.mxu0 %v1174
        %1342 = vmatprep.subr.bf16.mxu0 0
        %1343 = vmatpush1.bf16.msra.mxu0 0
        %1344 = vmatprep.subr.bf16.mxu0 0
        %1345 = vmatpush1.bf16.msra.mxu0 0
        %1346 = vmatprep.subr.bf16.mxu0 0
        %1347 = vmatpush1.bf16.msra.mxu0 0
        %1348 = vmatprep.subr.bf16.mxu0 0
        %1349 = vmatpush1.bf16.msra.mxu0 0
        %1350 = vmatprep.subr.bf16.mxu0 0
        %1351 = vmatpush1.bf16.msra.mxu0 0
        %1352 = vmatprep.subr.bf16.mxu0 0
        %1353 = vmatpush1.bf16.msra.mxu0 0
        %1354 = vmatprep.subr.bf16.mxu0 0
        %1355 = vmatpush1.bf16.msra.mxu0 0
        %1356 = vmatprep.subr.bf16.mxu0 0
        %1357 = vmatpush1.bf16.msra.mxu0 0
        %1358 = vmatprep.subr.bf16.mxu0 0
        %1359 = vmatpush1.bf16.msra.mxu0 0
        %1360 = vmatprep.subr.bf16.mxu0 0
        %1361 = vmatpush1.bf16.msra.mxu0 0
        %1362 = vmatprep.subr.bf16.mxu0 0
        %1363 = vmatpush1.bf16.msra.mxu0 0
        %1364 = vmatprep.subr.bf16.mxu0 0
        %1365 = vmatpush1.bf16.msra.mxu0 0
        %1366 = vmatprep.subr.bf16.mxu0 0
        %1367 = vmatpush1.bf16.msra.mxu0 0
        %1368 = vmatprep.subr.bf16.mxu0 0
        %1369 = vmatpush1.bf16.msra.mxu0 0
        %1370 = vmatprep.subr.bf16.mxu0 0
        %1371 = vmatpush1.bf16.msra.mxu0 0
        %1372 = vmatprep.mubr.bf16.mxu0 0
        %1373 = vmatmul.mubr.bf16.gmra.mrb[0].mxu0 %v1338
        %v1374 = vpop.f32.mrb[0].mxu0
        %v1375 = vadd.f32 0.0, %v1374
        %v1376 = vpop.f32.mrb[0].mxu0
        %v1377 = vpop.f32.mrb[0].mxu0
        %v1378 = vpop.f32.mrb[0].mxu0
        %1379 = vdwg.mxu0
        %v1380 = vmul.f32 %v1375, %v281
        %v1381 = vld [vmem:[%s584] sm:$0xf]
        %v1383 = vsel %vm363, %v1381, 0
        %1385 = vmatprep.subr.bf16.mxu0 0
        %1386 = vmatpush1.bf16.msra.mxu0 %v1174
        %1387 = vmatprep.subr.bf16.mxu0 0
        %1388 = vmatpush1.bf16.msra.mxu0 0
        %1389 = vmatprep.subr.bf16.mxu0 0
        %1390 = vmatpush1.bf16.msra.mxu0 0
        %1391 = vmatprep.subr.bf16.mxu0 0
        %1392 = vmatpush1.bf16.msra.mxu0 0
        %1393 = vmatprep.subr.bf16.mxu0 0
        %1394 = vmatpush1.bf16.msra.mxu0 0
        %1395 = vmatprep.subr.bf16.mxu0 0
        %1396 = vmatpush1.bf16.msra.mxu0 0
        %1397 = vmatprep.subr.bf16.mxu0 0
        %1398 = vmatpush1.bf16.msra.mxu0 0
        %1399 = vmatprep.subr.bf16.mxu0 0
        %1400 = vmatpush1.bf16.msra.mxu0 0
        %1401 = vmatprep.subr.bf16.mxu0 0
        %1402 = vmatpush1.bf16.msra.mxu0 0
        %1403 = vmatprep.subr.bf16.mxu0 0
        %1404 = vmatpush1.bf16.msra.mxu0 0
        %1405 = vmatprep.subr.bf16.mxu0 0
        %1406 = vmatpush1.bf16.msra.mxu0 0
        %1407 = vmatprep.subr.bf16.mxu0 0
        %1408 = vmatpush1.bf16.msra.mxu0 0
        %1409 = vmatprep.subr.bf16.mxu0 0
        %1410 = vmatpush1.bf16.msra.mxu0 0
        %1411 = vmatprep.subr.bf16.mxu0 0
        %1412 = vmatpush1.bf16.msra.mxu0 0
        %1413 = vmatprep.subr.bf16.mxu0 0
        %1414 = vmatpush1.bf16.msra.mxu0 0
        %1415 = vmatprep.subr.bf16.mxu0 0
        %1416 = vmatpush1.bf16.msra.mxu0 0
        %1417 = vmatprep.mubr.bf16.mxu0 0
        %1418 = vmatmul.mubr.bf16.gmra.mrb[0].mxu0 %v1383
        %v1419 = vpop.f32.mrb[0].mxu0
        %v1420 = vadd.f32 0.0, %v1419
        %v1421 = vpop.f32.mrb[0].mxu0
        %v1422 = vpop.f32.mrb[0].mxu0
        %v1423 = vpop.f32.mrb[0].mxu0
        %1424 = vdwg.mxu0
        %v1425 = vmul.f32 %v1420, %v284
        %v1426 = vadd.f32 %v1380, %v1425
        %v1427 = vadd.f32 %v1426, %v462
        %v1428 = vsub.f32 0.0, %v1427
        %v1429 = vmul.f32 %v1428, 1.442695
        %v1430 = vpow.pop %v1429
        %v1431 = vadd.f32 %v1430, 1.0
        %v1432 = vrcp.pop %v1431
        %v1433 = vmul.f32 %v1427, %v1432
        %v1435 = vcombine.high %v1433, %v1433
        %v1437 = vunpack.c.l.s4 1966171168
        %v1438 = vunpack.c.0.s8 %v1437
        %v1439 = vlaneseq
        %v1440 = vshrl.u32 %v1439, 7
        %v1441 = vsub.s32 %v1438, %v1440
        %v1442 = vrot.slane %v1433, %v1441
        %v1444 = vunpack.c.l.s4 1966171168
        %v1445 = vunpack.c.0.s8 %v1444
        %v1446 = vlaneseq
        %v1447 = vshrl.u32 %v1446, 7
        %v1448 = vsub.s32 %v1445, %v1447
        %v1449 = vrot.slane %v1435, %v1448
        %v1450 = vcombine.high %v1442, %v1442
        %v1451 = vcombine.high %v1449, %v1449
        %v1453 = vunpack.c.l.s4 1966171168
        %v1454 = vunpack.c.0.s8 %v1453
        %v1455 = vlaneseq
        %v1456 = vshrl.u32 %v1455, 7
        %v1457 = vsub.s32 %v1454, %v1456
        %v1458 = vrot.slane %v1442, %v1457
        %v1460 = vunpack.c.l.s4 1966171168
        %v1461 = vunpack.c.0.s8 %v1460
        %v1462 = vlaneseq
        %v1463 = vshrl.u32 %v1462, 7
        %v1464 = vsub.s32 %v1461, %v1463
        %v1465 = vrot.slane %v1449, %v1464
        %v1467 = vunpack.c.l.s4 1966171168
        %v1468 = vunpack.c.0.s8 %v1467
        %v1469 = vlaneseq
        %v1470 = vshrl.u32 %v1469, 7
        %v1471 = vsub.s32 %v1468, %v1470
        %v1472 = vrot.slane %v1450, %v1471
        %v1474 = vunpack.c.l.s4 1966171168
        %v1475 = vunpack.c.0.s8 %v1474
        %v1476 = vlaneseq
        %v1477 = vshrl.u32 %v1476, 7
        %v1478 = vsub.s32 %v1475, %v1477
        %v1479 = vrot.slane %v1451, %v1478
        %v1480 = vcombine.high %v1458, %v1458
        %v1481 = vcombine.high %v1465, %v1465
        %v1482 = vcombine.high %v1472, %v1472
        %v1483 = vcombine.high %v1479, %v1479
        %1492 = vst.msk [vmem:[%s259 + $0x5] sm:$0x1] %vm529, %v1458
        %1493 = vst.msk [vmem:[%s259 + $0x15] sm:$0x1] %vm529, %v1472
        %1494 = vst.msk [vmem:[%s259 + $0x25] sm:$0x1] %vm529, %v1480
        %1495 = vst.msk [vmem:[%s259 + $0x35] sm:$0x1] %vm529, %v1482
        %1496 = vst.msk [vmem:[%s259 + $0x45] sm:$0x1] %vm529, %v1465
        %1497 = vst.msk [vmem:[%s259 + $0x55] sm:$0x1] %vm529, %v1479
        %1498 = vst.msk [vmem:[%s259 + $0x65] sm:$0x1] %vm529, %v1481
        %1499 = vst.msk [vmem:[%s259 + $0x75] sm:$0x1] %vm529, %v1483
        %v1500 = vld [vmem:[%s237 + $0x3] sm:$0x1]
        %v1501 = vld [vmem:[%s237 + $0xb] sm:$0x1]
        %v1502 = vld [vmem:[%s237 + $0x13] sm:$0x1]
        %v1503 = vld [vmem:[%s237 + $0x1b] sm:$0x1]
        %v1504 = vpack.c.bf16 %v1500, %v1500
        %v1505 = vpack.c.bf16 %v1501, %v1501
        %v1506 = vpack.c.bf16 %v1502, %v1502
        %v1507 = vpack.c.bf16 %v1503, %v1503
        %v1512 = vunpack.c.l.b16 %v1504
        %v1513 = vunpack.c.l.b16 %v1505
        %v1514 = vunpack.c.l.b16 %v1506
        %v1515 = vunpack.c.l.b16 %v1507
        %v1516 = vrot.slane %v1513, 7
        %v1517 = vsel %vm302, %v1516, %v1512
        %v1518 = vrot.slane %v1514, 6
        %v1519 = vsel %vm305, %v1518, %v1517
        %v1520 = vrot.slane %v1515, 5
        %v1521 = vsel %vm308, %v1520, %v1519
        %v1522 = vpack.c.b16 %v1521, %v1521
        %v1524 = vsel %vm317, %v1522, 0
        %1526 = vmatprep.subr.bf16.mxu0 0
        %1527 = vmatpush1.bf16.msra.mxu0 %v315
        %1528 = vmatprep.subr.bf16.mxu0 0
        %1529 = vmatpush1.bf16.msra.mxu0 0
        %1530 = vmatprep.subr.bf16.mxu0 0
        %1531 = vmatpush1.bf16.msra.mxu0 0
        %1532 = vmatprep.subr.bf16.mxu0 0
        %1533 = vmatpush1.bf16.msra.mxu0 0
        %1534 = vmatprep.subr.bf16.mxu0 0
        %1535 = vmatpush1.bf16.msra.mxu0 0
        %1536 = vmatprep.subr.bf16.mxu0 0
        %1537 = vmatpush1.bf16.msra.mxu0 0
        %1538 = vmatprep.subr.bf16.mxu0 0
        %1539 = vmatpush1.bf16.msra.mxu0 0
        %1540 = vmatprep.subr.bf16.mxu0 0
        %1541 = vmatpush1.bf16.msra.mxu0 0
        %1542 = vmatprep.subr.bf16.mxu0 0
        %1543 = vmatpush1.bf16.msra.mxu0 0
        %1544 = vmatprep.subr.bf16.mxu0 0
        %1545 = vmatpush1.bf16.msra.mxu0 0
        %1546 = vmatprep.subr.bf16.mxu0 0
        %1547 = vmatpush1.bf16.msra.mxu0 0
        %1548 = vmatprep.subr.bf16.mxu0 0
        %1549 = vmatpush1.bf16.msra.mxu0 0
        %1550 = vmatprep.subr.bf16.mxu0 0
        %1551 = vmatpush1.bf16.msra.mxu0 0
        %1552 = vmatprep.subr.bf16.mxu0 0
        %1553 = vmatpush1.bf16.msra.mxu0 0
        %1554 = vmatprep.subr.bf16.mxu0 0
        %1555 = vmatpush1.bf16.msra.mxu0 0
        %1556 = vmatprep.subr.bf16.mxu0 0
        %1557 = vmatpush1.bf16.msra.mxu0 0
        %1558 = vmatprep.mubr.bf16.mxu0 0
        %1559 = vmatmul.mubr.bf16.gmra.mrb[0].mxu0 %v1524
        %v1560 = vpop.f32.mrb[0].mxu0
        %v1561 = vadd.f32 0.0, %v1560
        %v1562 = vpop.f32.mrb[0].mxu0
        %v1563 = vpop.f32.mrb[0].mxu0
        %v1564 = vpop.f32.mrb[0].mxu0
        %1565 = vdwg.mxu0
        %v1566 = vpack.c.bf16 %v1561, %v1561
        %v1567 = vld [vmem:[%s1] sm:$0xf]
        %v1569 = vsel %vm363, %v1567, 0
        %v1572 = vsel %vm367, %v1566, 0
        %1574 = vmatprep.subr.bf16.mxu0 0
        %1575 = vmatpush1.bf16.msra.mxu0 %v1572
        %1576 = vmatprep.subr.bf16.mxu0 0
        %1577 = vmatpush1.bf16.msra.mxu0 0
        %1578 = vmatprep.subr.bf16.mxu0 0
        %1579 = vmatpush1.bf16.msra.mxu0 0
        %1580 = vmatprep.subr.bf16.mxu0 0
        %1581 = vmatpush1.bf16.msra.mxu0 0
        %1582 = vmatprep.subr.bf16.mxu0 0
        %1583 = vmatpush1.bf16.msra.mxu0 0
        %1584 = vmatprep.subr.bf16.mxu0 0
        %1585 = vmatpush1.bf16.msra.mxu0 0
        %1586 = vmatprep.subr.bf16.mxu0 0
        %1587 = vmatpush1.bf16.msra.mxu0 0
        %1588 = vmatprep.subr.bf16.mxu0 0
        %1589 = vmatpush1.bf16.msra.mxu0 0
        %1590 = vmatprep.subr.bf16.mxu0 0
        %1591 = vmatpush1.bf16.msra.mxu0 0
        %1592 = vmatprep.subr.bf16.mxu0 0
        %1593 = vmatpush1.bf16.msra.mxu0 0
        %1594 = vmatprep.subr.bf16.mxu0 0
        %1595 = vmatpush1.bf16.msra.mxu0 0
        %1596 = vmatprep.subr.bf16.mxu0 0
        %1597 = vmatpush1.bf16.msra.mxu0 0
        %1598 = vmatprep.subr.bf16.mxu0 0
        %1599 = vmatpush1.bf16.msra.mxu0 0
        %1600 = vmatprep.subr.bf16.mxu0 0
        %1601 = vmatpush1.bf16.msra.mxu0 0
        %1602 = vmatprep.subr.bf16.mxu0 0
        %1603 = vmatpush1.bf16.msra.mxu0 0
        %1604 = vmatprep.subr.bf16.mxu0 0
        %1605 = vmatpush1.bf16.msra.mxu0 0
        %1606 = vmatprep.mubr.bf16.mxu0 0
        %1607 = vmatmul.mubr.bf16.gmra.mrb[0].mxu0 %v1569
        %v1608 = vpop.f32.mrb[0].mxu0
        %v1609 = vadd.f32 0.0, %v1608
        %v1610 = vpop.f32.mrb[0].mxu0
        %v1611 = vpop.f32.mrb[0].mxu0
        %v1612 = vpop.f32.mrb[0].mxu0
        %1613 = vdwg.mxu0
        %v1614 = vmul.f32 %v1609, %v281
        %v1615 = vld [vmem:[%s412] sm:$0xf]
        %v1617 = vsel %vm363, %v1615, 0
        %1619 = vmatprep.subr.bf16.mxu0 0
        %1620 = vmatpush1.bf16.msra.mxu0 %v1572
        %1621 = vmatprep.subr.bf16.mxu0 0
        %1622 = vmatpush1.bf16.msra.mxu0 0
        %1623 = vmatprep.subr.bf16.mxu0 0
        %1624 = vmatpush1.bf16.msra.mxu0 0
        %1625 = vmatprep.subr.bf16.mxu0 0
        %1626 = vmatpush1.bf16.msra.mxu0 0
        %1627 = vmatprep.subr.bf16.mxu0 0
        %1628 = vmatpush1.bf16.msra.mxu0 0
        %1629 = vmatprep.subr.bf16.mxu0 0
        %1630 = vmatpush1.bf16.msra.mxu0 0
        %1631 = vmatprep.subr.bf16.mxu0 0
        %1632 = vmatpush1.bf16.msra.mxu0 0
        %1633 = vmatprep.subr.bf16.mxu0 0
        %1634 = vmatpush1.bf16.msra.mxu0 0
        %1635 = vmatprep.subr.bf16.mxu0 0
        %1636 = vmatpush1.bf16.msra.mxu0 0
        %1637 = vmatprep.subr.bf16.mxu0 0
        %1638 = vmatpush1.bf16.msra.mxu0 0
        %1639 = vmatprep.subr.bf16.mxu0 0
        %1640 = vmatpush1.bf16.msra.mxu0 0
        %1641 = vmatprep.subr.bf16.mxu0 0
        %1642 = vmatpush1.bf16.msra.mxu0 0
        %1643 = vmatprep.subr.bf16.mxu0 0
        %1644 = vmatpush1.bf16.msra.mxu0 0
        %1645 = vmatprep.subr.bf16.mxu0 0
        %1646 = vmatpush1.bf16.msra.mxu0 0
        %1647 = vmatprep.subr.bf16.mxu0 0
        %1648 = vmatpush1.bf16.msra.mxu0 0
        %1649 = vmatprep.subr.bf16.mxu0 0
        %1650 = vmatpush1.bf16.msra.mxu0 0
        %1651 = vmatprep.mubr.bf16.mxu0 0
        %1652 = vmatmul.mubr.bf16.gmra.mrb[0].mxu0 %v1617
        %v1653 = vpop.f32.mrb[0].mxu0
        %v1654 = vadd.f32 0.0, %v1653
        %v1655 = vpop.f32.mrb[0].mxu0
        %v1656 = vpop.f32.mrb[0].mxu0
        %v1657 = vpop.f32.mrb[0].mxu0
        %1658 = vdwg.mxu0
        %v1659 = vmul.f32 %v1654, %v284
        %v1660 = vadd.f32 %v1614, %v1659
        %v1661 = vadd.f32 %v1660, %v462
        %v1662 = vsub.f32 0.0, %v1661
        %v1663 = vmul.f32 %v1662, 1.442695
        %v1664 = vpow.pop %v1663
        %v1665 = vadd.f32 %v1664, 1.0
        %v1666 = vrcp.pop %v1665
        %v1667 = vmul.f32 %v1661, %v1666
        %v1669 = vcombine.high %v1667, %v1667
        %v1671 = vunpack.c.l.s4 1966171168
        %v1672 = vunpack.c.0.s8 %v1671
        %v1673 = vlaneseq
        %v1674 = vshrl.u32 %v1673, 7
        %v1675 = vsub.s32 %v1672, %v1674
        %v1676 = vrot.slane %v1667, %v1675
        %v1678 = vunpack.c.l.s4 1966171168
        %v1679 = vunpack.c.0.s8 %v1678
        %v1680 = vlaneseq
        %v1681 = vshrl.u32 %v1680, 7
        %v1682 = vsub.s32 %v1679, %v1681
        %v1683 = vrot.slane %v1669, %v1682
        %v1684 = vcombine.high %v1676, %v1676
        %v1685 = vcombine.high %v1683, %v1683
        %v1687 = vunpack.c.l.s4 1966171168
        %v1688 = vunpack.c.0.s8 %v1687
        %v1689 = vlaneseq
        %v1690 = vshrl.u32 %v1689, 7
        %v1691 = vsub.s32 %v1688, %v1690
        %v1692 = vrot.slane %v1676, %v1691
        %v1694 = vunpack.c.l.s4 1966171168
        %v1695 = vunpack.c.0.s8 %v1694
        %v1696 = vlaneseq
        %v1697 = vshrl.u32 %v1696, 7
        %v1698 = vsub.s32 %v1695, %v1697
        %v1699 = vrot.slane %v1683, %v1698
        %v1701 = vunpack.c.l.s4 1966171168
        %v1702 = vunpack.c.0.s8 %v1701
        %v1703 = vlaneseq
        %v1704 = vshrl.u32 %v1703, 7
        %v1705 = vsub.s32 %v1702, %v1704
        %v1706 = vrot.slane %v1684, %v1705
        %v1708 = vunpack.c.l.s4 1966171168
        %v1709 = vunpack.c.0.s8 %v1708
        %v1710 = vlaneseq
        %v1711 = vshrl.u32 %v1710, 7
        %v1712 = vsub.s32 %v1709, %v1711
        %v1713 = vrot.slane %v1685, %v1712
        %v1714 = vcombine.high %v1692, %v1692
        %v1715 = vcombine.high %v1699, %v1699
        %v1716 = vcombine.high %v1706, %v1706
        %v1717 = vcombine.high %v1713, %v1713
        %1726 = vst.msk [vmem:[%s259 + $0x6] sm:$0x1] %vm529, %v1692
        %1727 = vst.msk [vmem:[%s259 + $0x16] sm:$0x1] %vm529, %v1706
        %1728 = vst.msk [vmem:[%s259 + $0x26] sm:$0x1] %vm529, %v1714
        %1729 = vst.msk [vmem:[%s259 + $0x36] sm:$0x1] %vm529, %v1716
        %1730 = vst.msk [vmem:[%s259 + $0x46] sm:$0x1] %vm529, %v1699
        %1731 = vst.msk [vmem:[%s259 + $0x56] sm:$0x1] %vm529, %v1713
        %1732 = vst.msk [vmem:[%s259 + $0x66] sm:$0x1] %vm529, %v1715
        %1733 = vst.msk [vmem:[%s259 + $0x76] sm:$0x1] %vm529, %v1717
        %v1734 = vld [vmem:[%s538] sm:$0xf]
        %v1736 = vsel %vm363, %v1734, 0
        %1738 = vmatprep.subr.bf16.mxu0 0
        %1739 = vmatpush1.bf16.msra.mxu0 %v1572
        %1740 = vmatprep.subr.bf16.mxu0 0
        %1741 = vmatpush1.bf16.msra.mxu0 0
        %1742 = vmatprep.subr.bf16.mxu0 0
        %1743 = vmatpush1.bf16.msra.mxu0 0
        %1744 = vmatprep.subr.bf16.mxu0 0
        %1745 = vmatpush1.bf16.msra.mxu0 0
        %1746 = vmatprep.subr.bf16.mxu0 0
        %1747 = vmatpush1.bf16.msra.mxu0 0
        %1748 = vmatprep.subr.bf16.mxu0 0
        %1749 = vmatpush1.bf16.msra.mxu0 0
        %1750 = vmatprep.subr.bf16.mxu0 0
        %1751 = vmatpush1.bf16.msra.mxu0 0
        %1752 = vmatprep.subr.bf16.mxu0 0
        %1753 = vmatpush1.bf16.msra.mxu0 0
        %1754 = vmatprep.subr.bf16.mxu0 0
        %1755 = vmatpush1.bf16.msra.mxu0 0
        %1756 = vmatprep.subr.bf16.mxu0 0
        %1757 = vmatpush1.bf16.msra.mxu0 0
        %1758 = vmatprep.subr.bf16.mxu0 0
        %1759 = vmatpush1.bf16.msra.mxu0 0
        %1760 = vmatprep.subr.bf16.mxu0 0
        %1761 = vmatpush1.bf16.msra.mxu0 0
        %1762 = vmatprep.subr.bf16.mxu0 0
        %1763 = vmatpush1.bf16.msra.mxu0 0
        %1764 = vmatprep.subr.bf16.mxu0 0
        %1765 = vmatpush1.bf16.msra.mxu0 0
        %1766 = vmatprep.subr.bf16.mxu0 0
        %1767 = vmatpush1.bf16.msra.mxu0 0
        %1768 = vmatprep.subr.bf16.mxu0 0
        %1769 = vmatpush1.bf16.msra.mxu0 0
        %1770 = vmatprep.mubr.bf16.mxu0 0
        %1771 = vmatmul.mubr.bf16.gmra.mrb[0].mxu0 %v1736
        %v1772 = vpop.f32.mrb[0].mxu0
        %v1773 = vadd.f32 0.0, %v1772
        %v1774 = vpop.f32.mrb[0].mxu0
        %v1775 = vpop.f32.mrb[0].mxu0
        %v1776 = vpop.f32.mrb[0].mxu0
        %1777 = vdwg.mxu0
        %v1778 = vmul.f32 %v1773, %v281
        %v1779 = vld [vmem:[%s584] sm:$0xf]
        %v1781 = vsel %vm363, %v1779, 0
        %1783 = vmatprep.subr.bf16.mxu0 0
        %1784 = vmatpush1.bf16.msra.mxu0 %v1572
        %1785 = vmatprep.subr.bf16.mxu0 0
        %1786 = vmatpush1.bf16.msra.mxu0 0
        %1787 = vmatprep.subr.bf16.mxu0 0
        %1788 = vmatpush1.bf16.msra.mxu0 0
        %1789 = vmatprep.subr.bf16.mxu0 0
        %1790 = vmatpush1.bf16.msra.mxu0 0
        %1791 = vmatprep.subr.bf16.mxu0 0
        %1792 = vmatpush1.bf16.msra.mxu0 0
        %1793 = vmatprep.subr.bf16.mxu0 0
        %1794 = vmatpush1.bf16.msra.mxu0 0
        %1795 = vmatprep.subr.bf16.mxu0 0
        %1796 = vmatpush1.bf16.msra.mxu0 0
        %1797 = vmatprep.subr.bf16.mxu0 0
        %1798 = vmatpush1.bf16.msra.mxu0 0
        %1799 = vmatprep.subr.bf16.mxu0 0
        %1800 = vmatpush1.bf16.msra.mxu0 0
        %1801 = vmatprep.subr.bf16.mxu0 0
        %1802 = vmatpush1.bf16.msra.mxu0 0
        %1803 = vmatprep.subr.bf16.mxu0 0
        %1804 = vmatpush1.bf16.msra.mxu0 0
        %1805 = vmatprep.subr.bf16.mxu0 0
        %1806 = vmatpush1.bf16.msra.mxu0 0
        %1807 = vmatprep.subr.bf16.mxu0 0
        %1808 = vmatpush1.bf16.msra.mxu0 0
        %1809 = vmatprep.subr.bf16.mxu0 0
        %1810 = vmatpush1.bf16.msra.mxu0 0
        %1811 = vmatprep.subr.bf16.mxu0 0
        %1812 = vmatpush1.bf16.msra.mxu0 0
        %1813 = vmatprep.subr.bf16.mxu0 0
        %1814 = vmatpush1.bf16.msra.mxu0 0
        %1815 = vmatprep.mubr.bf16.mxu0 0
        %1816 = vmatmul.mubr.bf16.gmra.mrb[0].mxu0 %v1781
        %v1817 = vpop.f32.mrb[0].mxu0
        %v1818 = vadd.f32 0.0, %v1817
        %v1819 = vpop.f32.mrb[0].mxu0
        %v1820 = vpop.f32.mrb[0].mxu0
        %v1821 = vpop.f32.mrb[0].mxu0
        %1822 = vdwg.mxu0
        %v1823 = vmul.f32 %v1818, %v284
        %v1824 = vadd.f32 %v1778, %v1823
        %v1825 = vadd.f32 %v1824, %v462
        %v1826 = vsub.f32 0.0, %v1825
        %v1827 = vmul.f32 %v1826, 1.442695
        %v1828 = vpow.pop %v1827
        %v1829 = vadd.f32 %v1828, 1.0
        %v1830 = vrcp.pop %v1829
        %v1831 = vmul.f32 %v1825, %v1830
        %v1833 = vcombine.high %v1831, %v1831
        %v1835 = vunpack.c.l.s4 1966171168
        %v1836 = vunpack.c.0.s8 %v1835
        %v1837 = vlaneseq
        %v1838 = vshrl.u32 %v1837, 7
        %v1839 = vsub.s32 %v1836, %v1838
        %v1840 = vrot.slane %v1831, %v1839
        %v1842 = vunpack.c.l.s4 1966171168
        %v1843 = vunpack.c.0.s8 %v1842
        %v1844 = vlaneseq
        %v1845 = vshrl.u32 %v1844, 7
        %v1846 = vsub.s32 %v1843, %v1845
        %v1847 = vrot.slane %v1833, %v1846
        %v1848 = vcombine.high %v1840, %v1840
        %v1849 = vcombine.high %v1847, %v1847
        %v1851 = vunpack.c.l.s4 1966171168
        %v1852 = vunpack.c.0.s8 %v1851
        %v1853 = vlaneseq
        %v1854 = vshrl.u32 %v1853, 7
        %v1855 = vsub.s32 %v1852, %v1854
        %v1856 = vrot.slane %v1840, %v1855
        %v1858 = vunpack.c.l.s4 1966171168
        %v1859 = vunpack.c.0.s8 %v1858
        %v1860 = vlaneseq
        %v1861 = vshrl.u32 %v1860, 7
        %v1862 = vsub.s32 %v1859, %v1861
        %v1863 = vrot.slane %v1847, %v1862
        %v1865 = vunpack.c.l.s4 1966171168
        %v1866 = vunpack.c.0.s8 %v1865
        %v1867 = vlaneseq
        %v1868 = vshrl.u32 %v1867, 7
        %v1869 = vsub.s32 %v1866, %v1868
        %v1870 = vrot.slane %v1848, %v1869
        %v1872 = vunpack.c.l.s4 1966171168
        %v1873 = vunpack.c.0.s8 %v1872
        %v1874 = vlaneseq
        %v1875 = vshrl.u32 %v1874, 7
        %v1876 = vsub.s32 %v1873, %v1875
        %v1877 = vrot.slane %v1849, %v1876
        %v1878 = vcombine.high %v1856, %v1856
        %v1879 = vcombine.high %v1863, %v1863
        %v1880 = vcombine.high %v1870, %v1870
        %v1881 = vcombine.high %v1877, %v1877
        %1890 = vst.msk [vmem:[%s259 + $0x7] sm:$0x1] %vm529, %v1856
        %1891 = vst.msk [vmem:[%s259 + $0x17] sm:$0x1] %vm529, %v1870
        %1892 = vst.msk [vmem:[%s259 + $0x27] sm:$0x1] %vm529, %v1878
        %1893 = vst.msk [vmem:[%s259 + $0x37] sm:$0x1] %vm529, %v1880
        %1894 = vst.msk [vmem:[%s259 + $0x47] sm:$0x1] %vm529, %v1863
        %1895 = vst.msk [vmem:[%s259 + $0x57] sm:$0x1] %vm529, %v1877
        %1896 = vst.msk [vmem:[%s259 + $0x67] sm:$0x1] %vm529, %v1879
        %1897 = vst.msk [vmem:[%s259 + $0x77] sm:$0x1] %vm529, %v1881
        %v1898 = vld [vmem:[%s237 + $0x4] sm:$0x1]
        %v1899 = vld [vmem:[%s237 + $0xc] sm:$0x1]
        %v1900 = vld [vmem:[%s237 + $0x14] sm:$0x1]
        %v1901 = vld [vmem:[%s237 + $0x1c] sm:$0x1]
        %v1902 = vpack.c.bf16 %v1898, %v1898
        %v1903 = vpack.c.bf16 %v1899, %v1899
        %v1904 = vpack.c.bf16 %v1900, %v1900
        %v1905 = vpack.c.bf16 %v1901, %v1901
        %v1910 = vunpack.c.l.b16 %v1902
        %v1911 = vunpack.c.l.b16 %v1903
        %v1912 = vunpack.c.l.b16 %v1904
        %v1913 = vunpack.c.l.b16 %v1905
        %v1914 = vrot.slane %v1911, 7
        %v1915 = vsel %vm302, %v1914, %v1910
        %v1916 = vrot.slane %v1912, 6
        %v1917 = vsel %vm305, %v1916, %v1915
        %v1918 = vrot.slane %v1913, 5
        %v1919 = vsel %vm308, %v1918, %v1917
        %v1920 = vpack.c.b16 %v1919, %v1919
        %v1922 = vsel %vm317, %v1920, 0
        %1924 = vmatprep.subr.bf16.mxu0 0
        %1925 = vmatpush1.bf16.msra.mxu0 %v315
        %1926 = vmatprep.subr.bf16.mxu0 0
        %1927 = vmatpush1.bf16.msra.mxu0 0
        %1928 = vmatprep.subr.bf16.mxu0 0
        %1929 = vmatpush1.bf16.msra.mxu0 0
        %1930 = vmatprep.subr.bf16.mxu0 0
        %1931 = vmatpush1.bf16.msra.mxu0 0
        %1932 = vmatprep.subr.bf16.mxu0 0
        %1933 = vmatpush1.bf16.msra.mxu0 0
        %1934 = vmatprep.subr.bf16.mxu0 0
        %1935 = vmatpush1.bf16.msra.mxu0 0
        %1936 = vmatprep.subr.bf16.mxu0 0
        %1937 = vmatpush1.bf16.msra.mxu0 0
        %1938 = vmatprep.subr.bf16.mxu0 0
        %1939 = vmatpush1.bf16.msra.mxu0 0
        %1940 = vmatprep.subr.bf16.mxu0 0
        %1941 = vmatpush1.bf16.msra.mxu0 0
        %1942 = vmatprep.subr.bf16.mxu0 0
        %1943 = vmatpush1.bf16.msra.mxu0 0
        %1944 = vmatprep.subr.bf16.mxu0 0
        %1945 = vmatpush1.bf16.msra.mxu0 0
        %1946 = vmatprep.subr.bf16.mxu0 0
        %1947 = vmatpush1.bf16.msra.mxu0 0
        %1948 = vmatprep.subr.bf16.mxu0 0
        %1949 = vmatpush1.bf16.msra.mxu0 0
        %1950 = vmatprep.subr.bf16.mxu0 0
        %1951 = vmatpush1.bf16.msra.mxu0 0
        %1952 = vmatprep.subr.bf16.mxu0 0
        %1953 = vmatpush1.bf16.msra.mxu0 0
        %1954 = vmatprep.subr.bf16.mxu0 0
        %1955 = vmatpush1.bf16.msra.mxu0 0
        %1956 = vmatprep.mubr.bf16.mxu0 0
        %1957 = vmatmul.mubr.bf16.gmra.mrb[0].mxu0 %v1922
        %v1958 = vpop.f32.mrb[0].mxu0
        %v1959 = vadd.f32 0.0, %v1958
        %v1960 = vpop.f32.mrb[0].mxu0
        %v1961 = vpop.f32.mrb[0].mxu0
        %v1962 = vpop.f32.mrb[0].mxu0
        %1963 = vdwg.mxu0
        %v1964 = vpack.c.bf16 %v1959, %v1959
        %v1965 = vld [vmem:[%s1] sm:$0xf]
        %v1967 = vsel %vm363, %v1965, 0
        %v1970 = vsel %vm367, %v1964, 0
        %1972 = vmatprep.subr.bf16.mxu0 0
        %1973 = vmatpush1.bf16.msra.mxu0 %v1970
        %1974 = vmatprep.subr.bf16.mxu0 0
        %1975 = vmatpush1.bf16.msra.mxu0 0
        %1976 = vmatprep.subr.bf16.mxu0 0
        %1977 = vmatpush1.bf16.msra.mxu0 0
        %1978 = vmatprep.subr.bf16.mxu0 0
        %1979 = vmatpush1.bf16.msra.mxu0 0
        %1980 = vmatprep.subr.bf16.mxu0 0
        %1981 = vmatpush1.bf16.msra.mxu0 0
        %1982 = vmatprep.subr.bf16.mxu0 0
        %1983 = vmatpush1.bf16.msra.mxu0 0
        %1984 = vmatprep.subr.bf16.mxu0 0
        %1985 = vmatpush1.bf16.msra.mxu0 0
        %1986 = vmatprep.subr.bf16.mxu0 0
        %1987 = vmatpush1.bf16.msra.mxu0 0
        %1988 = vmatprep.subr.bf16.mxu0 0
        %1989 = vmatpush1.bf16.msra.mxu0 0
        %1990 = vmatprep.subr.bf16.mxu0 0
        %1991 = vmatpush1.bf16.msra.mxu0 0
        %1992 = vmatprep.subr.bf16.mxu0 0
        %1993 = vmatpush1.bf16.msra.mxu0 0
        %1994 = vmatprep.subr.bf16.mxu0 0
        %1995 = vmatpush1.bf16.msra.mxu0 0
        %1996 = vmatprep.subr.bf16.mxu0 0
        %1997 = vmatpush1.bf16.msra.mxu0 0
        %1998 = vmatprep.subr.bf16.mxu0 0
        %1999 = vmatpush1.bf16.msra.mxu0 0
        %2000 = vmatprep.subr.bf16.mxu0 0
        %2001 = vmatpush1.bf16.msra.mxu0 0
        %2002 = vmatprep.subr.bf16.mxu0 0
        %2003 = vmatpush1.bf16.msra.mxu0 0
        %2004 = vmatprep.mubr.bf16.mxu0 0
        %2005 = vmatmul.mubr.bf16.gmra.mrb[0].mxu0 %v1967
        %v2006 = vpop.f32.mrb[0].mxu0
        %v2007 = vadd.f32 0.0, %v2006
        %v2008 = vpop.f32.mrb[0].mxu0
        %v2009 = vpop.f32.mrb[0].mxu0
        %v2010 = vpop.f32.mrb[0].mxu0
        %2011 = vdwg.mxu0
        %v2012 = vmul.f32 %v2007, %v281
        %v2013 = vld [vmem:[%s412] sm:$0xf]
        %v2015 = vsel %vm363, %v2013, 0
        %2017 = vmatprep.subr.bf16.mxu0 0
        %2018 = vmatpush1.bf16.msra.mxu0 %v1970
        %2019 = vmatprep.subr.bf16.mxu0 0
        %2020 = vmatpush1.bf16.msra.mxu0 0
        %2021 = vmatprep.subr.bf16.mxu0 0
        %2022 = vmatpush1.bf16.msra.mxu0 0
        %2023 = vmatprep.subr.bf16.mxu0 0
        %2024 = vmatpush1.bf16.msra.mxu0 0
        %2025 = vmatprep.subr.bf16.mxu0 0
        %2026 = vmatpush1.bf16.msra.mxu0 0
        %2027 = vmatprep.subr.bf16.mxu0 0
        %2028 = vmatpush1.bf16.msra.mxu0 0
        %2029 = vmatprep.subr.bf16.mxu0 0
        %2030 = vmatpush1.bf16.msra.mxu0 0
        %2031 = vmatprep.subr.bf16.mxu0 0
        %2032 = vmatpush1.bf16.msra.mxu0 0
        %2033 = vmatprep.subr.bf16.mxu0 0
        %2034 = vmatpush1.bf16.msra.mxu0 0
        %2035 = vmatprep.subr.bf16.mxu0 0
        %2036 = vmatpush1.bf16.msra.mxu0 0
        %2037 = vmatprep.subr.bf16.mxu0 0
        %2038 = vmatpush1.bf16.msra.mxu0 0
        %2039 = vmatprep.subr.bf16.mxu0 0
        %2040 = vmatpush1.bf16.msra.mxu0 0
        %2041 = vmatprep.subr.bf16.mxu0 0
        %2042 = vmatpush1.bf16.msra.mxu0 0
        %2043 = vmatprep.subr.bf16.mxu0 0
        %2044 = vmatpush1.bf16.msra.mxu0 0
        %2045 = vmatprep.subr.bf16.mxu0 0
        %2046 = vmatpush1.bf16.msra.mxu0 0
        %2047 = vmatprep.subr.bf16.mxu0 0
        %2048 = vmatpush1.bf16.msra.mxu0 0
        %2049 = vmatprep.mubr.bf16.mxu0 0
        %2050 = vmatmul.mubr.bf16.gmra.mrb[0].mxu0 %v2015
        %v2051 = vpop.f32.mrb[0].mxu0
        %v2052 = vadd.f32 0.0, %v2051
        %v2053 = vpop.f32.mrb[0].mxu0
        %v2054 = vpop.f32.mrb[0].mxu0
        %v2055 = vpop.f32.mrb[0].mxu0
        %2056 = vdwg.mxu0
        %v2057 = vmul.f32 %v2052, %v284
        %v2058 = vadd.f32 %v2012, %v2057
        %v2059 = vadd.f32 %v2058, %v462
        %v2060 = vsub.f32 0.0, %v2059
        %v2061 = vmul.f32 %v2060, 1.442695
        %v2062 = vpow.pop %v2061
        %v2063 = vadd.f32 %v2062, 1.0
        %v2064 = vrcp.pop %v2063
        %v2065 = vmul.f32 %v2059, %v2064
        %v2067 = vcombine.high %v2065, %v2065
        %v2069 = vunpack.c.l.s4 1966171168
        %v2070 = vunpack.c.0.s8 %v2069
        %v2071 = vlaneseq
        %v2072 = vshrl.u32 %v2071, 7
        %v2073 = vsub.s32 %v2070, %v2072
        %v2074 = vrot.slane %v2065, %v2073
        %v2076 = vunpack.c.l.s4 1966171168
        %v2077 = vunpack.c.0.s8 %v2076
        %v2078 = vlaneseq
        %v2079 = vshrl.u32 %v2078, 7
        %v2080 = vsub.s32 %v2077, %v2079
        %v2081 = vrot.slane %v2067, %v2080
        %v2082 = vcombine.high %v2074, %v2074
        %v2083 = vcombine.high %v2081, %v2081
        %v2085 = vunpack.c.l.s4 1966171168
        %v2086 = vunpack.c.0.s8 %v2085
        %v2087 = vlaneseq
        %v2088 = vshrl.u32 %v2087, 7
        %v2089 = vsub.s32 %v2086, %v2088
        %v2090 = vrot.slane %v2074, %v2089
        %v2092 = vunpack.c.l.s4 1966171168
        %v2093 = vunpack.c.0.s8 %v2092
        %v2094 = vlaneseq
        %v2095 = vshrl.u32 %v2094, 7
        %v2096 = vsub.s32 %v2093, %v2095
        %v2097 = vrot.slane %v2081, %v2096
        %v2099 = vunpack.c.l.s4 1966171168
        %v2100 = vunpack.c.0.s8 %v2099
        %v2101 = vlaneseq
        %v2102 = vshrl.u32 %v2101, 7
        %v2103 = vsub.s32 %v2100, %v2102
        %v2104 = vrot.slane %v2082, %v2103
        %v2106 = vunpack.c.l.s4 1966171168
        %v2107 = vunpack.c.0.s8 %v2106
        %v2108 = vlaneseq
        %v2109 = vshrl.u32 %v2108, 7
        %v2110 = vsub.s32 %v2107, %v2109
        %v2111 = vrot.slane %v2083, %v2110
        %v2112 = vcombine.high %v2090, %v2090
        %v2113 = vcombine.high %v2097, %v2097
        %v2114 = vcombine.high %v2104, %v2104
        %v2115 = vcombine.high %v2111, %v2111
        %2124 = vst.msk [vmem:[%s259 + $0x8] sm:$0x1] %vm529, %v2090
        %2125 = vst.msk [vmem:[%s259 + $0x18] sm:$0x1] %vm529, %v2104
        %2126 = vst.msk [vmem:[%s259 + $0x28] sm:$0x1] %vm529, %v2112
        %2127 = vst.msk [vmem:[%s259 + $0x38] sm:$0x1] %vm529, %v2114
        %2128 = vst.msk [vmem:[%s259 + $0x48] sm:$0x1] %vm529, %v2097
        %2129 = vst.msk [vmem:[%s259 + $0x58] sm:$0x1] %vm529, %v2111
        %2130 = vst.msk [vmem:[%s259 + $0x68] sm:$0x1] %vm529, %v2113
        %2131 = vst.msk [vmem:[%s259 + $0x78] sm:$0x1] %vm529, %v2115
        %v2132 = vld [vmem:[%s538] sm:$0xf]
        %v2134 = vsel %vm363, %v2132, 0
        %2136 = vmatprep.subr.bf16.mxu0 0
        %2137 = vmatpush1.bf16.msra.mxu0 %v1970
        %2138 = vmatprep.subr.bf16.mxu0 0
        %2139 = vmatpush1.bf16.msra.mxu0 0
        %2140 = vmatprep.subr.bf16.mxu0 0
        %2141 = vmatpush1.bf16.msra.mxu0 0
        %2142 = vmatprep.subr.bf16.mxu0 0
        %2143 = vmatpush1.bf16.msra.mxu0 0
        %2144 = vmatprep.subr.bf16.mxu0 0
        %2145 = vmatpush1.bf16.msra.mxu0 0
        %2146 = vmatprep.subr.bf16.mxu0 0
        %2147 = vmatpush1.bf16.msra.mxu0 0
        %2148 = vmatprep.subr.bf16.mxu0 0
        %2149 = vmatpush1.bf16.msra.mxu0 0
        %2150 = vmatprep.subr.bf16.mxu0 0
        %2151 = vmatpush1.bf16.msra.mxu0 0
        %2152 = vmatprep.subr.bf16.mxu0 0
        %2153 = vmatpush1.bf16.msra.mxu0 0
        %2154 = vmatprep.subr.bf16.mxu0 0
        %2155 = vmatpush1.bf16.msra.mxu0 0
        %2156 = vmatprep.subr.bf16.mxu0 0
        %2157 = vmatpush1.bf16.msra.mxu0 0
        %2158 = vmatprep.subr.bf16.mxu0 0
        %2159 = vmatpush1.bf16.msra.mxu0 0
        %2160 = vmatprep.subr.bf16.mxu0 0
        %2161 = vmatpush1.bf16.msra.mxu0 0
        %2162 = vmatprep.subr.bf16.mxu0 0
        %2163 = vmatpush1.bf16.msra.mxu0 0
        %2164 = vmatprep.subr.bf16.mxu0 0
        %2165 = vmatpush1.bf16.msra.mxu0 0
        %2166 = vmatprep.subr.bf16.mxu0 0
        %2167 = vmatpush1.bf16.msra.mxu0 0
        %2168 = vmatprep.mubr.bf16.mxu0 0
        %2169 = vmatmul.mubr.bf16.gmra.mrb[0].mxu0 %v2134
        %v2170 = vpop.f32.mrb[0].mxu0
        %v2171 = vadd.f32 0.0, %v2170
        %v2172 = vpop.f32.mrb[0].mxu0
        %v2173 = vpop.f32.mrb[0].mxu0
        %v2174 = vpop.f32.mrb[0].mxu0
        %2175 = vdwg.mxu0
        %v2176 = vmul.f32 %v2171, %v281
        %v2177 = vld [vmem:[%s584] sm:$0xf]
        %v2179 = vsel %vm363, %v2177, 0
        %2181 = vmatprep.subr.bf16.mxu0 0
        %2182 = vmatpush1.bf16.msra.mxu0 %v1970
        %2183 = vmatprep.subr.bf16.mxu0 0
        %2184 = vmatpush1.bf16.msra.mxu0 0
        %2185 = vmatprep.subr.bf16.mxu0 0
        %2186 = vmatpush1.bf16.msra.mxu0 0
        %2187 = vmatprep.subr.bf16.mxu0 0
        %2188 = vmatpush1.bf16.msra.mxu0 0
        %2189 = vmatprep.subr.bf16.mxu0 0
        %2190 = vmatpush1.bf16.msra.mxu0 0
        %2191 = vmatprep.subr.bf16.mxu0 0
        %2192 = vmatpush1.bf16.msra.mxu0 0
        %2193 = vmatprep.subr.bf16.mxu0 0
        %2194 = vmatpush1.bf16.msra.mxu0 0
        %2195 = vmatprep.subr.bf16.mxu0 0
        %2196 = vmatpush1.bf16.msra.mxu0 0
        %2197 = vmatprep.subr.bf16.mxu0 0
        %2198 = vmatpush1.bf16.msra.mxu0 0
        %2199 = vmatprep.subr.bf16.mxu0 0
        %2200 = vmatpush1.bf16.msra.mxu0 0
        %2201 = vmatprep.subr.bf16.mxu0 0
        %2202 = vmatpush1.bf16.msra.mxu0 0
        %2203 = vmatprep.subr.bf16.mxu0 0
        %2204 = vmatpush1.bf16.msra.mxu0 0
        %2205 = vmatprep.subr.bf16.mxu0 0
        %2206 = vmatpush1.bf16.msra.mxu0 0
        %2207 = vmatprep.subr.bf16.mxu0 0
        %2208 = vmatpush1.bf16.msra.mxu0 0
        %2209 = vmatprep.subr.bf16.mxu0 0
        %2210 = vmatpush1.bf16.msra.mxu0 0
        %2211 = vmatprep.subr.bf16.mxu0 0
        %2212 = vmatpush1.bf16.msra.mxu0 0
        %2213 = vmatprep.mubr.bf16.mxu0 0
        %2214 = vmatmul.mubr.bf16.gmra.mrb[0].mxu0 %v2179
        %v2215 = vpop.f32.mrb[0].mxu0
        %v2216 = vadd.f32 0.0, %v2215
        %v2217 = vpop.f32.mrb[0].mxu0
        %v2218 = vpop.f32.mrb[0].mxu0
        %v2219 = vpop.f32.mrb[0].mxu0
        %2220 = vdwg.mxu0
        %v2221 = vmul.f32 %v2216, %v284
        %v2222 = vadd.f32 %v2176, %v2221
        %v2223 = vadd.f32 %v2222, %v462
        %v2224 = vsub.f32 0.0, %v2223
        %v2225 = vmul.f32 %v2224, 1.442695
        %v2226 = vpow.pop %v2225
        %v2227 = vadd.f32 %v2226, 1.0
        %v2228 = vrcp.pop %v2227
        %v2229 = vmul.f32 %v2223, %v2228
        %v2231 = vcombine.high %v2229, %v2229
        %v2233 = vunpack.c.l.s4 1966171168
        %v2234 = vunpack.c.0.s8 %v2233
        %v2235 = vlaneseq
        %v2236 = vshrl.u32 %v2235, 7
        %v2237 = vsub.s32 %v2234, %v2236
        %v2238 = vrot.slane %v2229, %v2237
        %v2240 = vunpack.c.l.s4 1966171168
        %v2241 = vunpack.c.0.s8 %v2240
        %v2242 = vlaneseq
        %v2243 = vshrl.u32 %v2242, 7
        %v2244 = vsub.s32 %v2241, %v2243
        %v2245 = vrot.slane %v2231, %v2244
        %v2246 = vcombine.high %v2238, %v2238
        %v2247 = vcombine.high %v2245, %v2245
        %v2249 = vunpack.c.l.s4 1966171168
        %v2250 = vunpack.c.0.s8 %v2249
        %v2251 = vlaneseq
        %v2252 = vshrl.u32 %v2251, 7
        %v2253 = vsub.s32 %v2250, %v2252
        %v2254 = vrot.slane %v2238, %v2253
        %v2256 = vunpack.c.l.s4 1966171168
        %v2257 = vunpack.c.0.s8 %v2256
        %v2258 = vlaneseq
        %v2259 = vshrl.u32 %v2258, 7
        %v2260 = vsub.s32 %v2257, %v2259
        %v2261 = vrot.slane %v2245, %v2260
        %v2263 = vunpack.c.l.s4 1966171168
        %v2264 = vunpack.c.0.s8 %v2263
        %v2265 = vlaneseq
        %v2266 = vshrl.u32 %v2265, 7
        %v2267 = vsub.s32 %v2264, %v2266
        %v2268 = vrot.slane %v2246, %v2267
        %v2270 = vunpack.c.l.s4 1966171168
        %v2271 = vunpack.c.0.s8 %v2270
        %v2272 = vlaneseq
        %v2273 = vshrl.u32 %v2272, 7
        %v2274 = vsub.s32 %v2271, %v2273
        %v2275 = vrot.slane %v2247, %v2274
        %v2276 = vcombine.high %v2254, %v2254
        %v2277 = vcombine.high %v2261, %v2261
        %v2278 = vcombine.high %v2268, %v2268
        %v2279 = vcombine.high %v2275, %v2275
        %2288 = vst.msk [vmem:[%s259 + $0x9] sm:$0x1] %vm529, %v2254
        %2289 = vst.msk [vmem:[%s259 + $0x19] sm:$0x1] %vm529, %v2268
        %2290 = vst.msk [vmem:[%s259 + $0x29] sm:$0x1] %vm529, %v2276
        %2291 = vst.msk [vmem:[%s259 + $0x39] sm:$0x1] %vm529, %v2278
        %2292 = vst.msk [vmem:[%s259 + $0x49] sm:$0x1] %vm529, %v2261
        %2293 = vst.msk [vmem:[%s259 + $0x59] sm:$0x1] %vm529, %v2275
        %2294 = vst.msk [vmem:[%s259 + $0x69] sm:$0x1] %vm529, %v2277
        %2295 = vst.msk [vmem:[%s259 + $0x79] sm:$0x1] %vm529, %v2279
        %v2296 = vld [vmem:[%s237 + $0x5] sm:$0x1]
        %v2297 = vld [vmem:[%s237 + $0xd] sm:$0x1]
        %v2298 = vld [vmem:[%s237 + $0x15] sm:$0x1]
        %v2299 = vld [vmem:[%s237 + $0x1d] sm:$0x1]
        %v2300 = vpack.c.bf16 %v2296, %v2296
        %v2301 = vpack.c.bf16 %v2297, %v2297
        %v2302 = vpack.c.bf16 %v2298, %v2298
        %v2303 = vpack.c.bf16 %v2299, %v2299
        %v2308 = vunpack.c.l.b16 %v2300
        %v2309 = vunpack.c.l.b16 %v2301
        %v2310 = vunpack.c.l.b16 %v2302
        %v2311 = vunpack.c.l.b16 %v2303
        %v2312 = vrot.slane %v2309, 7
        %v2313 = vsel %vm302, %v2312, %v2308
        %v2314 = vrot.slane %v2310, 6
        %v2315 = vsel %vm305, %v2314, %v2313
        %v2316 = vrot.slane %v2311, 5
        %v2317 = vsel %vm308, %v2316, %v2315
        %v2318 = vpack.c.b16 %v2317, %v2317
        %v2320 = vsel %vm317, %v2318, 0
        %2322 = vmatprep.subr.bf16.mxu0 0
        %2323 = vmatpush1.bf16.msra.mxu0 %v315
        %2324 = vmatprep.subr.bf16.mxu0 0
        %2325 = vmatpush1.bf16.msra.mxu0 0
        %2326 = vmatprep.subr.bf16.mxu0 0
        %2327 = vmatpush1.bf16.msra.mxu0 0
        %2328 = vmatprep.subr.bf16.mxu0 0
        %2329 = vmatpush1.bf16.msra.mxu0 0
        %2330 = vmatprep.subr.bf16.mxu0 0
        %2331 = vmatpush1.bf16.msra.mxu0 0
        %2332 = vmatprep.subr.bf16.mxu0 0
        %2333 = vmatpush1.bf16.msra.mxu0 0
        %2334 = vmatprep.subr.bf16.mxu0 0
        %2335 = vmatpush1.bf16.msra.mxu0 0
        %2336 = vmatprep.subr.bf16.mxu0 0
        %2337 = vmatpush1.bf16.msra.mxu0 0
        %2338 = vmatprep.subr.bf16.mxu0 0
        %2339 = vmatpush1.bf16.msra.mxu0 0
        %2340 = vmatprep.subr.bf16.mxu0 0
        %2341 = vmatpush1.bf16.msra.mxu0 0
        %2342 = vmatprep.subr.bf16.mxu0 0
        %2343 = vmatpush1.bf16.msra.mxu0 0
        %2344 = vmatprep.subr.bf16.mxu0 0
        %2345 = vmatpush1.bf16.msra.mxu0 0
        %2346 = vmatprep.subr.bf16.mxu0 0
        %2347 = vmatpush1.bf16.msra.mxu0 0
        %2348 = vmatprep.subr.bf16.mxu0 0
        %2349 = vmatpush1.bf16.msra.mxu0 0
        %2350 = vmatprep.subr.bf16.mxu0 0
        %2351 = vmatpush1.bf16.msra.mxu0 0
        %2352 = vmatprep.subr.bf16.mxu0 0
        %2353 = vmatpush1.bf16.msra.mxu0 0
        %2354 = vmatprep.mubr.bf16.mxu0 0
        %2355 = vmatmul.mubr.bf16.gmra.mrb[0].mxu0 %v2320
        %v2356 = vpop.f32.mrb[0].mxu0
        %v2357 = vadd.f32 0.0, %v2356
        %v2358 = vpop.f32.mrb[0].mxu0
        %v2359 = vpop.f32.mrb[0].mxu0
        %v2360 = vpop.f32.mrb[0].mxu0
        %2361 = vdwg.mxu0
        %v2362 = vpack.c.bf16 %v2357, %v2357
        %v2363 = vld [vmem:[%s1] sm:$0xf]
        %v2365 = vsel %vm363, %v2363, 0
        %v2368 = vsel %vm367, %v2362, 0
        %2370 = vmatprep.subr.bf16.mxu0 0
        %2371 = vmatpush1.bf16.msra.mxu0 %v2368
        %2372 = vmatprep.subr.bf16.mxu0 0
        %2373 = vmatpush1.bf16.msra.mxu0 0
        %2374 = vmatprep.subr.bf16.mxu0 0
        %2375 = vmatpush1.bf16.msra.mxu0 0
        %2376 = vmatprep.subr.bf16.mxu0 0
        %2377 = vmatpush1.bf16.msra.mxu0 0
        %2378 = vmatprep.subr.bf16.mxu0 0
        %2379 = vmatpush1.bf16.msra.mxu0 0
        %2380 = vmatprep.subr.bf16.mxu0 0
        %2381 = vmatpush1.bf16.msra.mxu0 0
        %2382 = vmatprep.subr.bf16.mxu0 0
        %2383 = vmatpush1.bf16.msra.mxu0 0
        %2384 = vmatprep.subr.bf16.mxu0 0
        %2385 = vmatpush1.bf16.msra.mxu0 0
        %2386 = vmatprep.subr.bf16.mxu0 0
        %2387 = vmatpush1.bf16.msra.mxu0 0
        %2388 = vmatprep.subr.bf16.mxu0 0
        %2389 = vmatpush1.bf16.msra.mxu0 0
        %2390 = vmatprep.subr.bf16.mxu0 0
        %2391 = vmatpush1.bf16.msra.mxu0 0
        %2392 = vmatprep.subr.bf16.mxu0 0
        %2393 = vmatpush1.bf16.msra.mxu0 0
        %2394 = vmatprep.subr.bf16.mxu0 0
        %2395 = vmatpush1.bf16.msra.mxu0 0
        %2396 = vmatprep.subr.bf16.mxu0 0
        %2397 = vmatpush1.bf16.msra.mxu0 0
        %2398 = vmatprep.subr.bf16.mxu0 0
        %2399 = vmatpush1.bf16.msra.mxu0 0
        %2400 = vmatprep.subr.bf16.mxu0 0
        %2401 = vmatpush1.bf16.msra.mxu0 0
        %2402 = vmatprep.mubr.bf16.mxu0 0
        %2403 = vmatmul.mubr.bf16.gmra.mrb[0].mxu0 %v2365
        %v2404 = vpop.f32.mrb[0].mxu0
        %v2405 = vadd.f32 0.0, %v2404
        %v2406 = vpop.f32.mrb[0].mxu0
        %v2407 = vpop.f32.mrb[0].mxu0
        %v2408 = vpop.f32.mrb[0].mxu0
        %2409 = vdwg.mxu0
        %v2410 = vmul.f32 %v2405, %v281
        %v2411 = vld [vmem:[%s412] sm:$0xf]
        %v2413 = vsel %vm363, %v2411, 0
        %2415 = vmatprep.subr.bf16.mxu0 0
        %2416 = vmatpush1.bf16.msra.mxu0 %v2368
        %2417 = vmatprep.subr.bf16.mxu0 0
        %2418 = vmatpush1.bf16.msra.mxu0 0
        %2419 = vmatprep.subr.bf16.mxu0 0
        %2420 = vmatpush1.bf16.msra.mxu0 0
        %2421 = vmatprep.subr.bf16.mxu0 0
        %2422 = vmatpush1.bf16.msra.mxu0 0
        %2423 = vmatprep.subr.bf16.mxu0 0
        %2424 = vmatpush1.bf16.msra.mxu0 0
        %2425 = vmatprep.subr.bf16.mxu0 0
        %2426 = vmatpush1.bf16.msra.mxu0 0
        %2427 = vmatprep.subr.bf16.mxu0 0
        %2428 = vmatpush1.bf16.msra.mxu0 0
        %2429 = vmatprep.subr.bf16.mxu0 0
        %2430 = vmatpush1.bf16.msra.mxu0 0
        %2431 = vmatprep.subr.bf16.mxu0 0
        %2432 = vmatpush1.bf16.msra.mxu0 0
        %2433 = vmatprep.subr.bf16.mxu0 0
        %2434 = vmatpush1.bf16.msra.mxu0 0
        %2435 = vmatprep.subr.bf16.mxu0 0
        %2436 = vmatpush1.bf16.msra.mxu0 0
        %2437 = vmatprep.subr.bf16.mxu0 0
        %2438 = vmatpush1.bf16.msra.mxu0 0
        %2439 = vmatprep.subr.bf16.mxu0 0
        %2440 = vmatpush1.bf16.msra.mxu0 0
        %2441 = vmatprep.subr.bf16.mxu0 0
        %2442 = vmatpush1.bf16.msra.mxu0 0
        %2443 = vmatprep.subr.bf16.mxu0 0
        %2444 = vmatpush1.bf16.msra.mxu0 0
        %2445 = vmatprep.subr.bf16.mxu0 0
        %2446 = vmatpush1.bf16.msra.mxu0 0
        %2447 = vmatprep.mubr.bf16.mxu0 0
        %2448 = vmatmul.mubr.bf16.gmra.mrb[0].mxu0 %v2413
        %v2449 = vpop.f32.mrb[0].mxu0
        %v2450 = vadd.f32 0.0, %v2449
        %v2451 = vpop.f32.mrb[0].mxu0
        %v2452 = vpop.f32.mrb[0].mxu0
        %v2453 = vpop.f32.mrb[0].mxu0
        %2454 = vdwg.mxu0
        %v2455 = vmul.f32 %v2450, %v284
        %v2456 = vadd.f32 %v2410, %v2455
        %v2457 = vadd.f32 %v2456, %v462
        %v2458 = vsub.f32 0.0, %v2457
        %v2459 = vmul.f32 %v2458, 1.442695
        %v2460 = vpow.pop %v2459
        %v2461 = vadd.f32 %v2460, 1.0
        %v2462 = vrcp.pop %v2461
        %v2463 = vmul.f32 %v2457, %v2462
        %v2465 = vcombine.high %v2463, %v2463
        %v2467 = vunpack.c.l.s4 1966171168
        %v2468 = vunpack.c.0.s8 %v2467
        %v2469 = vlaneseq
        %v2470 = vshrl.u32 %v2469, 7
        %v2471 = vsub.s32 %v2468, %v2470
        %v2472 = vrot.slane %v2463, %v2471
        %v2474 = vunpack.c.l.s4 1966171168
        %v2475 = vunpack.c.0.s8 %v2474
        %v2476 = vlaneseq
        %v2477 = vshrl.u32 %v2476, 7
        %v2478 = vsub.s32 %v2475, %v2477
        %v2479 = vrot.slane %v2465, %v2478
        %v2480 = vcombine.high %v2472, %v2472
        %v2481 = vcombine.high %v2479, %v2479
        %v2483 = vunpack.c.l.s4 1966171168
        %v2484 = vunpack.c.0.s8 %v2483
        %v2485 = vlaneseq
        %v2486 = vshrl.u32 %v2485, 7
        %v2487 = vsub.s32 %v2484, %v2486
        %v2488 = vrot.slane %v2472, %v2487
        %v2490 = vunpack.c.l.s4 1966171168
        %v2491 = vunpack.c.0.s8 %v2490
        %v2492 = vlaneseq
        %v2493 = vshrl.u32 %v2492, 7
        %v2494 = vsub.s32 %v2491, %v2493
        %v2495 = vrot.slane %v2479, %v2494
        %v2497 = vunpack.c.l.s4 1966171168
        %v2498 = vunpack.c.0.s8 %v2497
        %v2499 = vlaneseq
        %v2500 = vshrl.u32 %v2499, 7
        %v2501 = vsub.s32 %v2498, %v2500
        %v2502 = vrot.slane %v2480, %v2501
        %v2504 = vunpack.c.l.s4 1966171168
        %v2505 = vunpack.c.0.s8 %v2504
        %v2506 = vlaneseq
        %v2507 = vshrl.u32 %v2506, 7
        %v2508 = vsub.s32 %v2505, %v2507
        %v2509 = vrot.slane %v2481, %v2508
        %v2510 = vcombine.high %v2488, %v2488
        %v2511 = vcombine.high %v2495, %v2495
        %v2512 = vcombine.high %v2502, %v2502
        %v2513 = vcombine.high %v2509, %v2509
        %2522 = vst.msk [vmem:[%s259 + $0xa] sm:$0x1] %vm529, %v2488
        %2523 = vst.msk [vmem:[%s259 + $0x1a] sm:$0x1] %vm529, %v2502
        %2524 = vst.msk [vmem:[%s259 + $0x2a] sm:$0x1] %vm529, %v2510
        %2525 = vst.msk [vmem:[%s259 + $0x3a] sm:$0x1] %vm529, %v2512
        %2526 = vst.msk [vmem:[%s259 + $0x4a] sm:$0x1] %vm529, %v2495
        %2527 = vst.msk [vmem:[%s259 + $0x5a] sm:$0x1] %vm529, %v2509
        %2528 = vst.msk [vmem:[%s259 + $0x6a] sm:$0x1] %vm529, %v2511
        %2529 = vst.msk [vmem:[%s259 + $0x7a] sm:$0x1] %vm529, %v2513
        %v2530 = vld [vmem:[%s538] sm:$0xf]
        %v2532 = vsel %vm363, %v2530, 0
        %2534 = vmatprep.subr.bf16.mxu0 0
        %2535 = vmatpush1.bf16.msra.mxu0 %v2368
        %2536 = vmatprep.subr.bf16.mxu0 0
        %2537 = vmatpush1.bf16.msra.mxu0 0
        %2538 = vmatprep.subr.bf16.mxu0 0
        %2539 = vmatpush1.bf16.msra.mxu0 0
        %2540 = vmatprep.subr.bf16.mxu0 0
        %2541 = vmatpush1.bf16.msra.mxu0 0
        %2542 = vmatprep.subr.bf16.mxu0 0
        %2543 = vmatpush1.bf16.msra.mxu0 0
        %2544 = vmatprep.subr.bf16.mxu0 0
        %2545 = vmatpush1.bf16.msra.mxu0 0
        %2546 = vmatprep.subr.bf16.mxu0 0
        %2547 = vmatpush1.bf16.msra.mxu0 0
        %2548 = vmatprep.subr.bf16.mxu0 0
        %2549 = vmatpush1.bf16.msra.mxu0 0
        %2550 = vmatprep.subr.bf16.mxu0 0
        %2551 = vmatpush1.bf16.msra.mxu0 0
        %2552 = vmatprep.subr.bf16.mxu0 0
        %2553 = vmatpush1.bf16.msra.mxu0 0
        %2554 = vmatprep.subr.bf16.mxu0 0
        %2555 = vmatpush1.bf16.msra.mxu0 0
        %2556 = vmatprep.subr.bf16.mxu0 0
        %2557 = vmatpush1.bf16.msra.mxu0 0
        %2558 = vmatprep.subr.bf16.mxu0 0
        %2559 = vmatpush1.bf16.msra.mxu0 0
        %2560 = vmatprep.subr.bf16.mxu0 0
        %2561 = vmatpush1.bf16.msra.mxu0 0
        %2562 = vmatprep.subr.bf16.mxu0 0
        %2563 = vmatpush1.bf16.msra.mxu0 0
        %2564 = vmatprep.subr.bf16.mxu0 0
        %2565 = vmatpush1.bf16.msra.mxu0 0
        %2566 = vmatprep.mubr.bf16.mxu0 0
        %2567 = vmatmul.mubr.bf16.gmra.mrb[0].mxu0 %v2532
        %v2568 = vpop.f32.mrb[0].mxu0
        %v2569 = vadd.f32 0.0, %v2568
        %v2570 = vpop.f32.mrb[0].mxu0
        %v2571 = vpop.f32.mrb[0].mxu0
        %v2572 = vpop.f32.mrb[0].mxu0
        %2573 = vdwg.mxu0
        %v2574 = vmul.f32 %v2569, %v281
        %v2575 = vld [vmem:[%s584] sm:$0xf]
        %v2577 = vsel %vm363, %v2575, 0
        %2579 = vmatprep.subr.bf16.mxu0 0
        %2580 = vmatpush1.bf16.msra.mxu0 %v2368
        %2581 = vmatprep.subr.bf16.mxu0 0
        %2582 = vmatpush1.bf16.msra.mxu0 0
        %2583 = vmatprep.subr.bf16.mxu0 0
        %2584 = vmatpush1.bf16.msra.mxu0 0
        %2585 = vmatprep.subr.bf16.mxu0 0
        %2586 = vmatpush1.bf16.msra.mxu0 0
        %2587 = vmatprep.subr.bf16.mxu0 0
        %2588 = vmatpush1.bf16.msra.mxu0 0
        %2589 = vmatprep.subr.bf16.mxu0 0
        %2590 = vmatpush1.bf16.msra.mxu0 0
        %2591 = vmatprep.subr.bf16.mxu0 0
        %2592 = vmatpush1.bf16.msra.mxu0 0
        %2593 = vmatprep.subr.bf16.mxu0 0
        %2594 = vmatpush1.bf16.msra.mxu0 0
        %2595 = vmatprep.subr.bf16.mxu0 0
        %2596 = vmatpush1.bf16.msra.mxu0 0
        %2597 = vmatprep.subr.bf16.mxu0 0
        %2598 = vmatpush1.bf16.msra.mxu0 0
        %2599 = vmatprep.subr.bf16.mxu0 0
        %2600 = vmatpush1.bf16.msra.mxu0 0
        %2601 = vmatprep.subr.bf16.mxu0 0
        %2602 = vmatpush1.bf16.msra.mxu0 0
        %2603 = vmatprep.subr.bf16.mxu0 0
        %2604 = vmatpush1.bf16.msra.mxu0 0
        %2605 = vmatprep.subr.bf16.mxu0 0
        %2606 = vmatpush1.bf16.msra.mxu0 0
        %2607 = vmatprep.subr.bf16.mxu0 0
        %2608 = vmatpush1.bf16.msra.mxu0 0
        %2609 = vmatprep.subr.bf16.mxu0 0
        %2610 = vmatpush1.bf16.msra.mxu0 0
        %2611 = vmatprep.mubr.bf16.mxu0 0
        %2612 = vmatmul.mubr.bf16.gmra.mrb[0].mxu0 %v2577
        %v2613 = vpop.f32.mrb[0].mxu0
        %v2614 = vadd.f32 0.0, %v2613
        %v2615 = vpop.f32.mrb[0].mxu0
        %v2616 = vpop.f32.mrb[0].mxu0
        %v2617 = vpop.f32.mrb[0].mxu0
        %2618 = vdwg.mxu0
        %v2619 = vmul.f32 %v2614, %v284
        %v2620 = vadd.f32 %v2574, %v2619
        %v2621 = vadd.f32 %v2620, %v462
        %v2622 = vsub.f32 0.0, %v2621
        %v2623 = vmul.f32 %v2622, 1.442695
        %v2624 = vpow.pop %v2623
        %v2625 = vadd.f32 %v2624, 1.0
        %v2626 = vrcp.pop %v2625
        %v2627 = vmul.f32 %v2621, %v2626
        %v2629 = vcombine.high %v2627, %v2627
        %v2631 = vunpack.c.l.s4 1966171168
        %v2632 = vunpack.c.0.s8 %v2631
        %v2633 = vlaneseq
        %v2634 = vshrl.u32 %v2633, 7
        %v2635 = vsub.s32 %v2632, %v2634
        %v2636 = vrot.slane %v2627, %v2635
        %v2638 = vunpack.c.l.s4 1966171168
        %v2639 = vunpack.c.0.s8 %v2638
        %v2640 = vlaneseq
        %v2641 = vshrl.u32 %v2640, 7
        %v2642 = vsub.s32 %v2639, %v2641
        %v2643 = vrot.slane %v2629, %v2642
        %v2644 = vcombine.high %v2636, %v2636
        %v2645 = vcombine.high %v2643, %v2643
        %v2647 = vunpack.c.l.s4 1966171168
        %v2648 = vunpack.c.0.s8 %v2647
        %v2649 = vlaneseq
        %v2650 = vshrl.u32 %v2649, 7
        %v2651 = vsub.s32 %v2648, %v2650
        %v2652 = vrot.slane %v2636, %v2651
        %v2654 = vunpack.c.l.s4 1966171168
        %v2655 = vunpack.c.0.s8 %v2654
        %v2656 = vlaneseq
        %v2657 = vshrl.u32 %v2656, 7
        %v2658 = vsub.s32 %v2655, %v2657
        %v2659 = vrot.slane %v2643, %v2658
        %v2661 = vunpack.c.l.s4 1966171168
        %v2662 = vunpack.c.0.s8 %v2661
        %v2663 = vlaneseq
        %v2664 = vshrl.u32 %v2663, 7
        %v2665 = vsub.s32 %v2662, %v2664
        %v2666 = vrot.slane %v2644, %v2665
        %v2668 = vunpack.c.l.s4 1966171168
        %v2669 = vunpack.c.0.s8 %v2668
        %v2670 = vlaneseq
        %v2671 = vshrl.u32 %v2670, 7
        %v2672 = vsub.s32 %v2669, %v2671
        %v2673 = vrot.slane %v2645, %v2672
        %v2674 = vcombine.high %v2652, %v2652
        %v2675 = vcombine.high %v2659, %v2659
        %v2676 = vcombine.high %v2666, %v2666
        %v2677 = vcombine.high %v2673, %v2673
        %2686 = vst.msk [vmem:[%s259 + $0xb] sm:$0x1] %vm529, %v2652
        %2687 = vst.msk [vmem:[%s259 + $0x1b] sm:$0x1] %vm529, %v2666
        %2688 = vst.msk [vmem:[%s259 + $0x2b] sm:$0x1] %vm529, %v2674
        %2689 = vst.msk [vmem:[%s259 + $0x3b] sm:$0x1] %vm529, %v2676
        %2690 = vst.msk [vmem:[%s259 + $0x4b] sm:$0x1] %vm529, %v2659
        %2691 = vst.msk [vmem:[%s259 + $0x5b] sm:$0x1] %vm529, %v2673
        %2692 = vst.msk [vmem:[%s259 + $0x6b] sm:$0x1] %vm529, %v2675
        %2693 = vst.msk [vmem:[%s259 + $0x7b] sm:$0x1] %vm529, %v2677
        %v2694 = vld [vmem:[%s237 + $0x6] sm:$0x1]
        %v2695 = vld [vmem:[%s237 + $0xe] sm:$0x1]
        %v2696 = vld [vmem:[%s237 + $0x16] sm:$0x1]
        %v2697 = vld [vmem:[%s237 + $0x1e] sm:$0x1]
        %v2698 = vpack.c.bf16 %v2694, %v2694
        %v2699 = vpack.c.bf16 %v2695, %v2695
        %v2700 = vpack.c.bf16 %v2696, %v2696
        %v2701 = vpack.c.bf16 %v2697, %v2697
        %v2706 = vunpack.c.l.b16 %v2698
        %v2707 = vunpack.c.l.b16 %v2699
        %v2708 = vunpack.c.l.b16 %v2700
        %v2709 = vunpack.c.l.b16 %v2701
        %v2710 = vrot.slane %v2707, 7
        %v2711 = vsel %vm302, %v2710, %v2706
        %v2712 = vrot.slane %v2708, 6
        %v2713 = vsel %vm305, %v2712, %v2711
        %v2714 = vrot.slane %v2709, 5
        %v2715 = vsel %vm308, %v2714, %v2713
        %v2716 = vpack.c.b16 %v2715, %v2715
        %v2718 = vsel %vm317, %v2716, 0
        %2720 = vmatprep.subr.bf16.mxu0 0
        %2721 = vmatpush1.bf16.msra.mxu0 %v315
        %2722 = vmatprep.subr.bf16.mxu0 0
        %2723 = vmatpush1.bf16.msra.mxu0 0
        %2724 = vmatprep.subr.bf16.mxu0 0
        %2725 = vmatpush1.bf16.msra.mxu0 0
        %2726 = vmatprep.subr.bf16.mxu0 0
        %2727 = vmatpush1.bf16.msra.mxu0 0
        %2728 = vmatprep.subr.bf16.mxu0 0
        %2729 = vmatpush1.bf16.msra.mxu0 0
        %2730 = vmatprep.subr.bf16.mxu0 0
        %2731 = vmatpush1.bf16.msra.mxu0 0
        %2732 = vmatprep.subr.bf16.mxu0 0
        %2733 = vmatpush1.bf16.msra.mxu0 0
        %2734 = vmatprep.subr.bf16.mxu0 0
        %2735 = vmatpush1.bf16.msra.mxu0 0
        %2736 = vmatprep.subr.bf16.mxu0 0
        %2737 = vmatpush1.bf16.msra.mxu0 0
        %2738 = vmatprep.subr.bf16.mxu0 0
        %2739 = vmatpush1.bf16.msra.mxu0 0
        %2740 = vmatprep.subr.bf16.mxu0 0
        %2741 = vmatpush1.bf16.msra.mxu0 0
        %2742 = vmatprep.subr.bf16.mxu0 0
        %2743 = vmatpush1.bf16.msra.mxu0 0
        %2744 = vmatprep.subr.bf16.mxu0 0
        %2745 = vmatpush1.bf16.msra.mxu0 0
        %2746 = vmatprep.subr.bf16.mxu0 0
        %2747 = vmatpush1.bf16.msra.mxu0 0
        %2748 = vmatprep.subr.bf16.mxu0 0
        %2749 = vmatpush1.bf16.msra.mxu0 0
        %2750 = vmatprep.subr.bf16.mxu0 0
        %2751 = vmatpush1.bf16.msra.mxu0 0
        %2752 = vmatprep.mubr.bf16.mxu0 0
        %2753 = vmatmul.mubr.bf16.gmra.mrb[0].mxu0 %v2718
        %v2754 = vpop.f32.mrb[0].mxu0
        %v2755 = vadd.f32 0.0, %v2754
        %v2756 = vpop.f32.mrb[0].mxu0
        %v2757 = vpop.f32.mrb[0].mxu0
        %v2758 = vpop.f32.mrb[0].mxu0
        %2759 = vdwg.mxu0
        %v2760 = vpack.c.bf16 %v2755, %v2755
        %v2761 = vld [vmem:[%s1] sm:$0xf]
        %v2763 = vsel %vm363, %v2761, 0
        %v2766 = vsel %vm367, %v2760, 0
        %2768 = vmatprep.subr.bf16.mxu0 0
        %2769 = vmatpush1.bf16.msra.mxu0 %v2766
        %2770 = vmatprep.subr.bf16.mxu0 0
        %2771 = vmatpush1.bf16.msra.mxu0 0
        %2772 = vmatprep.subr.bf16.mxu0 0
        %2773 = vmatpush1.bf16.msra.mxu0 0
        %2774 = vmatprep.subr.bf16.mxu0 0
        %2775 = vmatpush1.bf16.msra.mxu0 0
        %2776 = vmatprep.subr.bf16.mxu0 0
        %2777 = vmatpush1.bf16.msra.mxu0 0
        %2778 = vmatprep.subr.bf16.mxu0 0
        %2779 = vmatpush1.bf16.msra.mxu0 0
        %2780 = vmatprep.subr.bf16.mxu0 0
        %2781 = vmatpush1.bf16.msra.mxu0 0
        %2782 = vmatprep.subr.bf16.mxu0 0
        %2783 = vmatpush1.bf16.msra.mxu0 0
        %2784 = vmatprep.subr.bf16.mxu0 0
        %2785 = vmatpush1.bf16.msra.mxu0 0
        %2786 = vmatprep.subr.bf16.mxu0 0
        %2787 = vmatpush1.bf16.msra.mxu0 0
        %2788 = vmatprep.subr.bf16.mxu0 0
        %2789 = vmatpush1.bf16.msra.mxu0 0
        %2790 = vmatprep.subr.bf16.mxu0 0
        %2791 = vmatpush1.bf16.msra.mxu0 0
        %2792 = vmatprep.subr.bf16.mxu0 0
        %2793 = vmatpush1.bf16.msra.mxu0 0
        %2794 = vmatprep.subr.bf16.mxu0 0
        %2795 = vmatpush1.bf16.msra.mxu0 0
        %2796 = vmatprep.subr.bf16.mxu0 0
        %2797 = vmatpush1.bf16.msra.mxu0 0
        %2798 = vmatprep.subr.bf16.mxu0 0
        %2799 = vmatpush1.bf16.msra.mxu0 0
        %2800 = vmatprep.mubr.bf16.mxu0 0
        %2801 = vmatmul.mubr.bf16.gmra.mrb[0].mxu0 %v2763
        %v2802 = vpop.f32.mrb[0].mxu0
        %v2803 = vadd.f32 0.0, %v2802
        %v2804 = vpop.f32.mrb[0].mxu0
        %v2805 = vpop.f32.mrb[0].mxu0
        %v2806 = vpop.f32.mrb[0].mxu0
        %2807 = vdwg.mxu0
        %v2808 = vmul.f32 %v2803, %v281
        %v2809 = vld [vmem:[%s412] sm:$0xf]
        %v2811 = vsel %vm363, %v2809, 0
        %2813 = vmatprep.subr.bf16.mxu0 0
        %2814 = vmatpush1.bf16.msra.mxu0 %v2766
        %2815 = vmatprep.subr.bf16.mxu0 0
        %2816 = vmatpush1.bf16.msra.mxu0 0
        %2817 = vmatprep.subr.bf16.mxu0 0
        %2818 = vmatpush1.bf16.msra.mxu0 0
        %2819 = vmatprep.subr.bf16.mxu0 0
        %2820 = vmatpush1.bf16.msra.mxu0 0
        %2821 = vmatprep.subr.bf16.mxu0 0
        %2822 = vmatpush1.bf16.msra.mxu0 0
        %2823 = vmatprep.subr.bf16.mxu0 0
        %2824 = vmatpush1.bf16.msra.mxu0 0
        %2825 = vmatprep.subr.bf16.mxu0 0
        %2826 = vmatpush1.bf16.msra.mxu0 0
        %2827 = vmatprep.subr.bf16.mxu0 0
        %2828 = vmatpush1.bf16.msra.mxu0 0
        %2829 = vmatprep.subr.bf16.mxu0 0
        %2830 = vmatpush1.bf16.msra.mxu0 0
        %2831 = vmatprep.subr.bf16.mxu0 0
        %2832 = vmatpush1.bf16.msra.mxu0 0
        %2833 = vmatprep.subr.bf16.mxu0 0
        %2834 = vmatpush1.bf16.msra.mxu0 0
        %2835 = vmatprep.subr.bf16.mxu0 0
        %2836 = vmatpush1.bf16.msra.mxu0 0
        %2837 = vmatprep.subr.bf16.mxu0 0
        %2838 = vmatpush1.bf16.msra.mxu0 0
        %2839 = vmatprep.subr.bf16.mxu0 0
        %2840 = vmatpush1.bf16.msra.mxu0 0
        %2841 = vmatprep.subr.bf16.mxu0 0
        %2842 = vmatpush1.bf16.msra.mxu0 0
        %2843 = vmatprep.subr.bf16.mxu0 0
        %2844 = vmatpush1.bf16.msra.mxu0 0
        %2845 = vmatprep.mubr.bf16.mxu0 0
        %2846 = vmatmul.mubr.bf16.gmra.mrb[0].mxu0 %v2811
        %v2847 = vpop.f32.mrb[0].mxu0
        %v2848 = vadd.f32 0.0, %v2847
        %v2849 = vpop.f32.mrb[0].mxu0
        %v2850 = vpop.f32.mrb[0].mxu0
        %v2851 = vpop.f32.mrb[0].mxu0
        %2852 = vdwg.mxu0
        %v2853 = vmul.f32 %v2848, %v284
        %v2854 = vadd.f32 %v2808, %v2853
        %v2855 = vadd.f32 %v2854, %v462
        %v2856 = vsub.f32 0.0, %v2855
        %v2857 = vmul.f32 %v2856, 1.442695
        %v2858 = vpow.pop %v2857
        %v2859 = vadd.f32 %v2858, 1.0
        %v2860 = vrcp.pop %v2859
        %v2861 = vmul.f32 %v2855, %v2860
        %v2863 = vcombine.high %v2861, %v2861
        %v2865 = vunpack.c.l.s4 1966171168
        %v2866 = vunpack.c.0.s8 %v2865
        %v2867 = vlaneseq
        %v2868 = vshrl.u32 %v2867, 7
        %v2869 = vsub.s32 %v2866, %v2868
        %v2870 = vrot.slane %v2861, %v2869
        %v2872 = vunpack.c.l.s4 1966171168
        %v2873 = vunpack.c.0.s8 %v2872
        %v2874 = vlaneseq
        %v2875 = vshrl.u32 %v2874, 7
        %v2876 = vsub.s32 %v2873, %v2875
        %v2877 = vrot.slane %v2863, %v2876
        %v2878 = vcombine.high %v2870, %v2870
        %v2879 = vcombine.high %v2877, %v2877
        %v2881 = vunpack.c.l.s4 1966171168
        %v2882 = vunpack.c.0.s8 %v2881
        %v2883 = vlaneseq
        %v2884 = vshrl.u32 %v2883, 7
        %v2885 = vsub.s32 %v2882, %v2884
        %v2886 = vrot.slane %v2870, %v2885
        %v2888 = vunpack.c.l.s4 1966171168
        %v2889 = vunpack.c.0.s8 %v2888
        %v2890 = vlaneseq
        %v2891 = vshrl.u32 %v2890, 7
        %v2892 = vsub.s32 %v2889, %v2891
        %v2893 = vrot.slane %v2877, %v2892
        %v2895 = vunpack.c.l.s4 1966171168
        %v2896 = vunpack.c.0.s8 %v2895
        %v2897 = vlaneseq
        %v2898 = vshrl.u32 %v2897, 7
        %v2899 = vsub.s32 %v2896, %v2898
        %v2900 = vrot.slane %v2878, %v2899
        %v2902 = vunpack.c.l.s4 1966171168
        %v2903 = vunpack.c.0.s8 %v2902
        %v2904 = vlaneseq
        %v2905 = vshrl.u32 %v2904, 7
        %v2906 = vsub.s32 %v2903, %v2905
        %v2907 = vrot.slane %v2879, %v2906
        %v2908 = vcombine.high %v2886, %v2886
        %v2909 = vcombine.high %v2893, %v2893
        %v2910 = vcombine.high %v2900, %v2900
        %v2911 = vcombine.high %v2907, %v2907
        %2920 = vst.msk [vmem:[%s259 + $0xc] sm:$0x1] %vm529, %v2886
        %2921 = vst.msk [vmem:[%s259 + $0x1c] sm:$0x1] %vm529, %v2900
        %2922 = vst.msk [vmem:[%s259 + $0x2c] sm:$0x1] %vm529, %v2908
        %2923 = vst.msk [vmem:[%s259 + $0x3c] sm:$0x1] %vm529, %v2910
        %2924 = vst.msk [vmem:[%s259 + $0x4c] sm:$0x1] %vm529, %v2893
        %2925 = vst.msk [vmem:[%s259 + $0x5c] sm:$0x1] %vm529, %v2907
        %2926 = vst.msk [vmem:[%s259 + $0x6c] sm:$0x1] %vm529, %v2909
        %2927 = vst.msk [vmem:[%s259 + $0x7c] sm:$0x1] %vm529, %v2911
        %v2928 = vld [vmem:[%s538] sm:$0xf]
        %v2930 = vsel %vm363, %v2928, 0
        %2932 = vmatprep.subr.bf16.mxu0 0
        %2933 = vmatpush1.bf16.msra.mxu0 %v2766
        %2934 = vmatprep.subr.bf16.mxu0 0
        %2935 = vmatpush1.bf16.msra.mxu0 0
        %2936 = vmatprep.subr.bf16.mxu0 0
        %2937 = vmatpush1.bf16.msra.mxu0 0
        %2938 = vmatprep.subr.bf16.mxu0 0
        %2939 = vmatpush1.bf16.msra.mxu0 0
        %2940 = vmatprep.subr.bf16.mxu0 0
        %2941 = vmatpush1.bf16.msra.mxu0 0
        %2942 = vmatprep.subr.bf16.mxu0 0
        %2943 = vmatpush1.bf16.msra.mxu0 0
        %2944 = vmatprep.subr.bf16.mxu0 0
        %2945 = vmatpush1.bf16.msra.mxu0 0
        %2946 = vmatprep.subr.bf16.mxu0 0
        %2947 = vmatpush1.bf16.msra.mxu0 0
        %2948 = vmatprep.subr.bf16.mxu0 0
        %2949 = vmatpush1.bf16.msra.mxu0 0
        %2950 = vmatprep.subr.bf16.mxu0 0
        %2951 = vmatpush1.bf16.msra.mxu0 0
        %2952 = vmatprep.subr.bf16.mxu0 0
        %2953 = vmatpush1.bf16.msra.mxu0 0
        %2954 = vmatprep.subr.bf16.mxu0 0
        %2955 = vmatpush1.bf16.msra.mxu0 0
        %2956 = vmatprep.subr.bf16.mxu0 0
        %2957 = vmatpush1.bf16.msra.mxu0 0
        %2958 = vmatprep.subr.bf16.mxu0 0
        %2959 = vmatpush1.bf16.msra.mxu0 0
        %2960 = vmatprep.subr.bf16.mxu0 0
        %2961 = vmatpush1.bf16.msra.mxu0 0
        %2962 = vmatprep.subr.bf16.mxu0 0
        %2963 = vmatpush1.bf16.msra.mxu0 0
        %2964 = vmatprep.mubr.bf16.mxu0 0
        %2965 = vmatmul.mubr.bf16.gmra.mrb[0].mxu0 %v2930
        %v2966 = vpop.f32.mrb[0].mxu0
        %v2967 = vadd.f32 0.0, %v2966
        %v2968 = vpop.f32.mrb[0].mxu0
        %v2969 = vpop.f32.mrb[0].mxu0
        %v2970 = vpop.f32.mrb[0].mxu0
        %2971 = vdwg.mxu0
        %v2972 = vmul.f32 %v2967, %v281
        %v2973 = vld [vmem:[%s584] sm:$0xf]
        %v2975 = vsel %vm363, %v2973, 0
        %2977 = vmatprep.subr.bf16.mxu0 0
        %2978 = vmatpush1.bf16.msra.mxu0 %v2766
        %2979 = vmatprep.subr.bf16.mxu0 0
        %2980 = vmatpush1.bf16.msra.mxu0 0
        %2981 = vmatprep.subr.bf16.mxu0 0
        %2982 = vmatpush1.bf16.msra.mxu0 0
        %2983 = vmatprep.subr.bf16.mxu0 0
        %2984 = vmatpush1.bf16.msra.mxu0 0
        %2985 = vmatprep.subr.bf16.mxu0 0
        %2986 = vmatpush1.bf16.msra.mxu0 0
        %2987 = vmatprep.subr.bf16.mxu0 0
        %2988 = vmatpush1.bf16.msra.mxu0 0
        %2989 = vmatprep.subr.bf16.mxu0 0
        %2990 = vmatpush1.bf16.msra.mxu0 0
        %2991 = vmatprep.subr.bf16.mxu0 0
        %2992 = vmatpush1.bf16.msra.mxu0 0
        %2993 = vmatprep.subr.bf16.mxu0 0
        %2994 = vmatpush1.bf16.msra.mxu0 0
        %2995 = vmatprep.subr.bf16.mxu0 0
        %2996 = vmatpush1.bf16.msra.mxu0 0
        %2997 = vmatprep.subr.bf16.mxu0 0
        %2998 = vmatpush1.bf16.msra.mxu0 0
        %2999 = vmatprep.subr.bf16.mxu0 0
        %3000 = vmatpush1.bf16.msra.mxu0 0
        %3001 = vmatprep.subr.bf16.mxu0 0
        %3002 = vmatpush1.bf16.msra.mxu0 0
        %3003 = vmatprep.subr.bf16.mxu0 0
        %3004 = vmatpush1.bf16.msra.mxu0 0
        %3005 = vmatprep.subr.bf16.mxu0 0
        %3006 = vmatpush1.bf16.msra.mxu0 0
        %3007 = vmatprep.subr.bf16.mxu0 0
        %3008 = vmatpush1.bf16.msra.mxu0 0
        %3009 = vmatprep.mubr.bf16.mxu0 0
        %3010 = vmatmul.mubr.bf16.gmra.mrb[0].mxu0 %v2975
        %v3011 = vpop.f32.mrb[0].mxu0
        %v3012 = vadd.f32 0.0, %v3011
        %v3013 = vpop.f32.mrb[0].mxu0
        %v3014 = vpop.f32.mrb[0].mxu0
        %v3015 = vpop.f32.mrb[0].mxu0
        %3016 = vdwg.mxu0
        %v3017 = vmul.f32 %v3012, %v284
        %v3018 = vadd.f32 %v2972, %v3017
        %v3019 = vadd.f32 %v3018, %v462
        %v3020 = vsub.f32 0.0, %v3019
        %v3021 = vmul.f32 %v3020, 1.442695
        %v3022 = vpow.pop %v3021
        %v3023 = vadd.f32 %v3022, 1.0
        %v3024 = vrcp.pop %v3023
        %v3025 = vmul.f32 %v3019, %v3024
        %v3027 = vcombine.high %v3025, %v3025
        %v3029 = vunpack.c.l.s4 1966171168
        %v3030 = vunpack.c.0.s8 %v3029
        %v3031 = vlaneseq
        %v3032 = vshrl.u32 %v3031, 7
        %v3033 = vsub.s32 %v3030, %v3032
        %v3034 = vrot.slane %v3025, %v3033
        %v3036 = vunpack.c.l.s4 1966171168
        %v3037 = vunpack.c.0.s8 %v3036
        %v3038 = vlaneseq
        %v3039 = vshrl.u32 %v3038, 7
        %v3040 = vsub.s32 %v3037, %v3039
        %v3041 = vrot.slane %v3027, %v3040
        %v3042 = vcombine.high %v3034, %v3034
        %v3043 = vcombine.high %v3041, %v3041
        %v3045 = vunpack.c.l.s4 1966171168
        %v3046 = vunpack.c.0.s8 %v3045
        %v3047 = vlaneseq
        %v3048 = vshrl.u32 %v3047, 7
        %v3049 = vsub.s32 %v3046, %v3048
        %v3050 = vrot.slane %v3034, %v3049
        %v3052 = vunpack.c.l.s4 1966171168
        %v3053 = vunpack.c.0.s8 %v3052
        %v3054 = vlaneseq
        %v3055 = vshrl.u32 %v3054, 7
        %v3056 = vsub.s32 %v3053, %v3055
        %v3057 = vrot.slane %v3041, %v3056
        %v3059 = vunpack.c.l.s4 1966171168
        %v3060 = vunpack.c.0.s8 %v3059
        %v3061 = vlaneseq
        %v3062 = vshrl.u32 %v3061, 7
        %v3063 = vsub.s32 %v3060, %v3062
        %v3064 = vrot.slane %v3042, %v3063
        %v3066 = vunpack.c.l.s4 1966171168
        %v3067 = vunpack.c.0.s8 %v3066
        %v3068 = vlaneseq
        %v3069 = vshrl.u32 %v3068, 7
        %v3070 = vsub.s32 %v3067, %v3069
        %v3071 = vrot.slane %v3043, %v3070
        %v3072 = vcombine.high %v3050, %v3050
        %v3073 = vcombine.high %v3057, %v3057
        %v3074 = vcombine.high %v3064, %v3064
        %v3075 = vcombine.high %v3071, %v3071
        %3084 = vst.msk [vmem:[%s259 + $0xd] sm:$0x1] %vm529, %v3050
        %3085 = vst.msk [vmem:[%s259 + $0x1d] sm:$0x1] %vm529, %v3064
        %3086 = vst.msk [vmem:[%s259 + $0x2d] sm:$0x1] %vm529, %v3072
        %3087 = vst.msk [vmem:[%s259 + $0x3d] sm:$0x1] %vm529, %v3074
        %3088 = vst.msk [vmem:[%s259 + $0x4d] sm:$0x1] %vm529, %v3057
        %3089 = vst.msk [vmem:[%s259 + $0x5d] sm:$0x1] %vm529, %v3071
        %3090 = vst.msk [vmem:[%s259 + $0x6d] sm:$0x1] %vm529, %v3073
        %3091 = vst.msk [vmem:[%s259 + $0x7d] sm:$0x1] %vm529, %v3075
        %v3092 = vld [vmem:[%s237 + $0x7] sm:$0x1]
        %v3093 = vld [vmem:[%s237 + $0xf] sm:$0x1]
        %v3094 = vld [vmem:[%s237 + $0x17] sm:$0x1]
        %v3095 = vld [vmem:[%s237 + $0x1f] sm:$0x1]
        %v3096 = vpack.c.bf16 %v3092, %v3092
        %v3097 = vpack.c.bf16 %v3093, %v3093
        %v3098 = vpack.c.bf16 %v3094, %v3094
        %v3099 = vpack.c.bf16 %v3095, %v3095
        %v3104 = vunpack.c.l.b16 %v3096
        %v3105 = vunpack.c.l.b16 %v3097
        %v3106 = vunpack.c.l.b16 %v3098
        %v3107 = vunpack.c.l.b16 %v3099
        %v3108 = vrot.slane %v3105, 7
        %v3109 = vsel %vm302, %v3108, %v3104
        %v3110 = vrot.slane %v3106, 6
        %v3111 = vsel %vm305, %v3110, %v3109
        %v3112 = vrot.slane %v3107, 5
        %v3113 = vsel %vm308, %v3112, %v3111
        %v3114 = vpack.c.b16 %v3113, %v3113
        %v3116 = vsel %vm317, %v3114, 0
        %3118 = vmatprep.subr.bf16.mxu0 0
        %3119 = vmatpush1.bf16.msra.mxu0 %v315
        %3120 = vmatprep.subr.bf16.mxu0 0
        %3121 = vmatpush1.bf16.msra.mxu0 0
        %3122 = vmatprep.subr.bf16.mxu0 0
        %3123 = vmatpush1.bf16.msra.mxu0 0
        %3124 = vmatprep.subr.bf16.mxu0 0
        %3125 = vmatpush1.bf16.msra.mxu0 0
        %3126 = vmatprep.subr.bf16.mxu0 0
        %3127 = vmatpush1.bf16.msra.mxu0 0
        %3128 = vmatprep.subr.bf16.mxu0 0
        %3129 = vmatpush1.bf16.msra.mxu0 0
        %3130 = vmatprep.subr.bf16.mxu0 0
        %3131 = vmatpush1.bf16.msra.mxu0 0
        %3132 = vmatprep.subr.bf16.mxu0 0
        %3133 = vmatpush1.bf16.msra.mxu0 0
        %3134 = vmatprep.subr.bf16.mxu0 0
        %3135 = vmatpush1.bf16.msra.mxu0 0
        %3136 = vmatprep.subr.bf16.mxu0 0
        %3137 = vmatpush1.bf16.msra.mxu0 0
        %3138 = vmatprep.subr.bf16.mxu0 0
        %3139 = vmatpush1.bf16.msra.mxu0 0
        %3140 = vmatprep.subr.bf16.mxu0 0
        %3141 = vmatpush1.bf16.msra.mxu0 0
        %3142 = vmatprep.subr.bf16.mxu0 0
        %3143 = vmatpush1.bf16.msra.mxu0 0
        %3144 = vmatprep.subr.bf16.mxu0 0
        %3145 = vmatpush1.bf16.msra.mxu0 0
        %3146 = vmatprep.subr.bf16.mxu0 0
        %3147 = vmatpush1.bf16.msra.mxu0 0
        %3148 = vmatprep.subr.bf16.mxu0 0
        %3149 = vmatpush1.bf16.msra.mxu0 0
        %3150 = vmatprep.mubr.bf16.mxu0 0
        %3151 = vmatmul.mubr.bf16.gmra.mrb[0].mxu0 %v3116
        %v3152 = vpop.f32.mrb[0].mxu0
        %v3153 = vadd.f32 0.0, %v3152
        %v3154 = vpop.f32.mrb[0].mxu0
        %v3155 = vpop.f32.mrb[0].mxu0
        %v3156 = vpop.f32.mrb[0].mxu0
        %3157 = vdwg.mxu0
        %v3158 = vpack.c.bf16 %v3153, %v3153
        %v3159 = vld [vmem:[%s1] sm:$0xf]
        %v3161 = vsel %vm363, %v3159, 0
        %v3164 = vsel %vm367, %v3158, 0
        %3166 = vmatprep.subr.bf16.mxu0 0
        %3167 = vmatpush1.bf16.msra.mxu0 %v3164
        %3168 = vmatprep.subr.bf16.mxu0 0
        %3169 = vmatpush1.bf16.msra.mxu0 0
        %3170 = vmatprep.subr.bf16.mxu0 0
        %3171 = vmatpush1.bf16.msra.mxu0 0
        %3172 = vmatprep.subr.bf16.mxu0 0
        %3173 = vmatpush1.bf16.msra.mxu0 0
        %3174 = vmatprep.subr.bf16.mxu0 0
        %3175 = vmatpush1.bf16.msra.mxu0 0
        %3176 = vmatprep.subr.bf16.mxu0 0
        %3177 = vmatpush1.bf16.msra.mxu0 0
        %3178 = vmatprep.subr.bf16.mxu0 0
        %3179 = vmatpush1.bf16.msra.mxu0 0
        %3180 = vmatprep.subr.bf16.mxu0 0
        %3181 = vmatpush1.bf16.msra.mxu0 0
        %3182 = vmatprep.subr.bf16.mxu0 0
        %3183 = vmatpush1.bf16.msra.mxu0 0
        %3184 = vmatprep.subr.bf16.mxu0 0
        %3185 = vmatpush1.bf16.msra.mxu0 0
        %3186 = vmatprep.subr.bf16.mxu0 0
        %3187 = vmatpush1.bf16.msra.mxu0 0
        %3188 = vmatprep.subr.bf16.mxu0 0
        %3189 = vmatpush1.bf16.msra.mxu0 0
        %3190 = vmatprep.subr.bf16.mxu0 0
        %3191 = vmatpush1.bf16.msra.mxu0 0
        %3192 = vmatprep.subr.bf16.mxu0 0
        %3193 = vmatpush1.bf16.msra.mxu0 0
        %3194 = vmatprep.subr.bf16.mxu0 0
        %3195 = vmatpush1.bf16.msra.mxu0 0
        %3196 = vmatprep.subr.bf16.mxu0 0
        %3197 = vmatpush1.bf16.msra.mxu0 0
        %3198 = vmatprep.mubr.bf16.mxu0 0
        %3199 = vmatmul.mubr.bf16.gmra.mrb[0].mxu0 %v3161
        %v3200 = vpop.f32.mrb[0].mxu0
        %v3201 = vadd.f32 0.0, %v3200
        %v3202 = vpop.f32.mrb[0].mxu0
        %v3203 = vpop.f32.mrb[0].mxu0
        %v3204 = vpop.f32.mrb[0].mxu0
        %3205 = vdwg.mxu0
        %v3206 = vmul.f32 %v3201, %v281
        %v3207 = vld [vmem:[%s412] sm:$0xf]
        %v3209 = vsel %vm363, %v3207, 0
        %3211 = vmatprep.subr.bf16.mxu0 0
        %3212 = vmatpush1.bf16.msra.mxu0 %v3164
        %3213 = vmatprep.subr.bf16.mxu0 0
        %3214 = vmatpush1.bf16.msra.mxu0 0
        %3215 = vmatprep.subr.bf16.mxu0 0
        %3216 = vmatpush1.bf16.msra.mxu0 0
        %3217 = vmatprep.subr.bf16.mxu0 0
        %3218 = vmatpush1.bf16.msra.mxu0 0
        %3219 = vmatprep.subr.bf16.mxu0 0
        %3220 = vmatpush1.bf16.msra.mxu0 0
        %3221 = vmatprep.subr.bf16.mxu0 0
        %3222 = vmatpush1.bf16.msra.mxu0 0
        %3223 = vmatprep.subr.bf16.mxu0 0
        %3224 = vmatpush1.bf16.msra.mxu0 0
        %3225 = vmatprep.subr.bf16.mxu0 0
        %3226 = vmatpush1.bf16.msra.mxu0 0
        %3227 = vmatprep.subr.bf16.mxu0 0
        %3228 = vmatpush1.bf16.msra.mxu0 0
        %3229 = vmatprep.subr.bf16.mxu0 0
        %3230 = vmatpush1.bf16.msra.mxu0 0
        %3231 = vmatprep.subr.bf16.mxu0 0
        %3232 = vmatpush1.bf16.msra.mxu0 0
        %3233 = vmatprep.subr.bf16.mxu0 0
        %3234 = vmatpush1.bf16.msra.mxu0 0
        %3235 = vmatprep.subr.bf16.mxu0 0
        %3236 = vmatpush1.bf16.msra.mxu0 0
        %3237 = vmatprep.subr.bf16.mxu0 0
        %3238 = vmatpush1.bf16.msra.mxu0 0
        %3239 = vmatprep.subr.bf16.mxu0 0
        %3240 = vmatpush1.bf16.msra.mxu0 0
        %3241 = vmatprep.subr.bf16.mxu0 0
        %3242 = vmatpush1.bf16.msra.mxu0 0
        %3243 = vmatprep.mubr.bf16.mxu0 0
        %3244 = vmatmul.mubr.bf16.gmra.mrb[0].mxu0 %v3209
        %v3245 = vpop.f32.mrb[0].mxu0
        %v3246 = vadd.f32 0.0, %v3245
        %v3247 = vpop.f32.mrb[0].mxu0
        %v3248 = vpop.f32.mrb[0].mxu0
        %v3249 = vpop.f32.mrb[0].mxu0
        %3250 = vdwg.mxu0
        %v3251 = vmul.f32 %v3246, %v284
        %v3252 = vadd.f32 %v3206, %v3251
        %v3253 = vadd.f32 %v3252, %v462
        %v3254 = vsub.f32 0.0, %v3253
        %v3255 = vmul.f32 %v3254, 1.442695
        %v3256 = vpow.pop %v3255
        %v3257 = vadd.f32 %v3256, 1.0
        %v3258 = vrcp.pop %v3257
        %v3259 = vmul.f32 %v3253, %v3258
        %v3261 = vcombine.high %v3259, %v3259
        %v3263 = vunpack.c.l.s4 1966171168
        %v3264 = vunpack.c.0.s8 %v3263
        %v3265 = vlaneseq
        %v3266 = vshrl.u32 %v3265, 7
        %v3267 = vsub.s32 %v3264, %v3266
        %v3268 = vrot.slane %v3259, %v3267
        %v3270 = vunpack.c.l.s4 1966171168
        %v3271 = vunpack.c.0.s8 %v3270
        %v3272 = vlaneseq
        %v3273 = vshrl.u32 %v3272, 7
        %v3274 = vsub.s32 %v3271, %v3273
        %v3275 = vrot.slane %v3261, %v3274
        %v3276 = vcombine.high %v3268, %v3268
        %v3277 = vcombine.high %v3275, %v3275
        %v3279 = vunpack.c.l.s4 1966171168
        %v3280 = vunpack.c.0.s8 %v3279
        %v3281 = vlaneseq
        %v3282 = vshrl.u32 %v3281, 7
        %v3283 = vsub.s32 %v3280, %v3282
        %v3284 = vrot.slane %v3268, %v3283
        %v3286 = vunpack.c.l.s4 1966171168
        %v3287 = vunpack.c.0.s8 %v3286
        %v3288 = vlaneseq
        %v3289 = vshrl.u32 %v3288, 7
        %v3290 = vsub.s32 %v3287, %v3289
        %v3291 = vrot.slane %v3275, %v3290
        %v3293 = vunpack.c.l.s4 1966171168
        %v3294 = vunpack.c.0.s8 %v3293
        %v3295 = vlaneseq
        %v3296 = vshrl.u32 %v3295, 7
        %v3297 = vsub.s32 %v3294, %v3296
        %v3298 = vrot.slane %v3276, %v3297
        %v3300 = vunpack.c.l.s4 1966171168
        %v3301 = vunpack.c.0.s8 %v3300
        %v3302 = vlaneseq
        %v3303 = vshrl.u32 %v3302, 7
        %v3304 = vsub.s32 %v3301, %v3303
        %v3305 = vrot.slane %v3277, %v3304
        %v3306 = vcombine.high %v3284, %v3284
        %v3307 = vcombine.high %v3291, %v3291
        %v3308 = vcombine.high %v3298, %v3298
        %v3309 = vcombine.high %v3305, %v3305
        %3318 = vst.msk [vmem:[%s259 + $0xe] sm:$0x1] %vm529, %v3284
        %3319 = vst.msk [vmem:[%s259 + $0x1e] sm:$0x1] %vm529, %v3298
        %3320 = vst.msk [vmem:[%s259 + $0x2e] sm:$0x1] %vm529, %v3306
        %3321 = vst.msk [vmem:[%s259 + $0x3e] sm:$0x1] %vm529, %v3308
        %3322 = vst.msk [vmem:[%s259 + $0x4e] sm:$0x1] %vm529, %v3291
        %3323 = vst.msk [vmem:[%s259 + $0x5e] sm:$0x1] %vm529, %v3305
        %3324 = vst.msk [vmem:[%s259 + $0x6e] sm:$0x1] %vm529, %v3307
        %3325 = vst.msk [vmem:[%s259 + $0x7e] sm:$0x1] %vm529, %v3309
        %v3326 = vld [vmem:[%s538] sm:$0xf]
        %v3328 = vsel %vm363, %v3326, 0
        %3330 = vmatprep.subr.bf16.mxu0 0
        %3331 = vmatpush1.bf16.msra.mxu0 %v3164
        %3332 = vmatprep.subr.bf16.mxu0 0
        %3333 = vmatpush1.bf16.msra.mxu0 0
        %3334 = vmatprep.subr.bf16.mxu0 0
        %3335 = vmatpush1.bf16.msra.mxu0 0
        %3336 = vmatprep.subr.bf16.mxu0 0
        %3337 = vmatpush1.bf16.msra.mxu0 0
        %3338 = vmatprep.subr.bf16.mxu0 0
        %3339 = vmatpush1.bf16.msra.mxu0 0
        %3340 = vmatprep.subr.bf16.mxu0 0
        %3341 = vmatpush1.bf16.msra.mxu0 0
        %3342 = vmatprep.subr.bf16.mxu0 0
        %3343 = vmatpush1.bf16.msra.mxu0 0
        %3344 = vmatprep.subr.bf16.mxu0 0
        %3345 = vmatpush1.bf16.msra.mxu0 0
        %3346 = vmatprep.subr.bf16.mxu0 0
        %3347 = vmatpush1.bf16.msra.mxu0 0
        %3348 = vmatprep.subr.bf16.mxu0 0
        %3349 = vmatpush1.bf16.msra.mxu0 0
        %3350 = vmatprep.subr.bf16.mxu0 0
        %3351 = vmatpush1.bf16.msra.mxu0 0
        %3352 = vmatprep.subr.bf16.mxu0 0
        %3353 = vmatpush1.bf16.msra.mxu0 0
        %3354 = vmatprep.subr.bf16.mxu0 0
        %3355 = vmatpush1.bf16.msra.mxu0 0
        %3356 = vmatprep.subr.bf16.mxu0 0
        %3357 = vmatpush1.bf16.msra.mxu0 0
        %3358 = vmatprep.subr.bf16.mxu0 0
        %3359 = vmatpush1.bf16.msra.mxu0 0
        %3360 = vmatprep.subr.bf16.mxu0 0
        %3361 = vmatpush1.bf16.msra.mxu0 0
        %3362 = vmatprep.mubr.bf16.mxu0 0
        %3363 = vmatmul.mubr.bf16.gmra.mrb[0].mxu0 %v3328
        %v3364 = vpop.f32.mrb[0].mxu0
        %v3365 = vadd.f32 0.0, %v3364
        %v3366 = vpop.f32.mrb[0].mxu0
        %v3367 = vpop.f32.mrb[0].mxu0
        %v3368 = vpop.f32.mrb[0].mxu0
        %3369 = vdwg.mxu0
        %v3370 = vmul.f32 %v3365, %v281
        %v3371 = vld [vmem:[%s584] sm:$0xf]
        %v3373 = vsel %vm363, %v3371, 0
        %3375 = vmatprep.subr.bf16.mxu0 0
        %3376 = vmatpush1.bf16.msra.mxu0 %v3164
        %3377 = vmatprep.subr.bf16.mxu0 0
        %3378 = vmatpush1.bf16.msra.mxu0 0
        %3379 = vmatprep.subr.bf16.mxu0 0
        %3380 = vmatpush1.bf16.msra.mxu0 0
        %3381 = vmatprep.subr.bf16.mxu0 0
        %3382 = vmatpush1.bf16.msra.mxu0 0
        %3383 = vmatprep.subr.bf16.mxu0 0
        %3384 = vmatpush1.bf16.msra.mxu0 0
        %3385 = vmatprep.subr.bf16.mxu0 0
        %3386 = vmatpush1.bf16.msra.mxu0 0
        %3387 = vmatprep.subr.bf16.mxu0 0
        %3388 = vmatpush1.bf16.msra.mxu0 0
        %3389 = vmatprep.subr.bf16.mxu0 0
        %3390 = vmatpush1.bf16.msra.mxu0 0
        %3391 = vmatprep.subr.bf16.mxu0 0
        %3392 = vmatpush1.bf16.msra.mxu0 0
        %3393 = vmatprep.subr.bf16.mxu0 0
        %3394 = vmatpush1.bf16.msra.mxu0 0
        %3395 = vmatprep.subr.bf16.mxu0 0
        %3396 = vmatpush1.bf16.msra.mxu0 0
        %3397 = vmatprep.subr.bf16.mxu0 0
        %3398 = vmatpush1.bf16.msra.mxu0 0
        %3399 = vmatprep.subr.bf16.mxu0 0
        %3400 = vmatpush1.bf16.msra.mxu0 0
        %3401 = vmatprep.subr.bf16.mxu0 0
        %3402 = vmatpush1.bf16.msra.mxu0 0
        %3403 = vmatprep.subr.bf16.mxu0 0
        %3404 = vmatpush1.bf16.msra.mxu0 0
        %3405 = vmatprep.subr.bf16.mxu0 0
        %3406 = vmatpush1.bf16.msra.mxu0 0
        %3407 = vmatprep.mubr.bf16.mxu0 0
        %3408 = vmatmul.mubr.bf16.gmra.mrb[0].mxu0 %v3373
        %v3409 = vpop.f32.mrb[0].mxu0
        %v3410 = vadd.f32 0.0, %v3409
        %v3411 = vpop.f32.mrb[0].mxu0
        %v3412 = vpop.f32.mrb[0].mxu0
        %v3413 = vpop.f32.mrb[0].mxu0
        %3414 = vdwg.mxu0
        %v3415 = vmul.f32 %v3410, %v284
        %v3416 = vadd.f32 %v3370, %v3415
        %v3417 = vadd.f32 %v3416, %v462
        %v3418 = vsub.f32 0.0, %v3417
        %v3419 = vmul.f32 %v3418, 1.442695
        %v3420 = vpow.pop %v3419
        %v3421 = vadd.f32 %v3420, 1.0
        %v3422 = vrcp.pop %v3421
        %v3423 = vmul.f32 %v3417, %v3422
        %v3425 = vcombine.high %v3423, %v3423
        %v3427 = vunpack.c.l.s4 1966171168
        %v3428 = vunpack.c.0.s8 %v3427
        %v3429 = vlaneseq
        %v3430 = vshrl.u32 %v3429, 7
        %v3431 = vsub.s32 %v3428, %v3430
        %v3432 = vrot.slane %v3423, %v3431
        %v3434 = vunpack.c.l.s4 1966171168
        %v3435 = vunpack.c.0.s8 %v3434
        %v3436 = vlaneseq
        %v3437 = vshrl.u32 %v3436, 7
        %v3438 = vsub.s32 %v3435, %v3437
        %v3439 = vrot.slane %v3425, %v3438
        %v3440 = vcombine.high %v3432, %v3432
        %v3441 = vcombine.high %v3439, %v3439
        %v3443 = vunpack.c.l.s4 1966171168
        %v3444 = vunpack.c.0.s8 %v3443
        %v3445 = vlaneseq
        %v3446 = vshrl.u32 %v3445, 7
        %v3447 = vsub.s32 %v3444, %v3446
        %v3448 = vrot.slane %v3432, %v3447
        %v3450 = vunpack.c.l.s4 1966171168
        %v3451 = vunpack.c.0.s8 %v3450
        %v3452 = vlaneseq
        %v3453 = vshrl.u32 %v3452, 7
        %v3454 = vsub.s32 %v3451, %v3453
        %v3455 = vrot.slane %v3439, %v3454
        %v3457 = vunpack.c.l.s4 1966171168
        %v3458 = vunpack.c.0.s8 %v3457
        %v3459 = vlaneseq
        %v3460 = vshrl.u32 %v3459, 7
        %v3461 = vsub.s32 %v3458, %v3460
        %v3462 = vrot.slane %v3440, %v3461
        %v3464 = vunpack.c.l.s4 1966171168
        %v3465 = vunpack.c.0.s8 %v3464
        %v3466 = vlaneseq
        %v3467 = vshrl.u32 %v3466, 7
        %v3468 = vsub.s32 %v3465, %v3467
        %v3469 = vrot.slane %v3441, %v3468
        %v3470 = vcombine.high %v3448, %v3448
        %v3471 = vcombine.high %v3455, %v3455
        %v3472 = vcombine.high %v3462, %v3462
        %v3473 = vcombine.high %v3469, %v3469
        %3482 = vst.msk [vmem:[%s259 + $0xf] sm:$0x1] %vm529, %v3448
        %3483 = vst.msk [vmem:[%s259 + $0x1f] sm:$0x1] %vm529, %v3462
        %3484 = vst.msk [vmem:[%s259 + $0x2f] sm:$0x1] %vm529, %v3470
        %3485 = vst.msk [vmem:[%s259 + $0x3f] sm:$0x1] %vm529, %v3472
        %3486 = vst.msk [vmem:[%s259 + $0x4f] sm:$0x1] %vm529, %v3455
        %3487 = vst.msk [vmem:[%s259 + $0x5f] sm:$0x1] %vm529, %v3469
        %3488 = vst.msk [vmem:[%s259 + $0x6f] sm:$0x1] %vm529, %v3471
        %3489 = vst.msk [vmem:[%s259 + $0x7f] sm:$0x1] %vm529, %v3473
        %s3490 = sand.u32 %s131, 1
        %s3491 = scalar_lea.sflag [#allocation4], %s3490
        %s3492 = sand.u32 %s131, 1
        %s3493 = smul.addr %s3492, 128
        %s3494 = scalar_lea.vmem [#allocation3], %s3493
        // Predicated region
        $region75: #{conv_transpose_bn_silu.1} parent=69 // pred_check
          %p3495 = pneg %p141
        $region76: #{conv_transpose_bn_silu.1} parent=69 // pred_check_branch
          %3497 = sbr.rel (%p3495) target = $region78
        $region77: #{conv_transpose_bn_silu.1} parent=69 // pred_region
          #allocation6 [shape = 'u32[6]{0}', space=smem, size = 0x18, scoped, tag = 'DMA stride descriptor']
          %s3498 = smul.u32 2, %s23
          %s3500 = ssub.s32 2048, 2048
          %3501 = vsyncadd %s3491, %s3500
          %s3502 = smul.addr %s22, 32
          %s3503 = sadd.s32 %s3498, %s3502
          %s3504 = smul.addr %s3503, 128
          %s3505 = scalar_lea.hbm %s4, %s3504
          %s3507 = sshll.u32 1, 14
          %s3508 = sxor.u32 4294967295, %s3507
          %s3511 = sshll.u32 7, 18
          %s3512 = sxor.u32 4294967295, %s3511
          %s3513 = sand.u32 0, %s3512
          %s3515 = sor.u32 %s3513, 0
          %s3517 = sshll.u32 3, 24
          %s3518 = sxor.u32 4294967295, %s3517
          %s3519 = sand.u32 %s3515, %s3518
          %s3521 = sor.u32 %s3519, 0
          %s3522 = sshll.u32 %s3494, 4
          %s3523 = int_to_ptr.vmem [resolvable:$true] %s3522
          %3529 = sst [smem:[#allocation6]] 256
          %s3530 = scalar_lea.smem [#allocation6], 1
          %3531 = sst [smem:[%s3530]] 512
          %s3532 = scalar_lea.smem [#allocation6], 2
          %3533 = sst [smem:[%s3532]] 2
          %s3534 = scalar_lea.smem [#allocation6], 3
          %3535 = sst [smem:[%s3534]] 128
          %s3536 = scalar_lea.smem [#allocation6], 4
          %3537 = sst [smem:[%s3536]] 128
          %s3538 = scalar_lea.smem [#allocation6], 5
          %3539 = sst [smem:[%s3538]] 8
          %3541 = dma.general %s3523, 2048, %s3505, %s3491, [#allocation5], [#allocation6], %s3521, 0
        $region78: #{conv_transpose_bn_silu.1} parent=69 // pred_fallthru
          _
      $region70: #{conv_transpose_bn_silu.1} parent=5 // pred_fallthru
        _
      %p3542 = scmp.le.s32.totalorder 2, %s13
      // Predicated region
      $region79: #{conv_transpose_bn_silu.1} parent=5 // pred_check
        %p3543 = pneg %p3542
      $region80: #{conv_transpose_bn_silu.1} parent=5 // pred_check_branch
        %3545 = sbr.rel (%p3543) target = $region82
      $region81: #{conv_transpose_bn_silu.1} parent=5 // pred_region
        %s3546 = ssub.s32 %s13, 2
        // Predicated region
        $region83: #{conv_transpose_bn_silu.1} parent=81 // pred_check
          %p3547 = pneg %p147
        $region84: #{conv_transpose_bn_silu.1} parent=81 // pred_check_branch
          %3549 = sbr.rel (%p3547) target = $region86
        $region85: #{conv_transpose_bn_silu.1} parent=81 // pred_region
          %s3550 = sand.u32 %s132, 1
          %s3551 = scalar_lea.sflag [#allocation4], %s3550
          %s3552 = sand.u32 %s132, 1
          %s3553 = smul.addr %s3552, 128
          %s3554 = scalar_lea.vmem [#allocation3], %s3553
          %3555 = dma.done %s3551, 2048
        $region86: #{conv_transpose_bn_silu.1} parent=81 // pred_fallthru
          _
      $region82: #{conv_transpose_bn_silu.1} parent=5 // pred_fallthru
        _
    $region6: #{conv_transpose_bn_silu.1} parent=1 // loop_footer
      %s17 = sadd.s32 1, %s13
    $region7: #{conv_transpose_bn_silu.1} parent=1 // loop_footer_branch
      %12 = sbr.rel target = $region3
    $region8: #{conv_transpose_bn_silu.1} parent=1 // loop_exit
      _
    %3556 = vsyncpa [#allocation4], 1
    %s3557 = scalar_lea.sflag [#allocation4], 1
    %3558 = vsyncpa %s3557, 1

</llo_original>
